<compile_context>
chip_gen: v7x
topology: tpu7x:2x2x1
jax: 0.10.0
libtpu: 0.0.40
codegen_flags: <defaults>
</compile_context>

<pallas_src>
import functools
import math

import jax
import jax.numpy as jnp
from jax.experimental import pallas as pl
from jax.experimental.pallas import tpu as pltpu


def _round_up(x, m):
    return ((x + m - 1) // m) * m


# ---------------------------------------------------------------------------
# Pallas kernels
# ---------------------------------------------------------------------------
def _matmul_kernel(x_ref, w_ref, b_ref, o_ref, acc_ref, *, activation):
    """Tiled y = act(x @ w + b); K is the reduction grid axis (axis 2)."""
    k = pl.program_id(2)

    @pl.when(k == 0)
    def _():
        acc_ref[...] = jnp.zeros_like(acc_ref)

    acc_ref[...] += jnp.dot(x_ref[...], w_ref[...],
                            preferred_element_type=jnp.float32)

    @pl.when(k == pl.num_programs(2) - 1)
    def _():
        acc = acc_ref[...] + b_ref[...]
        if activation == "relu":
            acc = jnp.maximum(acc, 0.0)
        elif activation == "sigmoid":
            acc = jax.nn.sigmoid(acc)
        o_ref[...] = acc.astype(o_ref.dtype)


def matmul_bias_act(x, w, b, activation="none", *, tm=256, tn=256, tk=512):
    """y = act(x @ w + b); x:(M,K) w:(K,N) b:(N,) -> (M,N) f32.

    Pads M/N/K to tile multiples (N to >=128 so stores are lane-dense),
    feeds the MXU bf16 with f32 accumulation, and tiles with a real grid so
    Pallas double-buffers / pipelines the DMAs.
    """
    M, K = x.shape
    K2, N = w.shape
    assert K == K2

    tm = min(tm, _round_up(M, 16))
    tn = min(tn, _round_up(N, 128))
    tk = min(tk, _round_up(K, 128))
    Mp, Kp, Np = _round_up(M, tm), _round_up(K, tk), _round_up(N, tn)

    xp = jnp.zeros((Mp, Kp), jnp.bfloat16).at[:M, :K].set(x.astype(jnp.bfloat16))
    wp = jnp.zeros((Kp, Np), jnp.bfloat16).at[:K, :N].set(w.astype(jnp.bfloat16))
    bp = jnp.zeros((1, Np), jnp.float32).at[0, :N].set(b.astype(jnp.float32))

    grid = (Mp // tm, Np // tn, Kp // tk)
    n_exp = Mp * Np if activation == "sigmoid" else 0

    out = pl.pallas_call(
        functools.partial(_matmul_kernel, activation=activation),
        out_shape=jax.ShapeDtypeStruct((Mp, Np), jnp.float32),
        grid_spec=pltpu.PrefetchScalarGridSpec(
            num_scalar_prefetch=0,
            grid=grid,
            in_specs=[
                pl.BlockSpec((tm, tk), lambda i, j, k: (i, k)),
                pl.BlockSpec((tk, tn), lambda i, j, k: (k, j)),
                pl.BlockSpec((1, tn), lambda i, j, k: (0, j)),
            ],
            out_specs=pl.BlockSpec((tm, tn), lambda i, j, k: (i, j)),
            scratch_shapes=[pltpu.VMEM((tm, tn), jnp.float32)],
        ),
        compiler_params=pltpu.CompilerParams(
            dimension_semantics=("parallel", "parallel", "arbitrary"),
            vmem_limit_bytes=32 * 1024 * 1024,
        ),
        cost_estimate=pl.CostEstimate(
            flops=2 * Mp * Np * Kp,
            transcendentals=n_exp,
            bytes_accessed=Mp * Kp * 2 + Kp * Np * 2 + Mp * Np * 4,
        ),
    )(xp, wp, bp)
    return out[:M, :N]


def _enc_head_kernel(x_ref, w_ref, b_ref, eps_ref, mu_ref, ls_ref, z_ref,
                     acc_ref, *, lp):
    """Fused encoder heads: [mu | log_sigma] = x @ W_head + b_head, then
    z = mu + eps * exp(0.5 * log_sigma) in the epilogue."""
    k = pl.program_id(1)

    @pl.when(k == 0)
    def _():
        acc_ref[...] = jnp.zeros_like(acc_ref)

    acc_ref[...] += jnp.dot(x_ref[...], w_ref[...],
                            preferred_element_type=jnp.float32)

    @pl.when(k == pl.num_programs(1) - 1)
    def _():
        acc = acc_ref[...] + b_ref[...]
        mu = acc[:, :lp]
        ls = acc[:, lp:]
        mu_ref[...] = mu
        ls_ref[...] = ls
        z_ref[...] = mu + eps_ref[...] * jnp.exp(0.5 * ls)


def encoder_head_reparam(flat, mean_w, mean_b, sigma_w, sigma_b, eps):
    """Returns (mu, log_sigma, z) from one fused Pallas call."""
    B, K = flat.shape
    L = mean_w.shape[1]
    Lp = _round_up(L, 128)

    tk = min(512, _round_up(K, 128))
    Kp = _round_up(K, tk)
    tm = min(256, _round_up(B, 16))
    Mp = _round_up(B, tm)

    wh = jnp.zeros((Kp, 2 * Lp), jnp.bfloat16)
    wh = wh.at[:K, :L].set(mean_w.astype(jnp.bfloat16))
    wh = wh.at[:K, Lp:Lp + L].set(sigma_w.astype(jnp.bfloat16))
    bh = jnp.zeros((1, 2 * Lp), jnp.float32)
    bh = bh.at[0, :L].set(mean_b.astype(jnp.float32))
    bh = bh.at[0, Lp:Lp + L].set(sigma_b.astype(jnp.float32))
    xp = jnp.zeros((Mp, Kp), jnp.bfloat16).at[:B, :K].set(flat.astype(jnp.bfloat16))
    ep = jnp.zeros((Mp, Lp), jnp.float32).at[:B, :L].set(eps.astype(jnp.float32))

    grid = (Mp // tm, Kp // tk)
    mu, ls, z = pl.pallas_call(
        functools.partial(_enc_head_kernel, lp=Lp),
        out_shape=[jax.ShapeDtypeStruct((Mp, Lp), jnp.float32)] * 3,
        grid_spec=pltpu.PrefetchScalarGridSpec(
            num_scalar_prefetch=0,
            grid=grid,
            in_specs=[
                pl.BlockSpec((tm, tk), lambda i, k: (i, k)),
                pl.BlockSpec((tk, 2 * Lp), lambda i, k: (k, 0)),
                pl.BlockSpec((1, 2 * Lp), lambda i, k: (0, 0)),
                pl.BlockSpec((tm, Lp), lambda i, k: (i, 0)),
            ],
            out_specs=[pl.BlockSpec((tm, Lp), lambda i, k: (i, 0))] * 3,
            scratch_shapes=[pltpu.VMEM((tm, 2 * Lp), jnp.float32)],
        ),
        compiler_params=pltpu.CompilerParams(
            dimension_semantics=("parallel", "arbitrary"),
            vmem_limit_bytes=32 * 1024 * 1024,
        ),
        cost_estimate=pl.CostEstimate(
            flops=2 * Mp * 2 * Lp * Kp,
            transcendentals=Mp * Lp,
            bytes_accessed=Mp * Kp * 2 + Kp * 2 * Lp * 2 + 3 * Mp * Lp * 4,
        ),
    )(xp, wh, bh, ep)
    return mu[:B, :L], ls[:B, :L], z[:B, :L]


# ---------------------------------------------------------------------------
# Conv / ConvTranspose lowered to im2col + Pallas matmul (channels-last)
# ---------------------------------------------------------------------------
def conv_output_size(size, kernel_size, stride=1, dilation=1, padding=0):
    return math.floor(
        (size + 2 * padding - dilation * (kernel_size - 1) - 1) / stride + 1)


def conv2d_cl(x, w, b, stride, activation):
    """PyTorch-semantics Conv2d (valid padding) in channels-last layout.

    x:(B,H,W,Cin), w:(Cout,Cin,k,k), b:(Cout,) -> (B,Ho,Wo,Cout).
    `stride` MUST be a static Python int."""
    Cout, Cin, k, _ = w.shape
    B, H, W, C = x.shape
    assert C == Cin
    Ho = (H - k) // stride + 1
    Wo = (W - k) // stride + 1
    # TODO(synk): move im2col into the kernel with halo BlockSpecs to avoid the
    # k^2 HBM read amplification of the patch matrix.
    cols = []
    for di in range(k):
        for dj in range(k):
            cols.append(x[:, di:di + stride * (Ho - 1) + 1:stride,
                            dj:dj + stride * (Wo - 1) + 1:stride, :])
    patches = jnp.stack(cols, axis=3).reshape(B * Ho * Wo, k * k * Cin)
    wmat = jnp.transpose(w, (2, 3, 1, 0)).reshape(k * k * Cin, Cout)
    out = matmul_bias_act(patches, wmat, b, activation)
    return out.reshape(B, Ho, Wo, Cout)


def conv_transpose2d_cl(x, w, b, stride, activation):
    """PyTorch-semantics ConvTranspose2d, channels-last. w:(Cin,Cout,k,k).
    `stride` MUST be a static Python int."""
    Cin, Cout, k, _ = w.shape
    B, H, W, C = x.shape
    assert C == Cin
    # TODO(synk): replace zero-dilation with a sub-pixel decomposition
    # (stride^2 independent stride-1 convs) to stop multiplying zeros.
    if stride > 1:
        Hd, Wd = (H - 1) * stride + 1, (W - 1) * stride + 1
        xd = jnp.zeros((B, Hd, Wd, C), x.dtype).at[:, ::stride, ::stride, :].set(x)
    else:
        xd = x
    xp = jnp.pad(xd, ((0, 0), (k - 1, k - 1), (k - 1, k - 1), (0, 0)))
    w_conv = jnp.flip(w, axis=(2, 3)).transpose(1, 0, 2, 3)  # (Cout,Cin,k,k)
    return conv2d_cl(xp, w_conv, b, stride=1, activation=activation)


# ---------------------------------------------------------------------------
# VAE parameters (arrays only) + static config + forward
# ---------------------------------------------------------------------------
def init_vae(key, input_shape, latent_size, convs):
    """Deterministic synthetic init matching the module's parameter shapes.

    Returns (params, config):
      params: pytree of arrays only (safe to pass through jax.jit).
      config: static Python data (strides, shapes) bound outside jit.
    """
    params = {"conv_w": [], "conv_b": [], "deconv_w": [], "deconv_b": []}
    conv_strides = []
    deconv_strides = []

    prev_channels = input_shape[0]
    prev_shape = list(input_shape)
    for channels, k, s in convs:
        key, k1, k2 = jax.random.split(key, 3)
        w = 0.1 * jax.random.normal(k1, (channels, prev_channels, k, k), jnp.float32)
        b = 0.01 * jax.random.normal(k2, (channels,), jnp.float32)
        params["conv_w"].append(w)
        params["conv_b"].append(b)
        conv_strides.append(int(s))
        prev_channels = channels
        prev_shape = [channels,
                      conv_output_size(prev_shape[1], k, stride=s),
                      conv_output_size(prev_shape[2], k, stride=s)]
    flat = int(prev_shape[0] * prev_shape[1] * prev_shape[2])
    final_shape = (int(prev_shape[0]), int(prev_shape[1]), int(prev_shape[2]))

    def linear(key, fan_in, fan_out):
        k1, k2 = jax.random.split(key)
        bound = 1.0 / math.sqrt(fan_in)
        w = jax.random.uniform(k1, (fan_in, fan_out), jnp.float32, -bound, bound)
        b = jax.random.uniform(k2, (fan_out,), jnp.float32, -bound, bound)
        return w, b

    key, k1, k2, k3, k4, k5 = jax.random.split(key, 6)
    params["enc_mean_w"], params["enc_mean_b"] = linear(k1, flat, latent_size)
    params["enc_sigma_w"], params["enc_sigma_b"] = linear(k2, flat, latent_size)
    params["dec_widen_w"], params["dec_widen_b"] = linear(k3, latent_size, flat)
    # decoder_reconv: ConvTranspose2d(flat, C_last, (h, w), stride=1)
    C_l, H_l, W_l = final_shape
    params["reconv_w"] = 0.1 * jax.random.normal(k4, (flat, C_l, H_l, W_l), jnp.float32)
    params["reconv_b"] = 0.01 * jax.random.normal(k5, (C_l,), jnp.float32)

    # deconvolutional layers (mirror of convs), final one ends with Sigmoid
    for i, (channels, k, s) in enumerate(convs[:0:-1]):
        next_channels = convs[len(convs) - i - 2][0]
        key, k1, k2 = jax.random.split(key, 3)
        w = 0.1 * jax.random.normal(k1, (channels, next_channels, k, k), jnp.float32)
        b = 0.01 * jax.random.normal(k2, (next_channels,), jnp.float32)
        params["deconv_w"].append(w)
        params["deconv_b"].append(b)
        deconv_strides.append(int(s))
    ch0, k0, s0 = convs[0]
    key, k1, k2 = jax.random.split(key, 3)
    w = 0.1 * jax.random.normal(k1, (ch0, input_shape[0], k0, k0), jnp.float32)
    b = 0.01 * jax.random.normal(k2, (input_shape[0],), jnp.float32)
    params["deconv_w"].append(w)
    params["deconv_b"].append(b)
    deconv_strides.append(int(s0))

    config = {
        "conv_strides": tuple(conv_strides),
        "deconv_strides": tuple(deconv_strides),
        "final_shape": final_shape,
    }
    return params, config


def vae_forward(config, params, x, eps):
    """x: (B, C, H, W) NCHW (PyTorch convention); eps: (B, latent).

    `config` holds all static Python ints (strides, final feature-map shape)
    and is bound via functools.partial BEFORE jit, so it never becomes traced.
    """
    # One layout conversion at entry: NCHW -> channels-last.
    h = jnp.transpose(x, (0, 2, 3, 1))

    # ---- encode (all convs stay channels-last, no per-layer transposes) ----
    for w, b, s in zip(params["conv_w"], params["conv_b"], config["conv_strides"]):
        h = conv2d_cl(h, w, b, s, activation="relu")

    B = h.shape[0]
    C_l, H_l, W_l = config["final_shape"]
    flat = C_l * H_l * W_l
    flat_hwc = h.reshape(B, flat)                       # (h, w, c) flatten order

    # Permute the encoder-head weight rows from PyTorch's (c, h, w) flatten
    # order to the channels-last (h, w, c) order used internally.
    perm = jnp.arange(flat).reshape(C_l, H_l, W_l).transpose(1, 2, 0).reshape(-1)
    mean_w = params["enc_mean_w"][perm]
    sigma_w = params["enc_sigma_w"][perm]

    # ---- fused encoder heads + reparameterize (training mode, given eps) ----
    mu, log_sigma, z = encoder_head_reparam(
        flat_hwc, mean_w, params["enc_mean_b"],
        sigma_w, params["enc_sigma_b"], eps)

    # ---- decode ----
    # Fuse decoder_widen + decoder_reconv (no nonlinearity between them):
    #   ReLU(z @ Wfused + bfused), with output columns laid out (h, w, c).
    Wr = params["reconv_w"]                               # (flat, C, H, W)
    Wr_hwc = jnp.transpose(Wr, (0, 2, 3, 1)).reshape(flat, H_l * W_l * C_l)
    w_fused = jnp.dot(params["dec_widen_w"], Wr_hwc)      # (latent, H*W*C)
    b_fused = jnp.dot(params["dec_widen_b"], Wr_hwc) + jnp.tile(params["reconv_b"],
                                                                H_l * W_l)
    d = matmul_bias_act(z, w_fused, b_fused, activation="relu")
    d = d.reshape(B, H_l, W_l, C_l)

    n = len(params["deconv_w"])
    for idx, (w, b, s) in enumerate(zip(params["deconv_w"], params["deconv_b"],
                                        config["deconv_strides"])):
        act = "sigmoid" if idx == n - 1 else "relu"
        d = conv_transpose2d_cl(d, w, b, s, activation=act)

    # One layout conversion at exit: channels-last -> NCHW.
    rebuild = jnp.transpose(d, (0, 3, 1, 2))
    return mu, log_sigma, z, rebuild


# ---------------------------------------------------------------------------
if __name__ == "__main__":
    # input_shape = (C, H, W); convs = [(channels, kernel, stride), ...]
    input_shape = (4, 16, 16)
    convs = [(8, 4, 2), (16, 3, 1)]   # 16 ->7 ->5 ; decode: 5 ->7 ->16 (round-trip)
    latent_size = 32
    batch = 2

    key = jax.random.PRNGKey(0)
    kp, kx, keps = jax.random.split(key, 3)
    params, config = init_vae(kp, input_shape, latent_size, convs)
    x = jax.random.uniform(kx, (batch,) + input_shape, jnp.float32)
    # Training-mode reparameterize uses eps ~ N(0,1); drawn deterministically
    # here from the same PRNG stream and passed in.
    eps = jax.random.normal(keps, (batch, latent_size), jnp.float32)

    fwd = jax.jit(functools.partial(vae_forward, config))
    mu, log_sigma, z, rebuild = fwd(params, x, eps)
    jax.block_until_ready(rebuild)

    assert x.shape == rebuild.shape, "Image dimension not aligned."
    assert mu.shape == (batch, latent_size)
    assert log_sigma.shape == (batch, latent_size)
    assert z.shape == (batch, latent_size)
    assert bool(jnp.all(jnp.isfinite(rebuild)))
    assert bool(jnp.all((rebuild >= 0.0) & (rebuild <= 1.0)))  # final Sigmoid
    print("KERNEL_OK")
</pallas_src>

<mosaic_0001>
module attributes {stable_mosaic.version = 11 : i64} {
  func.func @_matmul_kernel(%arg0: i32, %arg1: i32, %arg2: i32, %arg3: memref<112x128xbf16, #tpu.memory_space<vmem>>, %arg4: memref<128x128xbf16, #tpu.memory_space<vmem>>, %arg5: memref<1x128xf32, #tpu.memory_space<vmem>>, %arg6: memref<112x128xf32, #tpu.memory_space<vmem>>, %arg7: memref<112x128xf32, #tpu.memory_space<vmem>>) attributes {dimension_semantics = [#tpu.dimension_semantics<parallel>, #tpu.dimension_semantics<parallel>, #tpu.dimension_semantics<arbitrary>], iteration_bounds = array<i64: 1, 1, 1>, scalar_prefetch = 0 : i64, scratch_operands = 1 : i64, tpu.core_type = #tpu.core_type<tc>, window_params = [{transform_indices = @transform_0, window_bounds = array<i64: 112, 128>}, {transform_indices = @transform_1, window_bounds = array<i64: 128, 128>}, {transform_indices = @transform_2, window_bounds = array<i64: 1, 128>}, {transform_indices = @transform_3, window_bounds = array<i64: 112, 128>}]} {
    %c0_i32 = arith.constant 0 : i32
    %0 = arith.cmpi eq, %arg2, %c0_i32 : i32
    %1 = arith.extui %0 : i1 to i32
    %c0_i32_0 = arith.constant 0 : i32
    %2 = arith.cmpi ne, %1, %c0_i32_0 : i32
    scf.if %2 {
      %cst_10 = arith.constant 0.000000e+00 : f32
      %12 = vector.broadcast %cst_10 : f32 to vector<112x128xf32>
      %c0_11 = arith.constant 0 : index
      %c0_12 = arith.constant 0 : index
      %13 = vector.load %arg7[%c0_11, %c0_12] : memref<112x128xf32, #tpu.memory_space<vmem>>, vector<112x128xf32>
      tpu.vector_store %arg7[%c0_11, %c0_12], %12 {strides = array<i32>} : memref<112x128xf32, #tpu.memory_space<vmem>>, vector<112x128xf32>,
    } else {
    }
    %c0 = arith.constant 0 : index
    %c0_1 = arith.constant 0 : index
    %3 = vector.load %arg7[%c0, %c0_1] : memref<112x128xf32, #tpu.memory_space<vmem>>, vector<112x128xf32>
    %c0_2 = arith.constant 0 : index
    %c0_3 = arith.constant 0 : index
    %4 = vector.load %arg3[%c0_2, %c0_3] : memref<112x128xbf16, #tpu.memory_space<vmem>>, vector<112x128xbf16>
    %c0_4 = arith.constant 0 : index
    %c0_5 = arith.constant 0 : index
    %5 = vector.load %arg4[%c0_4, %c0_5] : memref<128x128xbf16, #tpu.memory_space<vmem>>, vector<128x128xbf16>
    %cst = arith.constant dense<0.000000e+00> : vector<112x128xf32>
    %6 = tpu.matmul %4, %5, %cst {dimension_numbers = #tpu.dot_dimension_numbers<[1], [0], [0], [1], [0, 0, 1, 1], [], []>} : vector<112x128xbf16>, vector<128x128xbf16>, vector<112x128xf32> -> vector<112x128xf32>
    %7 = arith.addf %3, %6 : vector<112x128xf32>
    %c0_6 = arith.constant 0 : index
    %c0_7 = arith.constant 0 : index
    %8 = vector.load %arg7[%c0_6, %c0_7] : memref<112x128xf32, #tpu.memory_space<vmem>>, vector<112x128xf32>
    tpu.vector_store %arg7[%c0_6, %c0_7], %7 {strides = array<i32>} : memref<112x128xf32, #tpu.memory_space<vmem>>, vector<112x128xf32>,
    %c0_i32_8 = arith.constant 0 : i32
    %9 = arith.cmpi eq, %arg2, %c0_i32_8 : i32
    %10 = arith.extui %9 : i1 to i32
    %c0_i32_9 = arith.constant 0 : i32
    %11 = arith.cmpi ne, %10, %c0_i32_9 : i32
    scf.if %11 {
      %c0_10 = arith.constant 0 : index
      %c0_11 = arith.constant 0 : index
      %12 = vector.load %arg7[%c0_10, %c0_11] : memref<112x128xf32, #tpu.memory_space<vmem>>, vector<112x128xf32>
      %c0_12 = arith.constant 0 : index
      %c0_13 = arith.constant 0 : index
      %13 = vector.load %arg5[%c0_12, %c0_13] : memref<1x128xf32, #tpu.memory_space<vmem>>, vector<1x128xf32>
      %14 = vector.broadcast %13 : vector<1x128xf32> to vector<112x128xf32>
      %15 = arith.addf %12, %14 : vector<112x128xf32>
      %cst_14 = arith.constant 0.000000e+00 : f32
      %16 = vector.broadcast %cst_14 : f32 to vector<112x128xf32>
      %17 = arith.maximumf %15, %16 : vector<112x128xf32>
      %c0_15 = arith.constant 0 : index
      %c0_16 = arith.constant 0 : index
      %18 = vector.load %arg6[%c0_15, %c0_16] : memref<112x128xf32, #tpu.memory_space<vmem>>, vector<112x128xf32>
      tpu.vector_store %arg6[%c0_15, %c0_16], %17 {strides = array<i32>} : memref<112x128xf32, #tpu.memory_space<vmem>>, vector<112x128xf32>,
    } else {
    }
    return
  }
  func.func @transform_0(%arg0: i32, %arg1: i32, %arg2: i32) -> (i32, i32) {
    %c0_i32 = arith.constant 0 : i32
    return %arg0, %arg2 : i32, i32
  }
  func.func @transform_1(%arg0: i32, %arg1: i32, %arg2: i32) -> (i32, i32) {
    %c0_i32 = arith.constant 0 : i32
    return %arg2, %arg1 : i32, i32
  }
  func.func @transform_2(%arg0: i32, %arg1: i32, %arg2: i32) -> (i32, i32) {
    %c0_i32 = arith.constant 0 : i32
    %c0_i32_0 = arith.constant 0 : i32
    return %c0_i32, %arg1 : i32, i32
  }
  func.func @transform_3(%arg0: i32, %arg1: i32, %arg2: i32) -> (i32, i32) {
    %c0_i32 = arith.constant 0 : i32
    return %arg0, %arg1 : i32, i32
  }
}

module attributes {stable_mosaic.version = 11 : i64} {
  func.func @_matmul_kernel(%arg0: i32, %arg1: i32, %arg2: i32, %arg3: memref<64x128xbf16, #tpu.memory_space<vmem>>, %arg4: memref<128x128xbf16, #tpu.memory_space<vmem>>, %arg5: memref<1x128xf32, #tpu.memory_space<vmem>>, %arg6: memref<64x128xf32, #tpu.memory_space<vmem>>, %arg7: memref<64x128xf32, #tpu.memory_space<vmem>>) attributes {dimension_semantics = [#tpu.dimension_semantics<parallel>, #tpu.dimension_semantics<parallel>, #tpu.dimension_semantics<arbitrary>], iteration_bounds = array<i64: 1, 1, 1>, scalar_prefetch = 0 : i64, scratch_operands = 1 : i64, tpu.core_type = #tpu.core_type<tc>, window_params = [{transform_indices = @transform_0, window_bounds = array<i64: 64, 128>}, {transform_indices = @transform_1, window_bounds = array<i64: 128, 128>}, {transform_indices = @transform_2, window_bounds = array<i64: 1, 128>}, {transform_indices = @transform_3, window_bounds = array<i64: 64, 128>}]} {
    %c0_i32 = arith.constant 0 : i32
    %0 = arith.cmpi eq, %arg2, %c0_i32 : i32
    %1 = arith.extui %0 : i1 to i32
    %c0_i32_0 = arith.constant 0 : i32
    %2 = arith.cmpi ne, %1, %c0_i32_0 : i32
    scf.if %2 {
      %cst_10 = arith.constant 0.000000e+00 : f32
      %12 = vector.broadcast %cst_10 : f32 to vector<64x128xf32>
      %c0_11 = arith.constant 0 : index
      %c0_12 = arith.constant 0 : index
      %13 = vector.load %arg7[%c0_11, %c0_12] : memref<64x128xf32, #tpu.memory_space<vmem>>, vector<64x128xf32>
      tpu.vector_store %arg7[%c0_11, %c0_12], %12 {strides = array<i32>} : memref<64x128xf32, #tpu.memory_space<vmem>>, vector<64x128xf32>,
    } else {
    }
    %c0 = arith.constant 0 : index
    %c0_1 = arith.constant 0 : index
    %3 = vector.load %arg7[%c0, %c0_1] : memref<64x128xf32, #tpu.memory_space<vmem>>, vector<64x128xf32>
    %c0_2 = arith.constant 0 : index
    %c0_3 = arith.constant 0 : index
    %4 = vector.load %arg3[%c0_2, %c0_3] : memref<64x128xbf16, #tpu.memory_space<vmem>>, vector<64x128xbf16>
    %c0_4 = arith.constant 0 : index
    %c0_5 = arith.constant 0 : index
    %5 = vector.load %arg4[%c0_4, %c0_5] : memref<128x128xbf16, #tpu.memory_space<vmem>>, vector<128x128xbf16>
    %cst = arith.constant dense<0.000000e+00> : vector<64x128xf32>
    %6 = tpu.matmul %4, %5, %cst {dimension_numbers = #tpu.dot_dimension_numbers<[1], [0], [0], [1], [0, 0, 1, 1], [], []>} : vector<64x128xbf16>, vector<128x128xbf16>, vector<64x128xf32> -> vector<64x128xf32>
    %7 = arith.addf %3, %6 : vector<64x128xf32>
    %c0_6 = arith.constant 0 : index
    %c0_7 = arith.constant 0 : index
    %8 = vector.load %arg7[%c0_6, %c0_7] : memref<64x128xf32, #tpu.memory_space<vmem>>, vector<64x128xf32>
    tpu.vector_store %arg7[%c0_6, %c0_7], %7 {strides = array<i32>} : memref<64x128xf32, #tpu.memory_space<vmem>>, vector<64x128xf32>,
    %c0_i32_8 = arith.constant 0 : i32
    %9 = arith.cmpi eq, %arg2, %c0_i32_8 : i32
    %10 = arith.extui %9 : i1 to i32
    %c0_i32_9 = arith.constant 0 : i32
    %11 = arith.cmpi ne, %10, %c0_i32_9 : i32
    scf.if %11 {
      %c0_10 = arith.constant 0 : index
      %c0_11 = arith.constant 0 : index
      %12 = vector.load %arg7[%c0_10, %c0_11] : memref<64x128xf32, #tpu.memory_space<vmem>>, vector<64x128xf32>
      %c0_12 = arith.constant 0 : index
      %c0_13 = arith.constant 0 : index
      %13 = vector.load %arg5[%c0_12, %c0_13] : memref<1x128xf32, #tpu.memory_space<vmem>>, vector<1x128xf32>
      %14 = vector.broadcast %13 : vector<1x128xf32> to vector<64x128xf32>
      %15 = arith.addf %12, %14 : vector<64x128xf32>
      %cst_14 = arith.constant 0.000000e+00 : f32
      %16 = vector.broadcast %cst_14 : f32 to vector<64x128xf32>
      %17 = arith.maximumf %15, %16 : vector<64x128xf32>
      %c0_15 = arith.constant 0 : index
      %c0_16 = arith.constant 0 : index
      %18 = vector.load %arg6[%c0_15, %c0_16] : memref<64x128xf32, #tpu.memory_space<vmem>>, vector<64x128xf32>
      tpu.vector_store %arg6[%c0_15, %c0_16], %17 {strides = array<i32>} : memref<64x128xf32, #tpu.memory_space<vmem>>, vector<64x128xf32>,
    } else {
    }
    return
  }
  func.func @transform_0(%arg0: i32, %arg1: i32, %arg2: i32) -> (i32, i32) {
    %c0_i32 = arith.constant 0 : i32
    return %arg0, %arg2 : i32, i32
  }
  func.func @transform_1(%arg0: i32, %arg1: i32, %arg2: i32) -> (i32, i32) {
    %c0_i32 = arith.constant 0 : i32
    return %arg2, %arg1 : i32, i32
  }
  func.func @transform_2(%arg0: i32, %arg1: i32, %arg2: i32) -> (i32, i32) {
    %c0_i32 = arith.constant 0 : i32
    %c0_i32_0 = arith.constant 0 : i32
    return %c0_i32, %arg1 : i32, i32
  }
  func.func @transform_3(%arg0: i32, %arg1: i32, %arg2: i32) -> (i32, i32) {
    %c0_i32 = arith.constant 0 : i32
    return %arg0, %arg1 : i32, i32
  }
}

module attributes {stable_mosaic.version = 11 : i64} {
  func.func @_enc_head_kernel(%arg0: i32, %arg1: i32, %arg2: memref<16x512xbf16, #tpu.memory_space<vmem>>, %arg3: memref<512x256xbf16, #tpu.memory_space<vmem>>, %arg4: memref<1x256xf32, #tpu.memory_space<vmem>>, %arg5: memref<16x128xf32, #tpu.memory_space<vmem>>, %arg6: memref<16x128xf32, #tpu.memory_space<vmem>>, %arg7: memref<16x128xf32, #tpu.memory_space<vmem>>, %arg8: memref<16x128xf32, #tpu.memory_space<vmem>>, %arg9: memref<16x256xf32, #tpu.memory_space<vmem>>) attributes {dimension_semantics = [#tpu.dimension_semantics<parallel>, #tpu.dimension_semantics<arbitrary>], iteration_bounds = array<i64: 1, 1>, scalar_prefetch = 0 : i64, scratch_operands = 1 : i64, tpu.core_type = #tpu.core_type<tc>, window_params = [{transform_indices = @transform_0, window_bounds = array<i64: 16, 512>}, {transform_indices = @transform_1, window_bounds = array<i64: 512, 256>}, {pipeline_mode = #tpu.pipeline_mode<synchronous>, transform_indices = @transform_2, window_bounds = array<i64: 1, 256>}, {transform_indices = @transform_3, window_bounds = array<i64: 16, 128>}, {transform_indices = @transform_4, window_bounds = array<i64: 16, 128>}, {transform_indices = @transform_5, window_bounds = array<i64: 16, 128>}, {transform_indices = @transform_6, window_bounds = array<i64: 16, 128>}]} {
    %c0_i32 = arith.constant 0 : i32
    %0 = arith.cmpi eq, %arg1, %c0_i32 : i32
    %1 = arith.extui %0 : i1 to i32
    %c0_i32_0 = arith.constant 0 : i32
    %2 = arith.cmpi ne, %1, %c0_i32_0 : i32
    scf.if %2 {
      %cst_10 = arith.constant 0.000000e+00 : f32
      %12 = vector.broadcast %cst_10 : f32 to vector<16x256xf32>
      %c0_11 = arith.constant 0 : index
      %c0_12 = arith.constant 0 : index
      %13 = vector.load %arg9[%c0_11, %c0_12] : memref<16x256xf32, #tpu.memory_space<vmem>>, vector<16x256xf32>
      tpu.vector_store %arg9[%c0_11, %c0_12], %12 {strides = array<i32>} : memref<16x256xf32, #tpu.memory_space<vmem>>, vector<16x256xf32>,
    } else {
    }
    %c0 = arith.constant 0 : index
    %c0_1 = arith.constant 0 : index
    %3 = vector.load %arg9[%c0, %c0_1] : memref<16x256xf32, #tpu.memory_space<vmem>>, vector<16x256xf32>
    %c0_2 = arith.constant 0 : index
    %c0_3 = arith.constant 0 : index
    %4 = vector.load %arg2[%c0_2, %c0_3] : memref<16x512xbf16, #tpu.memory_space<vmem>>, vector<16x512xbf16>
    %c0_4 = arith.constant 0 : index
    %c0_5 = arith.constant 0 : index
    %5 = vector.load %arg3[%c0_4, %c0_5] : memref<512x256xbf16, #tpu.memory_space<vmem>>, vector<512x256xbf16>
    %cst = arith.constant dense<0.000000e+00> : vector<16x256xf32>
    %6 = tpu.matmul %4, %5, %cst {dimension_numbers = #tpu.dot_dimension_numbers<[1], [0], [0], [1], [0, 0, 1, 1], [], []>} : vector<16x512xbf16>, vector<512x256xbf16>, vector<16x256xf32> -> vector<16x256xf32>
    %7 = arith.addf %3, %6 : vector<16x256xf32>
    %c0_6 = arith.constant 0 : index
    %c0_7 = arith.constant 0 : index
    %8 = vector.load %arg9[%c0_6, %c0_7] : memref<16x256xf32, #tpu.memory_space<vmem>>, vector<16x256xf32>
    tpu.vector_store %arg9[%c0_6, %c0_7], %7 {strides = array<i32>} : memref<16x256xf32, #tpu.memory_space<vmem>>, vector<16x256xf32>,
    %c0_i32_8 = arith.constant 0 : i32
    %9 = arith.cmpi eq, %arg1, %c0_i32_8 : i32
    %10 = arith.extui %9 : i1 to i32
    %c0_i32_9 = arith.constant 0 : i32
    %11 = arith.cmpi ne, %10, %c0_i32_9 : i32
    scf.if %11 {
      %c0_10 = arith.constant 0 : index
      %c0_11 = arith.constant 0 : index
      %12 = vector.load %arg9[%c0_10, %c0_11] : memref<16x256xf32, #tpu.memory_space<vmem>>, vector<16x256xf32>
      %c0_12 = arith.constant 0 : index
      %c0_13 = arith.constant 0 : index
      %13 = vector.load %arg4[%c0_12, %c0_13] : memref<1x256xf32, #tpu.memory_space<vmem>>, vector<1x256xf32>
      %14 = vector.broadcast %13 : vector<1x256xf32> to vector<16x256xf32>
      %15 = arith.addf %12, %14 : vector<16x256xf32>
      %16 = vector.extract_strided_slice %15 {offsets = [0, 0], sizes = [16, 128], strides = [1, 1]} : vector<16x256xf32> to vector<16x128xf32>
      %17 = vector.extract_strided_slice %15 {offsets = [0, 128], sizes = [16, 128], strides = [1, 1]} : vector<16x256xf32> to vector<16x128xf32>
      %c0_14 = arith.constant 0 : index
      %c0_15 = arith.constant 0 : index
      %18 = vector.load %arg6[%c0_14, %c0_15] : memref<16x128xf32, #tpu.memory_space<vmem>>, vector<16x128xf32>
      tpu.vector_store %arg6[%c0_14, %c0_15], %16 {strides = array<i32>} : memref<16x128xf32, #tpu.memory_space<vmem>>, vector<16x128xf32>,
      %c0_16 = arith.constant 0 : index
      %c0_17 = arith.constant 0 : index
      %19 = vector.load %arg7[%c0_16, %c0_17] : memref<16x128xf32, #tpu.memory_space<vmem>>, vector<16x128xf32>
      tpu.vector_store %arg7[%c0_16, %c0_17], %17 {strides = array<i32>} : memref<16x128xf32, #tpu.memory_space<vmem>>, vector<16x128xf32>,
      %c0_18 = arith.constant 0 : index
      %c0_19 = arith.constant 0 : index
      %20 = vector.load %arg5[%c0_18, %c0_19] : memref<16x128xf32, #tpu.memory_space<vmem>>, vector<16x128xf32>
      %cst_20 = arith.constant 5.000000e-01 : f32
      %21 = vector.broadcast %cst_20 : f32 to vector<16x128xf32>
      %22 = arith.mulf %21, %17 : vector<16x128xf32>
      %23 = math.exp %22 : vector<16x128xf32>
      %24 = arith.mulf %20, %23 : vector<16x128xf32>
      %25 = arith.addf %16, %24 : vector<16x128xf32>
      %c0_21 = arith.constant 0 : index
      %c0_22 = arith.constant 0 : index
      %26 = vector.load %arg8[%c0_21, %c0_22] : memref<16x128xf32, #tpu.memory_space<vmem>>, vector<16x128xf32>
      tpu.vector_store %arg8[%c0_21, %c0_22], %25 {strides = array<i32>} : memref<16x128xf32, #tpu.memory_space<vmem>>, vector<16x128xf32>,
    } else {
    }
    return
  }
  func.func @transform_0(%arg0: i32, %arg1: i32) -> (i32, i32) {
    %c0_i32 = arith.constant 0 : i32
    return %arg0, %arg1 : i32, i32
  }
  func.func @transform_1(%arg0: i32, %arg1: i32) -> (i32, i32) {
    %c0_i32 = arith.constant 0 : i32
    %c0_i32_0 = arith.constant 0 : i32
    return %arg1, %c0_i32 : i32, i32
  }
  func.func @transform_2(%arg0: i32, %arg1: i32) -> (i32, i32) {
    %c0_i32 = arith.constant 0 : i32
    %c0_i32_0 = arith.constant 0 : i32
    %c0_i32_1 = arith.constant 0 : i32
    return %c0_i32, %c0_i32_0 : i32, i32
  }
  func.func @transform_3(%arg0: i32, %arg1: i32) -> (i32, i32) {
    %c0_i32 = arith.constant 0 : i32
    %c0_i32_0 = arith.constant 0 : i32
    return %arg0, %c0_i32 : i32, i32
  }
  func.func @transform_4(%arg0: i32, %arg1: i32) -> (i32, i32) {
    %c0_i32 = arith.constant 0 : i32
    %c0_i32_0 = arith.constant 0 : i32
    return %arg0, %c0_i32 : i32, i32
  }
  func.func @transform_5(%arg0: i32, %arg1: i32) -> (i32, i32) {
    %c0_i32 = arith.constant 0 : i32
    %c0_i32_0 = arith.constant 0 : i32
    return %arg0, %c0_i32 : i32, i32
  }
  func.func @transform_6(%arg0: i32, %arg1: i32) -> (i32, i32) {
    %c0_i32 = arith.constant 0 : i32
    %c0_i32_0 = arith.constant 0 : i32
    return %arg0, %c0_i32 : i32, i32
  }
}

module attributes {stable_mosaic.version = 11 : i64} {
  func.func @_matmul_kernel(%arg0: i32, %arg1: i32, %arg2: i32, %arg3: memref<16x128xbf16, #tpu.memory_space<vmem>>, %arg4: memref<128x256xbf16, #tpu.memory_space<vmem>>, %arg5: memref<1x256xf32, #tpu.memory_space<vmem>>, %arg6: memref<16x256xf32, #tpu.memory_space<vmem>>, %arg7: memref<16x256xf32, #tpu.memory_space<vmem>>) attributes {dimension_semantics = [#tpu.dimension_semantics<parallel>, #tpu.dimension_semantics<parallel>, #tpu.dimension_semantics<arbitrary>], iteration_bounds = array<i64: 1, 2, 1>, scalar_prefetch = 0 : i64, scratch_operands = 1 : i64, tpu.core_type = #tpu.core_type<tc>, window_params = [{transform_indices = @transform_0, window_bounds = array<i64: 16, 128>}, {transform_indices = @transform_1, window_bounds = array<i64: 128, 256>}, {transform_indices = @transform_2, window_bounds = array<i64: 1, 256>}, {transform_indices = @transform_3, window_bounds = array<i64: 16, 256>}]} {
    %c0_i32 = arith.constant 0 : i32
    %0 = arith.cmpi eq, %arg2, %c0_i32 : i32
    %1 = arith.extui %0 : i1 to i32
    %c0_i32_0 = arith.constant 0 : i32
    %2 = arith.cmpi ne, %1, %c0_i32_0 : i32
    scf.if %2 {
      %cst_10 = arith.constant 0.000000e+00 : f32
      %12 = vector.broadcast %cst_10 : f32 to vector<16x256xf32>
      %c0_11 = arith.constant 0 : index
      %c0_12 = arith.constant 0 : index
      %13 = vector.load %arg7[%c0_11, %c0_12] : memref<16x256xf32, #tpu.memory_space<vmem>>, vector<16x256xf32>
      tpu.vector_store %arg7[%c0_11, %c0_12], %12 {strides = array<i32>} : memref<16x256xf32, #tpu.memory_space<vmem>>, vector<16x256xf32>,
    } else {
    }
    %c0 = arith.constant 0 : index
    %c0_1 = arith.constant 0 : index
    %3 = vector.load %arg7[%c0, %c0_1] : memref<16x256xf32, #tpu.memory_space<vmem>>, vector<16x256xf32>
    %c0_2 = arith.constant 0 : index
    %c0_3 = arith.constant 0 : index
    %4 = vector.load %arg3[%c0_2, %c0_3] : memref<16x128xbf16, #tpu.memory_space<vmem>>, vector<16x128xbf16>
    %c0_4 = arith.constant 0 : index
    %c0_5 = arith.constant 0 : index
    %5 = vector.load %arg4[%c0_4, %c0_5] : memref<128x256xbf16, #tpu.memory_space<vmem>>, vector<128x256xbf16>
    %cst = arith.constant dense<0.000000e+00> : vector<16x256xf32>
    %6 = tpu.matmul %4, %5, %cst {dimension_numbers = #tpu.dot_dimension_numbers<[1], [0], [0], [1], [0, 0, 1, 1], [], []>} : vector<16x128xbf16>, vector<128x256xbf16>, vector<16x256xf32> -> vector<16x256xf32>
    %7 = arith.addf %3, %6 : vector<16x256xf32>
    %c0_6 = arith.constant 0 : index
    %c0_7 = arith.constant 0 : index
    %8 = vector.load %arg7[%c0_6, %c0_7] : memref<16x256xf32, #tpu.memory_space<vmem>>, vector<16x256xf32>
    tpu.vector_store %arg7[%c0_6, %c0_7], %7 {strides = array<i32>} : memref<16x256xf32, #tpu.memory_space<vmem>>, vector<16x256xf32>,
    %c0_i32_8 = arith.constant 0 : i32
    %9 = arith.cmpi eq, %arg2, %c0_i32_8 : i32
    %10 = arith.extui %9 : i1 to i32
    %c0_i32_9 = arith.constant 0 : i32
    %11 = arith.cmpi ne, %10, %c0_i32_9 : i32
    scf.if %11 {
      %c0_10 = arith.constant 0 : index
      %c0_11 = arith.constant 0 : index
      %12 = vector.load %arg7[%c0_10, %c0_11] : memref<16x256xf32, #tpu.memory_space<vmem>>, vector<16x256xf32>
      %c0_12 = arith.constant 0 : index
      %c0_13 = arith.constant 0 : index
      %13 = vector.load %arg5[%c0_12, %c0_13] : memref<1x256xf32, #tpu.memory_space<vmem>>, vector<1x256xf32>
      %14 = vector.broadcast %13 : vector<1x256xf32> to vector<16x256xf32>
      %15 = arith.addf %12, %14 : vector<16x256xf32>
      %cst_14 = arith.constant 0.000000e+00 : f32
      %16 = vector.broadcast %cst_14 : f32 to vector<16x256xf32>
      %17 = arith.maximumf %15, %16 : vector<16x256xf32>
      %c0_15 = arith.constant 0 : index
      %c0_16 = arith.constant 0 : index
      %18 = vector.load %arg6[%c0_15, %c0_16] : memref<16x256xf32, #tpu.memory_space<vmem>>, vector<16x256xf32>
      tpu.vector_store %arg6[%c0_15, %c0_16], %17 {strides = array<i32>} : memref<16x256xf32, #tpu.memory_space<vmem>>, vector<16x256xf32>,
    } else {
    }
    return
  }
  func.func @transform_0(%arg0: i32, %arg1: i32, %arg2: i32) -> (i32, i32) {
    %c0_i32 = arith.constant 0 : i32
    return %arg0, %arg2 : i32, i32
  }
  func.func @transform_1(%arg0: i32, %arg1: i32, %arg2: i32) -> (i32, i32) {
    %c0_i32 = arith.constant 0 : i32
    return %arg2, %arg1 : i32, i32
  }
  func.func @transform_2(%arg0: i32, %arg1: i32, %arg2: i32) -> (i32, i32) {
    %c0_i32 = arith.constant 0 : i32
    %c0_i32_0 = arith.constant 0 : i32
    return %c0_i32, %arg1 : i32, i32
  }
  func.func @transform_3(%arg0: i32, %arg1: i32, %arg2: i32) -> (i32, i32) {
    %c0_i32 = arith.constant 0 : i32
    return %arg0, %arg1 : i32, i32
  }
}

module attributes {stable_mosaic.version = 11 : i64} {
  func.func @_matmul_kernel(%arg0: i32, %arg1: i32, %arg2: i32, %arg3: memref<112x256xbf16, #tpu.memory_space<vmem>>, %arg4: memref<256x128xbf16, #tpu.memory_space<vmem>>, %arg5: memref<1x128xf32, #tpu.memory_space<vmem>>, %arg6: memref<112x128xf32, #tpu.memory_space<vmem>>, %arg7: memref<112x128xf32, #tpu.memory_space<vmem>>) attributes {dimension_semantics = [#tpu.dimension_semantics<parallel>, #tpu.dimension_semantics<parallel>, #tpu.dimension_semantics<arbitrary>], iteration_bounds = array<i64: 1, 1, 1>, scalar_prefetch = 0 : i64, scratch_operands = 1 : i64, tpu.core_type = #tpu.core_type<tc>, window_params = [{transform_indices = @transform_0, window_bounds = array<i64: 112, 256>}, {transform_indices = @transform_1, window_bounds = array<i64: 256, 128>}, {transform_indices = @transform_2, window_bounds = array<i64: 1, 128>}, {transform_indices = @transform_3, window_bounds = array<i64: 112, 128>}]} {
    %c0_i32 = arith.constant 0 : i32
    %0 = arith.cmpi eq, %arg2, %c0_i32 : i32
    %1 = arith.extui %0 : i1 to i32
    %c0_i32_0 = arith.constant 0 : i32
    %2 = arith.cmpi ne, %1, %c0_i32_0 : i32
    scf.if %2 {
      %cst_10 = arith.constant 0.000000e+00 : f32
      %12 = vector.broadcast %cst_10 : f32 to vector<112x128xf32>
      %c0_11 = arith.constant 0 : index
      %c0_12 = arith.constant 0 : index
      %13 = vector.load %arg7[%c0_11, %c0_12] : memref<112x128xf32, #tpu.memory_space<vmem>>, vector<112x128xf32>
      tpu.vector_store %arg7[%c0_11, %c0_12], %12 {strides = array<i32>} : memref<112x128xf32, #tpu.memory_space<vmem>>, vector<112x128xf32>,
    } else {
    }
    %c0 = arith.constant 0 : index
    %c0_1 = arith.constant 0 : index
    %3 = vector.load %arg7[%c0, %c0_1] : memref<112x128xf32, #tpu.memory_space<vmem>>, vector<112x128xf32>
    %c0_2 = arith.constant 0 : index
    %c0_3 = arith.constant 0 : index
    %4 = vector.load %arg3[%c0_2, %c0_3] : memref<112x256xbf16, #tpu.memory_space<vmem>>, vector<112x256xbf16>
    %c0_4 = arith.constant 0 : index
    %c0_5 = arith.constant 0 : index
    %5 = vector.load %arg4[%c0_4, %c0_5] : memref<256x128xbf16, #tpu.memory_space<vmem>>, vector<256x128xbf16>
    %cst = arith.constant dense<0.000000e+00> : vector<112x128xf32>
    %6 = tpu.matmul %4, %5, %cst {dimension_numbers = #tpu.dot_dimension_numbers<[1], [0], [0], [1], [0, 0, 1, 1], [], []>} : vector<112x256xbf16>, vector<256x128xbf16>, vector<112x128xf32> -> vector<112x128xf32>
    %7 = arith.addf %3, %6 : vector<112x128xf32>
    %c0_6 = arith.constant 0 : index
    %c0_7 = arith.constant 0 : index
    %8 = vector.load %arg7[%c0_6, %c0_7] : memref<112x128xf32, #tpu.memory_space<vmem>>, vector<112x128xf32>
    tpu.vector_store %arg7[%c0_6, %c0_7], %7 {strides = array<i32>} : memref<112x128xf32, #tpu.memory_space<vmem>>, vector<112x128xf32>,
    %c0_i32_8 = arith.constant 0 : i32
    %9 = arith.cmpi eq, %arg2, %c0_i32_8 : i32
    %10 = arith.extui %9 : i1 to i32
    %c0_i32_9 = arith.constant 0 : i32
    %11 = arith.cmpi ne, %10, %c0_i32_9 : i32
    scf.if %11 {
      %c0_10 = arith.constant 0 : index
      %c0_11 = arith.constant 0 : index
      %12 = vector.load %arg7[%c0_10, %c0_11] : memref<112x128xf32, #tpu.memory_space<vmem>>, vector<112x128xf32>
      %c0_12 = arith.constant 0 : index
      %c0_13 = arith.constant 0 : index
      %13 = vector.load %arg5[%c0_12, %c0_13] : memref<1x128xf32, #tpu.memory_space<vmem>>, vector<1x128xf32>
      %14 = vector.broadcast %13 : vector<1x128xf32> to vector<112x128xf32>
      %15 = arith.addf %12, %14 : vector<112x128xf32>
      %cst_14 = arith.constant 0.000000e+00 : f32
      %16 = vector.broadcast %cst_14 : f32 to vector<112x128xf32>
      %17 = arith.maximumf %15, %16 : vector<112x128xf32>
      %c0_15 = arith.constant 0 : index
      %c0_16 = arith.constant 0 : index
      %18 = vector.load %arg6[%c0_15, %c0_16] : memref<112x128xf32, #tpu.memory_space<vmem>>, vector<112x128xf32>
      tpu.vector_store %arg6[%c0_15, %c0_16], %17 {strides = array<i32>} : memref<112x128xf32, #tpu.memory_space<vmem>>, vector<112x128xf32>,
    } else {
    }
    return
  }
  func.func @transform_0(%arg0: i32, %arg1: i32, %arg2: i32) -> (i32, i32) {
    %c0_i32 = arith.constant 0 : i32
    return %arg0, %arg2 : i32, i32
  }
  func.func @transform_1(%arg0: i32, %arg1: i32, %arg2: i32) -> (i32, i32) {
    %c0_i32 = arith.constant 0 : i32
    return %arg2, %arg1 : i32, i32
  }
  func.func @transform_2(%arg0: i32, %arg1: i32, %arg2: i32) -> (i32, i32) {
    %c0_i32 = arith.constant 0 : i32
    %c0_i32_0 = arith.constant 0 : i32
    return %c0_i32, %arg1 : i32, i32
  }
  func.func @transform_3(%arg0: i32, %arg1: i32, %arg2: i32) -> (i32, i32) {
    %c0_i32 = arith.constant 0 : i32
    return %arg0, %arg1 : i32, i32
  }
}

module attributes {stable_mosaic.version = 11 : i64} {
  func.func @_matmul_kernel(%arg0: i32, %arg1: i32, %arg2: i32, %arg3: memref<256x128xbf16, #tpu.memory_space<vmem>>, %arg4: memref<128x128xbf16, #tpu.memory_space<vmem>>, %arg5: memref<1x128xf32, #tpu.memory_space<vmem>>, %arg6: memref<256x128xf32, #tpu.memory_space<vmem>>, %arg7: memref<256x128xf32, #tpu.memory_space<vmem>>) attributes {dimension_semantics = [#tpu.dimension_semantics<parallel>, #tpu.dimension_semantics<parallel>, #tpu.dimension_semantics<arbitrary>], iteration_bounds = array<i64: 2, 1, 1>, scalar_prefetch = 0 : i64, scratch_operands = 1 : i64, tpu.core_type = #tpu.core_type<tc>, window_params = [{transform_indices = @transform_0, window_bounds = array<i64: 256, 128>}, {transform_indices = @transform_1, window_bounds = array<i64: 128, 128>}, {transform_indices = @transform_2, window_bounds = array<i64: 1, 128>}, {transform_indices = @transform_3, window_bounds = array<i64: 256, 128>}]} {
    %c0_i32 = arith.constant 0 : i32
    %0 = arith.cmpi eq, %arg2, %c0_i32 : i32
    %1 = arith.extui %0 : i1 to i32
    %c0_i32_0 = arith.constant 0 : i32
    %2 = arith.cmpi ne, %1, %c0_i32_0 : i32
    scf.if %2 {
      %cst_10 = arith.constant 0.000000e+00 : f32
      %12 = vector.broadcast %cst_10 : f32 to vector<256x128xf32>
      %c0_11 = arith.constant 0 : index
      %c0_12 = arith.constant 0 : index
      %13 = vector.load %arg7[%c0_11, %c0_12] : memref<256x128xf32, #tpu.memory_space<vmem>>, vector<256x128xf32>
      tpu.vector_store %arg7[%c0_11, %c0_12], %12 {strides = array<i32>} : memref<256x128xf32, #tpu.memory_space<vmem>>, vector<256x128xf32>,
    } else {
    }
    %c0 = arith.constant 0 : index
    %c0_1 = arith.constant 0 : index
    %3 = vector.load %arg7[%c0, %c0_1] : memref<256x128xf32, #tpu.memory_space<vmem>>, vector<256x128xf32>
    %c0_2 = arith.constant 0 : index
    %c0_3 = arith.constant 0 : index
    %4 = vector.load %arg3[%c0_2, %c0_3] : memref<256x128xbf16, #tpu.memory_space<vmem>>, vector<256x128xbf16>
    %c0_4 = arith.constant 0 : index
    %c0_5 = arith.constant 0 : index
    %5 = vector.load %arg4[%c0_4, %c0_5] : memref<128x128xbf16, #tpu.memory_space<vmem>>, vector<128x128xbf16>
    %cst = arith.constant dense<0.000000e+00> : vector<256x128xf32>
    %6 = tpu.matmul %4, %5, %cst {dimension_numbers = #tpu.dot_dimension_numbers<[1], [0], [0], [1], [0, 0, 1, 1], [], []>} : vector<256x128xbf16>, vector<128x128xbf16>, vector<256x128xf32> -> vector<256x128xf32>
    %7 = arith.addf %3, %6 : vector<256x128xf32>
    %c0_6 = arith.constant 0 : index
    %c0_7 = arith.constant 0 : index
    %8 = vector.load %arg7[%c0_6, %c0_7] : memref<256x128xf32, #tpu.memory_space<vmem>>, vector<256x128xf32>
    tpu.vector_store %arg7[%c0_6, %c0_7], %7 {strides = array<i32>} : memref<256x128xf32, #tpu.memory_space<vmem>>, vector<256x128xf32>,
    %c0_i32_8 = arith.constant 0 : i32
    %9 = arith.cmpi eq, %arg2, %c0_i32_8 : i32
    %10 = arith.extui %9 : i1 to i32
    %c0_i32_9 = arith.constant 0 : i32
    %11 = arith.cmpi ne, %10, %c0_i32_9 : i32
    scf.if %11 {
      %c0_10 = arith.constant 0 : index
      %c0_11 = arith.constant 0 : index
      %12 = vector.load %arg7[%c0_10, %c0_11] : memref<256x128xf32, #tpu.memory_space<vmem>>, vector<256x128xf32>
      %c0_12 = arith.constant 0 : index
      %c0_13 = arith.constant 0 : index
      %13 = vector.load %arg5[%c0_12, %c0_13] : memref<1x128xf32, #tpu.memory_space<vmem>>, vector<1x128xf32>
      %14 = vector.broadcast %13 : vector<1x128xf32> to vector<256x128xf32>
      %15 = arith.addf %12, %14 : vector<256x128xf32>
      %16 = arith.negf %15 : vector<256x128xf32>
      %17 = math.exp %16 : vector<256x128xf32>
      %cst_14 = arith.constant 1.000000e+00 : f32
      %18 = vector.broadcast %cst_14 : f32 to vector<256x128xf32>
      %19 = arith.addf %18, %17 : vector<256x128xf32>
      %20 = arith.divf %18, %19 : vector<256x128xf32>
      %c0_15 = arith.constant 0 : index
      %c0_16 = arith.constant 0 : index
      %21 = vector.load %arg6[%c0_15, %c0_16] : memref<256x128xf32, #tpu.memory_space<vmem>>, vector<256x128xf32>
      tpu.vector_store %arg6[%c0_15, %c0_16], %20 {strides = array<i32>} : memref<256x128xf32, #tpu.memory_space<vmem>>, vector<256x128xf32>,
    } else {
    }
    return
  }
  func.func @transform_0(%arg0: i32, %arg1: i32, %arg2: i32) -> (i32, i32) {
    %c0_i32 = arith.constant 0 : i32
    return %arg0, %arg2 : i32, i32
  }
  func.func @transform_1(%arg0: i32, %arg1: i32, %arg2: i32) -> (i32, i32) {
    %c0_i32 = arith.constant 0 : i32
    return %arg2, %arg1 : i32, i32
  }
  func.func @transform_2(%arg0: i32, %arg1: i32, %arg2: i32) -> (i32, i32) {
    %c0_i32 = arith.constant 0 : i32
    %c0_i32_0 = arith.constant 0 : i32
    return %c0_i32, %arg1 : i32, i32
  }
  func.func @transform_3(%arg0: i32, %arg1: i32, %arg2: i32) -> (i32, i32) {
    %c0_i32 = arith.constant 0 : i32
    return %arg0, %arg1 : i32, i32
  }
}

</mosaic_0001>

<llo_original>
// kernel: vae_forward.6
$region0: #{vae_forward.6}
  #allocation0 [shape = 'u32[]', space=smem, size = 0x4, offset = 0x4, fixed_abs, tag = 'smem constant byte address 0x4 - core index']
  #allocation1 [shape = 'u32[144,128]{1,0:T(1,128)}', space=vmem, size = 0x12000, scoped, tag = 'internal scratch']
  #allocation2 [shape = 'f32[112,128]{1,0:T(8,128)}', space=vmem, size = 0xe000, scoped, tag = 'scratch operand']
  %s0 = inlined_call_operand.vmem [shape: bf16[112,128], index: 0, kind: input, shape index: {}]
  %s1 = inlined_call_operand.vmem [shape: bf16[128,128], index: 1, kind: input, shape index: {}]
  %s2 = inlined_call_operand.vmem [shape: f32[1,128], index: 2, kind: input, shape index: {}]
  %s3 = inlined_call_operand.vmem [shape: f32[112,128], index: 3, kind: output, shape index: {}]
  %s4 = sld [smem:[#allocation0]]
  $region30: #{vae_forward.6} parent=0
    _
  %s6 = ssub.s32 1, %s4
  %s7 = scalar_select 0, %s6, %s4
  // Predicated region
  $region2: #{vae_forward.6} parent=0 // pred_check
    _
  $region3: #{vae_forward.6} parent=0 // pred_check_branch
    %9 = sbr.rel (0) target = $region5
  $region4: #{vae_forward.6} parent=0 // pred_region
    _
  $region5: #{vae_forward.6} parent=0 // pred_fallthru
    _
  // Predicated region
  $region6: #{vae_forward.6} parent=0 // pred_check
    _
  $region7: #{vae_forward.6} parent=0 // pred_check_branch
    %11 = sbr.rel (0) target = $region9
  $region8: #{vae_forward.6} parent=0 // pred_region
    _
  $region9: #{vae_forward.6} parent=0 // pred_fallthru
    _
  // Predicated region
  $region10: #{vae_forward.6} parent=0 // pred_check
    _
  $region11: #{vae_forward.6} parent=0 // pred_check_branch
    %13 = sbr.rel (0) target = $region13
  $region12: #{vae_forward.6} parent=0 // pred_region
    _
  $region13: #{vae_forward.6} parent=0 // pred_fallthru
    _
  %p15 = scmp.eq.s32.totalorder 0, 0
  // Predicated region
  $region14: #{vae_forward.6} parent=0 // pred_check
    %p16 = pneg %p15
  $region15: #{vae_forward.6} parent=0 // pred_check_branch
    %18 = sbr.rel (%p16) target = $region17
  $region16: #{vae_forward.6} parent=0 // pred_region
    %19 = vst [vmem:[#allocation2] sm:$0xff] 0.0
    %20 = vst [vmem:[#allocation2 + $0x8] sm:$0xff] 0.0
    %21 = vst [vmem:[#allocation2 + $0x10] sm:$0xff] 0.0
    %22 = vst [vmem:[#allocation2 + $0x18] sm:$0xff] 0.0
    %23 = vst [vmem:[#allocation2 + $0x20] sm:$0xff] 0.0
    %24 = vst [vmem:[#allocation2 + $0x28] sm:$0xff] 0.0
    %25 = vst [vmem:[#allocation2 + $0x30] sm:$0xff] 0.0
    %26 = vst [vmem:[#allocation2 + $0x38] sm:$0xff] 0.0
    %27 = vst [vmem:[#allocation2 + $0x40] sm:$0xff] 0.0
    %28 = vst [vmem:[#allocation2 + $0x48] sm:$0xff] 0.0
    %29 = vst [vmem:[#allocation2 + $0x50] sm:$0xff] 0.0
    %30 = vst [vmem:[#allocation2 + $0x58] sm:$0xff] 0.0
    %31 = vst [vmem:[#allocation2 + $0x60] sm:$0xff] 0.0
    %32 = vst [vmem:[#allocation2 + $0x68] sm:$0xff] 0.0
  $region17: #{vae_forward.6} parent=0 // pred_fallthru
    _
  %v33 = vld [vmem:[#allocation2] sm:$0xff]
  %v34 = vld [vmem:[#allocation2 + $0x8] sm:$0xff]
  %v35 = vld [vmem:[#allocation2 + $0x10] sm:$0xff]
  %v36 = vld [vmem:[#allocation2 + $0x18] sm:$0xff]
  %v37 = vld [vmem:[#allocation2 + $0x20] sm:$0xff]
  %v38 = vld [vmem:[#allocation2 + $0x28] sm:$0xff]
  %v39 = vld [vmem:[#allocation2 + $0x30] sm:$0xff]
  %v40 = vld [vmem:[#allocation2 + $0x38] sm:$0xff]
  %v41 = vld [vmem:[#allocation2 + $0x40] sm:$0xff]
  %v42 = vld [vmem:[#allocation2 + $0x48] sm:$0xff]
  %v43 = vld [vmem:[#allocation2 + $0x50] sm:$0xff]
  %v44 = vld [vmem:[#allocation2 + $0x58] sm:$0xff]
  %v45 = vld [vmem:[#allocation2 + $0x60] sm:$0xff]
  %v46 = vld [vmem:[#allocation2 + $0x68] sm:$0xff]
  %v47 = vld [vmem:[%s0] sm:$0xf]
  %v48 = vld [vmem:[%s0 + $0x4] sm:$0xf]
  %v49 = vld [vmem:[%s0 + $0x8] sm:$0xf]
  %v50 = vld [vmem:[%s0 + $0xc] sm:$0xf]
  %v51 = vld [vmem:[%s0 + $0x10] sm:$0xf]
  %v52 = vld [vmem:[%s0 + $0x14] sm:$0xf]
  %v53 = vld [vmem:[%s0 + $0x18] sm:$0xf]
  %v54 = vld [vmem:[%s0 + $0x1c] sm:$0xf]
  %v55 = vld [vmem:[%s0 + $0x20] sm:$0xf]
  %v56 = vld [vmem:[%s0 + $0x24] sm:$0xf]
  %v57 = vld [vmem:[%s0 + $0x28] sm:$0xf]
  %v58 = vld [vmem:[%s0 + $0x2c] sm:$0xf]
  %v59 = vld [vmem:[%s0 + $0x30] sm:$0xf]
  %v60 = vld [vmem:[%s0 + $0x34] sm:$0xf]
  %v61 = vld [vmem:[%s1] sm:$0xf]
  %v62 = vld [vmem:[%s1 + $0x4] sm:$0xf]
  %v63 = vld [vmem:[%s1 + $0x8] sm:$0xf]
  %v64 = vld [vmem:[%s1 + $0xc] sm:$0xf]
  %v65 = vld [vmem:[%s1 + $0x10] sm:$0xf]
  %v66 = vld [vmem:[%s1 + $0x14] sm:$0xf]
  %v67 = vld [vmem:[%s1 + $0x18] sm:$0xf]
  %v68 = vld [vmem:[%s1 + $0x1c] sm:$0xf]
  %v69 = vld [vmem:[%s1 + $0x20] sm:$0xf]
  %v70 = vld [vmem:[%s1 + $0x24] sm:$0xf]
  %v71 = vld [vmem:[%s1 + $0x28] sm:$0xf]
  %v72 = vld [vmem:[%s1 + $0x2c] sm:$0xf]
  %v73 = vld [vmem:[%s1 + $0x30] sm:$0xf]
  %v74 = vld [vmem:[%s1 + $0x34] sm:$0xf]
  %v75 = vld [vmem:[%s1 + $0x38] sm:$0xf]
  %v76 = vld [vmem:[%s1 + $0x3c] sm:$0xf]
  %v91 = vunpack.c.l.b16 %v47
  %v92 = vunpack.c.l.b16 %v48
  %v93 = vunpack.c.l.b16 %v49
  %v94 = vunpack.c.l.b16 %v50
  %v95 = vunpack.c.l.b16 %v51
  %v96 = vunpack.c.l.b16 %v52
  %v97 = vunpack.c.l.b16 %v53
  %v98 = vunpack.c.l.b16 %v54
  %v99 = vunpack.c.l.b16 %v55
  %v100 = vunpack.c.l.b16 %v56
  %v101 = vunpack.c.l.b16 %v57
  %v102 = vunpack.c.l.b16 %v58
  %v103 = vunpack.c.l.b16 %v59
  %v104 = vunpack.c.l.b16 %v60
  %v105 = vpack.c.b16 %v92, %v91
  %v106 = vpack.c.b16 %v94, %v93
  %v107 = vpack.c.b16 %v96, %v95
  %v108 = vpack.c.b16 %v98, %v97
  %v109 = vpack.c.b16 %v100, %v99
  %v110 = vpack.c.b16 %v102, %v101
  %v111 = vpack.c.b16 %v104, %v103
  %v135 = vunpack.c.l.b16 %v61
  %v136 = vunpack.c.l.b16 %v62
  %v137 = vunpack.c.l.b16 %v63
  %v138 = vunpack.c.l.b16 %v64
  %v139 = vunpack.c.l.b16 %v65
  %v140 = vunpack.c.l.b16 %v66
  %v141 = vunpack.c.l.b16 %v67
  %v142 = vunpack.c.l.b16 %v68
  %v143 = vunpack.c.l.b16 %v69
  %v144 = vunpack.c.l.b16 %v70
  %v145 = vunpack.c.l.b16 %v71
  %v146 = vunpack.c.l.b16 %v72
  %v147 = vunpack.c.l.b16 %v73
  %v148 = vunpack.c.l.b16 %v74
  %v149 = vunpack.c.l.b16 %v75
  %v150 = vunpack.c.l.b16 %v76
  %v151 = vpack.c.b16 %v136, %v135
  %v152 = vpack.c.b16 %v138, %v137
  %v153 = vpack.c.b16 %v140, %v139
  %v154 = vpack.c.b16 %v142, %v141
  %v155 = vpack.c.b16 %v144, %v143
  %v156 = vpack.c.b16 %v146, %v145
  %v157 = vpack.c.b16 %v148, %v147
  %v158 = vpack.c.b16 %v150, %v149
  %167 = vmatprep.subr.bf16.mxu0 0
  %168 = vmatpush1.bf16.msra.mxu0 %v151
  %169 = vmatprep.subr.bf16.mxu0 0
  %170 = vmatpush1.bf16.msra.mxu0 %v152
  %171 = vmatprep.subr.bf16.mxu0 0
  %172 = vmatpush1.bf16.msra.mxu0 %v153
  %173 = vmatprep.subr.bf16.mxu0 0
  %174 = vmatpush1.bf16.msra.mxu0 %v154
  %175 = vmatprep.subr.bf16.mxu0 0
  %176 = vmatpush1.bf16.msra.mxu0 %v155
  %177 = vmatprep.subr.bf16.mxu0 0
  %178 = vmatpush1.bf16.msra.mxu0 %v156
  %179 = vmatprep.subr.bf16.mxu0 0
  %180 = vmatpush1.bf16.msra.mxu0 %v157
  %181 = vmatprep.subr.bf16.mxu0 0
  %182 = vmatpush1.bf16.msra.mxu0 %v158
  %183 = vmatprep.subr.bf16.mxu0 0
  %184 = vmatpush1.bf16.msra.mxu0 0
  %185 = vmatprep.subr.bf16.mxu0 0
  %186 = vmatpush1.bf16.msra.mxu0 0
  %187 = vmatprep.subr.bf16.mxu0 0
  %188 = vmatpush1.bf16.msra.mxu0 0
  %189 = vmatprep.subr.bf16.mxu0 0
  %190 = vmatpush1.bf16.msra.mxu0 0
  %191 = vmatprep.subr.bf16.mxu0 0
  %192 = vmatpush1.bf16.msra.mxu0 0
  %193 = vmatprep.subr.bf16.mxu0 0
  %194 = vmatpush1.bf16.msra.mxu0 0
  %195 = vmatprep.subr.bf16.mxu0 0
  %196 = vmatpush1.bf16.msra.mxu0 0
  %197 = vmatprep.subr.bf16.mxu0 0
  %198 = vmatpush1.bf16.msra.mxu0 0
  %199 = vmatprep.mubr.bf16.mxu0 0
  %200 = vmatmul.mubr.bf16.gmra.mrb[0].mxu0 %v105
  %v201 = vpop.f32.mrb[0].mxu0
  %v202 = vadd.f32 0.0, %v201
  %v203 = vpop.f32.mrb[0].mxu0
  %v204 = vpop.f32.mrb[0].mxu0
  %v205 = vadd.f32 0.0, %v204
  %v206 = vpop.f32.mrb[0].mxu0
  %207 = vmatprep.mubr.bf16.mxu0 0
  %208 = vmatmul.mubr.bf16.gmra.mrb[0].mxu0 %v106
  %v209 = vpop.f32.mrb[0].mxu0
  %v210 = vadd.f32 0.0, %v209
  %v211 = vpop.f32.mrb[0].mxu0
  %v212 = vpop.f32.mrb[0].mxu0
  %v213 = vadd.f32 0.0, %v212
  %v214 = vpop.f32.mrb[0].mxu0
  %215 = vmatprep.mubr.bf16.mxu0 0
  %216 = vmatmul.mubr.bf16.gmra.mrb[0].mxu0 %v107
  %v217 = vpop.f32.mrb[0].mxu0
  %v218 = vadd.f32 0.0, %v217
  %v219 = vpop.f32.mrb[0].mxu0
  %v220 = vpop.f32.mrb[0].mxu0
  %v221 = vadd.f32 0.0, %v220
  %v222 = vpop.f32.mrb[0].mxu0
  %223 = vmatprep.mubr.bf16.mxu0 0
  %224 = vmatmul.mubr.bf16.gmra.mrb[0].mxu0 %v108
  %v225 = vpop.f32.mrb[0].mxu0
  %v226 = vadd.f32 0.0, %v225
  %v227 = vpop.f32.mrb[0].mxu0
  %v228 = vpop.f32.mrb[0].mxu0
  %v229 = vadd.f32 0.0, %v228
  %v230 = vpop.f32.mrb[0].mxu0
  %231 = vmatprep.mubr.bf16.mxu0 0
  %232 = vmatmul.mubr.bf16.gmra.mrb[0].mxu0 %v109
  %v233 = vpop.f32.mrb[0].mxu0
  %v234 = vadd.f32 0.0, %v233
  %v235 = vpop.f32.mrb[0].mxu0
  %v236 = vpop.f32.mrb[0].mxu0
  %v237 = vadd.f32 0.0, %v236
  %v238 = vpop.f32.mrb[0].mxu0
  %239 = vmatprep.mubr.bf16.mxu0 0
  %240 = vmatmul.mubr.bf16.gmra.mrb[0].mxu0 %v110
  %v241 = vpop.f32.mrb[0].mxu0
  %v242 = vadd.f32 0.0, %v241
  %v243 = vpop.f32.mrb[0].mxu0
  %v244 = vpop.f32.mrb[0].mxu0
  %v245 = vadd.f32 0.0, %v244
  %v246 = vpop.f32.mrb[0].mxu0
  %247 = vmatprep.mubr.bf16.mxu0 0
  %248 = vmatmul.mubr.bf16.gmra.mrb[0].mxu0 %v111
  %v249 = vpop.f32.mrb[0].mxu0
  %v250 = vadd.f32 0.0, %v249
  %v251 = vpop.f32.mrb[0].mxu0
  %v252 = vpop.f32.mrb[0].mxu0
  %v253 = vadd.f32 0.0, %v252
  %v254 = vpop.f32.mrb[0].mxu0
  %255 = vdwg.mxu0
  %v256 = vadd.f32 %v33, %v202
  %v257 = vadd.f32 %v34, %v205
  %v258 = vadd.f32 %v35, %v210
  %v259 = vadd.f32 %v36, %v213
  %v260 = vadd.f32 %v37, %v218
  %v261 = vadd.f32 %v38, %v221
  %v262 = vadd.f32 %v39, %v226
  %v263 = vadd.f32 %v40, %v229
  %v264 = vadd.f32 %v41, %v234
  %v265 = vadd.f32 %v42, %v237
  %v266 = vadd.f32 %v43, %v242
  %v267 = vadd.f32 %v44, %v245
  %v268 = vadd.f32 %v45, %v250
  %v269 = vadd.f32 %v46, %v253
  %270 = vst [vmem:[#allocation2] sm:$0xff] %v256
  %271 = vst [vmem:[#allocation2 + $0x8] sm:$0xff] %v257
  %272 = vst [vmem:[#allocation2 + $0x10] sm:$0xff] %v258
  %273 = vst [vmem:[#allocation2 + $0x18] sm:$0xff] %v259
  %274 = vst [vmem:[#allocation2 + $0x20] sm:$0xff] %v260
  %275 = vst [vmem:[#allocation2 + $0x28] sm:$0xff] %v261
  %276 = vst [vmem:[#allocation2 + $0x30] sm:$0xff] %v262
  %277 = vst [vmem:[#allocation2 + $0x38] sm:$0xff] %v263
  %278 = vst [vmem:[#allocation2 + $0x40] sm:$0xff] %v264
  %279 = vst [vmem:[#allocation2 + $0x48] sm:$0xff] %v265
  %280 = vst [vmem:[#allocation2 + $0x50] sm:$0xff] %v266
  %281 = vst [vmem:[#allocation2 + $0x58] sm:$0xff] %v267
  %282 = vst [vmem:[#allocation2 + $0x60] sm:$0xff] %v268
  %283 = vst [vmem:[#allocation2 + $0x68] sm:$0xff] %v269
  // Predicated region
  $region18: #{vae_forward.6} parent=0 // pred_check
    %p284 = pneg %p15
  $region19: #{vae_forward.6} parent=0 // pred_check_branch
    %286 = sbr.rel (%p284) target = $region21
  $region20: #{vae_forward.6} parent=0 // pred_region
    %v287 = vld [vmem:[#allocation2] sm:$0xff]
    %v288 = vld [vmem:[#allocation2 + $0x8] sm:$0xff]
    %v289 = vld [vmem:[#allocation2 + $0x10] sm:$0xff]
    %v290 = vld [vmem:[#allocation2 + $0x18] sm:$0xff]
    %v291 = vld [vmem:[#allocation2 + $0x20] sm:$0xff]
    %v292 = vld [vmem:[#allocation2 + $0x28] sm:$0xff]
    %v293 = vld [vmem:[#allocation2 + $0x30] sm:$0xff]
    %v294 = vld [vmem:[#allocation2 + $0x38] sm:$0xff]
    %v295 = vld [vmem:[#allocation2 + $0x40] sm:$0xff]
    %v296 = vld [vmem:[#allocation2 + $0x48] sm:$0xff]
    %v297 = vld [vmem:[#allocation2 + $0x50] sm:$0xff]
    %v298 = vld [vmem:[#allocation2 + $0x58] sm:$0xff]
    %v299 = vld [vmem:[#allocation2 + $0x60] sm:$0xff]
    %v300 = vld [vmem:[#allocation2 + $0x68] sm:$0xff]
    %v301 = vld [vmem:[%s2] sm:$0x1]
    %v303 = vlaneseq
    %v304 = vshrl.u32 %v303, 7
    %v305 = vsub.s32 0, %v304
    %v306 = vrot.slane %v301, %v305
    %v308 = vadd.f32 %v287, %v306
    %v309 = vadd.f32 %v288, %v306
    %v310 = vadd.f32 %v289, %v306
    %v311 = vadd.f32 %v290, %v306
    %v312 = vadd.f32 %v291, %v306
    %v313 = vadd.f32 %v292, %v306
    %v314 = vadd.f32 %v293, %v306
    %v315 = vadd.f32 %v294, %v306
    %v316 = vadd.f32 %v295, %v306
    %v317 = vadd.f32 %v296, %v306
    %v318 = vadd.f32 %v297, %v306
    %v319 = vadd.f32 %v298, %v306
    %v320 = vadd.f32 %v299, %v306
    %v321 = vadd.f32 %v300, %v306
    %v322 = vmax.f32 %v308, 0.0
    %v323 = vmax.f32 %v309, 0.0
    %v324 = vmax.f32 %v310, 0.0
    %v325 = vmax.f32 %v311, 0.0
    %v326 = vmax.f32 %v312, 0.0
    %v327 = vmax.f32 %v313, 0.0
    %v328 = vmax.f32 %v314, 0.0
    %v329 = vmax.f32 %v315, 0.0
    %v330 = vmax.f32 %v316, 0.0
    %v331 = vmax.f32 %v317, 0.0
    %v332 = vmax.f32 %v318, 0.0
    %v333 = vmax.f32 %v319, 0.0
    %v334 = vmax.f32 %v320, 0.0
    %v335 = vmax.f32 %v321, 0.0
    %336 = vst [vmem:[%s3] sm:$0xff] %v322
    %337 = vst [vmem:[%s3 + $0x8] sm:$0xff] %v323
    %338 = vst [vmem:[%s3 + $0x10] sm:$0xff] %v324
    %339 = vst [vmem:[%s3 + $0x18] sm:$0xff] %v325
    %340 = vst [vmem:[%s3 + $0x20] sm:$0xff] %v326
    %341 = vst [vmem:[%s3 + $0x28] sm:$0xff] %v327
    %342 = vst [vmem:[%s3 + $0x30] sm:$0xff] %v328
    %343 = vst [vmem:[%s3 + $0x38] sm:$0xff] %v329
    %344 = vst [vmem:[%s3 + $0x40] sm:$0xff] %v330
    %345 = vst [vmem:[%s3 + $0x48] sm:$0xff] %v331
    %346 = vst [vmem:[%s3 + $0x50] sm:$0xff] %v332
    %347 = vst [vmem:[%s3 + $0x58] sm:$0xff] %v333
    %348 = vst [vmem:[%s3 + $0x60] sm:$0xff] %v334
    %349 = vst [vmem:[%s3 + $0x68] sm:$0xff] %v335
  $region21: #{vae_forward.6} parent=0 // pred_fallthru
    _
  // Predicated region
  $region22: #{vae_forward.6} parent=0 // pred_check
    _
  $region23: #{vae_forward.6} parent=0 // pred_check_branch
    %351 = sbr.rel (0) target = $region25
  $region24: #{vae_forward.6} parent=0 // pred_region
    _
  $region25: #{vae_forward.6} parent=0 // pred_fallthru
    _
  // Predicated region
  $region26: #{vae_forward.6} parent=0 // pred_check
    _
  $region27: #{vae_forward.6} parent=0 // pred_check_branch
    %353 = sbr.rel (0) target = $region29
  $region28: #{vae_forward.6} parent=0 // pred_region
    _
  $region29: #{vae_forward.6} parent=0 // pred_fallthru
    _

// kernel: vae_forward.7
$region0: #{vae_forward.7}
  #allocation0 [shape = 'u32[]', space=smem, size = 0x4, offset = 0x4, fixed_abs, tag = 'smem constant byte address 0x4 - core index']
  #allocation1 [shape = 'u32[144,128]{1,0:T(1,128)}', space=vmem, size = 0x12000, scoped, tag = 'internal scratch']
  #allocation2 [shape = 'f32[64,128]{1,0:T(8,128)}', space=vmem, size = 0x8000, scoped, tag = 'scratch operand']
  %s0 = inlined_call_operand.vmem [shape: bf16[64,128], index: 0, kind: input, shape index: {}]
  %s1 = inlined_call_operand.vmem [shape: bf16[128,128], index: 1, kind: input, shape index: {}]
  %s2 = inlined_call_operand.vmem [shape: f32[1,128], index: 2, kind: input, shape index: {}]
  %s3 = inlined_call_operand.vmem [shape: f32[64,128], index: 3, kind: output, shape index: {}]
  %s4 = sld [smem:[#allocation0]]
  $region30: #{vae_forward.7} parent=0
    _
  %s6 = ssub.s32 1, %s4
  %s7 = scalar_select 0, %s6, %s4
  // Predicated region
  $region2: #{vae_forward.7} parent=0 // pred_check
    _
  $region3: #{vae_forward.7} parent=0 // pred_check_branch
    %9 = sbr.rel (0) target = $region5
  $region4: #{vae_forward.7} parent=0 // pred_region
    _
  $region5: #{vae_forward.7} parent=0 // pred_fallthru
    _
  // Predicated region
  $region6: #{vae_forward.7} parent=0 // pred_check
    _
  $region7: #{vae_forward.7} parent=0 // pred_check_branch
    %11 = sbr.rel (0) target = $region9
  $region8: #{vae_forward.7} parent=0 // pred_region
    _
  $region9: #{vae_forward.7} parent=0 // pred_fallthru
    _
  // Predicated region
  $region10: #{vae_forward.7} parent=0 // pred_check
    _
  $region11: #{vae_forward.7} parent=0 // pred_check_branch
    %13 = sbr.rel (0) target = $region13
  $region12: #{vae_forward.7} parent=0 // pred_region
    _
  $region13: #{vae_forward.7} parent=0 // pred_fallthru
    _
  %p15 = scmp.eq.s32.totalorder 0, 0
  // Predicated region
  $region14: #{vae_forward.7} parent=0 // pred_check
    %p16 = pneg %p15
  $region15: #{vae_forward.7} parent=0 // pred_check_branch
    %18 = sbr.rel (%p16) target = $region17
  $region16: #{vae_forward.7} parent=0 // pred_region
    %19 = vst [vmem:[#allocation2] sm:$0xff] 0.0
    %20 = vst [vmem:[#allocation2 + $0x8] sm:$0xff] 0.0
    %21 = vst [vmem:[#allocation2 + $0x10] sm:$0xff] 0.0
    %22 = vst [vmem:[#allocation2 + $0x18] sm:$0xff] 0.0
    %23 = vst [vmem:[#allocation2 + $0x20] sm:$0xff] 0.0
    %24 = vst [vmem:[#allocation2 + $0x28] sm:$0xff] 0.0
    %25 = vst [vmem:[#allocation2 + $0x30] sm:$0xff] 0.0
    %26 = vst [vmem:[#allocation2 + $0x38] sm:$0xff] 0.0
  $region17: #{vae_forward.7} parent=0 // pred_fallthru
    _
  %v27 = vld [vmem:[#allocation2] sm:$0xff]
  %v28 = vld [vmem:[#allocation2 + $0x8] sm:$0xff]
  %v29 = vld [vmem:[#allocation2 + $0x10] sm:$0xff]
  %v30 = vld [vmem:[#allocation2 + $0x18] sm:$0xff]
  %v31 = vld [vmem:[#allocation2 + $0x20] sm:$0xff]
  %v32 = vld [vmem:[#allocation2 + $0x28] sm:$0xff]
  %v33 = vld [vmem:[#allocation2 + $0x30] sm:$0xff]
  %v34 = vld [vmem:[#allocation2 + $0x38] sm:$0xff]
  %v35 = vld [vmem:[%s0] sm:$0xf]
  %v36 = vld [vmem:[%s0 + $0x4] sm:$0xf]
  %v37 = vld [vmem:[%s0 + $0x8] sm:$0xf]
  %v38 = vld [vmem:[%s0 + $0xc] sm:$0xf]
  %v39 = vld [vmem:[%s0 + $0x10] sm:$0xf]
  %v40 = vld [vmem:[%s0 + $0x14] sm:$0xf]
  %v41 = vld [vmem:[%s0 + $0x18] sm:$0xf]
  %v42 = vld [vmem:[%s0 + $0x1c] sm:$0xf]
  %v43 = vld [vmem:[%s1] sm:$0xf]
  %v44 = vld [vmem:[%s1 + $0x4] sm:$0xf]
  %v45 = vld [vmem:[%s1 + $0x8] sm:$0xf]
  %v46 = vld [vmem:[%s1 + $0xc] sm:$0xf]
  %v47 = vld [vmem:[%s1 + $0x10] sm:$0xf]
  %v48 = vld [vmem:[%s1 + $0x14] sm:$0xf]
  %v49 = vld [vmem:[%s1 + $0x18] sm:$0xf]
  %v50 = vld [vmem:[%s1 + $0x1c] sm:$0xf]
  %v51 = vld [vmem:[%s1 + $0x20] sm:$0xf]
  %v52 = vld [vmem:[%s1 + $0x24] sm:$0xf]
  %v53 = vld [vmem:[%s1 + $0x28] sm:$0xf]
  %v54 = vld [vmem:[%s1 + $0x2c] sm:$0xf]
  %v55 = vld [vmem:[%s1 + $0x30] sm:$0xf]
  %v56 = vld [vmem:[%s1 + $0x34] sm:$0xf]
  %v57 = vld [vmem:[%s1 + $0x38] sm:$0xf]
  %v58 = vld [vmem:[%s1 + $0x3c] sm:$0xf]
  %v67 = vunpack.c.l.b16 %v35
  %v68 = vunpack.c.l.b16 %v36
  %v69 = vunpack.c.l.b16 %v37
  %v70 = vunpack.c.l.b16 %v38
  %v71 = vunpack.c.l.b16 %v39
  %v72 = vunpack.c.l.b16 %v40
  %v73 = vunpack.c.l.b16 %v41
  %v74 = vunpack.c.l.b16 %v42
  %v75 = vpack.c.b16 %v68, %v67
  %v76 = vpack.c.b16 %v70, %v69
  %v77 = vpack.c.b16 %v72, %v71
  %v78 = vpack.c.b16 %v74, %v73
  %v99 = vunpack.c.l.b16 %v43
  %v100 = vunpack.c.l.b16 %v44
  %v101 = vunpack.c.l.b16 %v45
  %v102 = vunpack.c.l.b16 %v46
  %v103 = vunpack.c.l.b16 %v47
  %v104 = vunpack.c.l.b16 %v48
  %v105 = vunpack.c.l.b16 %v49
  %v106 = vunpack.c.l.b16 %v50
  %v107 = vunpack.c.l.b16 %v51
  %v108 = vunpack.c.l.b16 %v52
  %v109 = vunpack.c.l.b16 %v53
  %v110 = vunpack.c.l.b16 %v54
  %v111 = vunpack.c.l.b16 %v55
  %v112 = vunpack.c.l.b16 %v56
  %v113 = vunpack.c.l.b16 %v57
  %v114 = vunpack.c.l.b16 %v58
  %v115 = vpack.c.b16 %v100, %v99
  %v116 = vpack.c.b16 %v102, %v101
  %v117 = vpack.c.b16 %v104, %v103
  %v118 = vpack.c.b16 %v106, %v105
  %v119 = vpack.c.b16 %v108, %v107
  %v120 = vpack.c.b16 %v110, %v109
  %v121 = vpack.c.b16 %v112, %v111
  %v122 = vpack.c.b16 %v114, %v113
  %131 = vmatprep.subr.bf16.mxu0 0
  %132 = vmatpush1.bf16.msra.mxu0 %v115
  %133 = vmatprep.subr.bf16.mxu0 0
  %134 = vmatpush1.bf16.msra.mxu0 %v116
  %135 = vmatprep.subr.bf16.mxu0 0
  %136 = vmatpush1.bf16.msra.mxu0 %v117
  %137 = vmatprep.subr.bf16.mxu0 0
  %138 = vmatpush1.bf16.msra.mxu0 %v118
  %139 = vmatprep.subr.bf16.mxu0 0
  %140 = vmatpush1.bf16.msra.mxu0 %v119
  %141 = vmatprep.subr.bf16.mxu0 0
  %142 = vmatpush1.bf16.msra.mxu0 %v120
  %143 = vmatprep.subr.bf16.mxu0 0
  %144 = vmatpush1.bf16.msra.mxu0 %v121
  %145 = vmatprep.subr.bf16.mxu0 0
  %146 = vmatpush1.bf16.msra.mxu0 %v122
  %147 = vmatprep.subr.bf16.mxu0 0
  %148 = vmatpush1.bf16.msra.mxu0 0
  %149 = vmatprep.subr.bf16.mxu0 0
  %150 = vmatpush1.bf16.msra.mxu0 0
  %151 = vmatprep.subr.bf16.mxu0 0
  %152 = vmatpush1.bf16.msra.mxu0 0
  %153 = vmatprep.subr.bf16.mxu0 0
  %154 = vmatpush1.bf16.msra.mxu0 0
  %155 = vmatprep.subr.bf16.mxu0 0
  %156 = vmatpush1.bf16.msra.mxu0 0
  %157 = vmatprep.subr.bf16.mxu0 0
  %158 = vmatpush1.bf16.msra.mxu0 0
  %159 = vmatprep.subr.bf16.mxu0 0
  %160 = vmatpush1.bf16.msra.mxu0 0
  %161 = vmatprep.subr.bf16.mxu0 0
  %162 = vmatpush1.bf16.msra.mxu0 0
  %163 = vmatprep.mubr.bf16.mxu0 0
  %164 = vmatmul.mubr.bf16.gmra.mrb[0].mxu0 %v75
  %v165 = vpop.f32.mrb[0].mxu0
  %v166 = vadd.f32 0.0, %v165
  %v167 = vpop.f32.mrb[0].mxu0
  %v168 = vpop.f32.mrb[0].mxu0
  %v169 = vadd.f32 0.0, %v168
  %v170 = vpop.f32.mrb[0].mxu0
  %171 = vmatprep.mubr.bf16.mxu0 0
  %172 = vmatmul.mubr.bf16.gmra.mrb[0].mxu0 %v76
  %v173 = vpop.f32.mrb[0].mxu0
  %v174 = vadd.f32 0.0, %v173
  %v175 = vpop.f32.mrb[0].mxu0
  %v176 = vpop.f32.mrb[0].mxu0
  %v177 = vadd.f32 0.0, %v176
  %v178 = vpop.f32.mrb[0].mxu0
  %179 = vmatprep.mubr.bf16.mxu0 0
  %180 = vmatmul.mubr.bf16.gmra.mrb[0].mxu0 %v77
  %v181 = vpop.f32.mrb[0].mxu0
  %v182 = vadd.f32 0.0, %v181
  %v183 = vpop.f32.mrb[0].mxu0
  %v184 = vpop.f32.mrb[0].mxu0
  %v185 = vadd.f32 0.0, %v184
  %v186 = vpop.f32.mrb[0].mxu0
  %187 = vmatprep.mubr.bf16.mxu0 0
  %188 = vmatmul.mubr.bf16.gmra.mrb[0].mxu0 %v78
  %v189 = vpop.f32.mrb[0].mxu0
  %v190 = vadd.f32 0.0, %v189
  %v191 = vpop.f32.mrb[0].mxu0
  %v192 = vpop.f32.mrb[0].mxu0
  %v193 = vadd.f32 0.0, %v192
  %v194 = vpop.f32.mrb[0].mxu0
  %195 = vdwg.mxu0
  %v196 = vadd.f32 %v27, %v166
  %v197 = vadd.f32 %v28, %v169
  %v198 = vadd.f32 %v29, %v174
  %v199 = vadd.f32 %v30, %v177
  %v200 = vadd.f32 %v31, %v182
  %v201 = vadd.f32 %v32, %v185
  %v202 = vadd.f32 %v33, %v190
  %v203 = vadd.f32 %v34, %v193
  %204 = vst [vmem:[#allocation2] sm:$0xff] %v196
  %205 = vst [vmem:[#allocation2 + $0x8] sm:$0xff] %v197
  %206 = vst [vmem:[#allocation2 + $0x10] sm:$0xff] %v198
  %207 = vst [vmem:[#allocation2 + $0x18] sm:$0xff] %v199
  %208 = vst [vmem:[#allocation2 + $0x20] sm:$0xff] %v200
  %209 = vst [vmem:[#allocation2 + $0x28] sm:$0xff] %v201
  %210 = vst [vmem:[#allocation2 + $0x30] sm:$0xff] %v202
  %211 = vst [vmem:[#allocation2 + $0x38] sm:$0xff] %v203
  // Predicated region
  $region18: #{vae_forward.7} parent=0 // pred_check
    %p212 = pneg %p15
  $region19: #{vae_forward.7} parent=0 // pred_check_branch
    %214 = sbr.rel (%p212) target = $region21
  $region20: #{vae_forward.7} parent=0 // pred_region
    %v215 = vld [vmem:[#allocation2] sm:$0xff]
    %v216 = vld [vmem:[#allocation2 + $0x8] sm:$0xff]
    %v217 = vld [vmem:[#allocation2 + $0x10] sm:$0xff]
    %v218 = vld [vmem:[#allocation2 + $0x18] sm:$0xff]
    %v219 = vld [vmem:[#allocation2 + $0x20] sm:$0xff]
    %v220 = vld [vmem:[#allocation2 + $0x28] sm:$0xff]
    %v221 = vld [vmem:[#allocation2 + $0x30] sm:$0xff]
    %v222 = vld [vmem:[#allocation2 + $0x38] sm:$0xff]
    %v223 = vld [vmem:[%s2] sm:$0x1]
    %v225 = vlaneseq
    %v226 = vshrl.u32 %v225, 7
    %v227 = vsub.s32 0, %v226
    %v228 = vrot.slane %v223, %v227
    %v230 = vadd.f32 %v215, %v228
    %v231 = vadd.f32 %v216, %v228
    %v232 = vadd.f32 %v217, %v228
    %v233 = vadd.f32 %v218, %v228
    %v234 = vadd.f32 %v219, %v228
    %v235 = vadd.f32 %v220, %v228
    %v236 = vadd.f32 %v221, %v228
    %v237 = vadd.f32 %v222, %v228
    %v238 = vmax.f32 %v230, 0.0
    %v239 = vmax.f32 %v231, 0.0
    %v240 = vmax.f32 %v232, 0.0
    %v241 = vmax.f32 %v233, 0.0
    %v242 = vmax.f32 %v234, 0.0
    %v243 = vmax.f32 %v235, 0.0
    %v244 = vmax.f32 %v236, 0.0
    %v245 = vmax.f32 %v237, 0.0
    %246 = vst [vmem:[%s3] sm:$0xff] %v238
    %247 = vst [vmem:[%s3 + $0x8] sm:$0xff] %v239
    %248 = vst [vmem:[%s3 + $0x10] sm:$0xff] %v240
    %249 = vst [vmem:[%s3 + $0x18] sm:$0xff] %v241
    %250 = vst [vmem:[%s3 + $0x20] sm:$0xff] %v242
    %251 = vst [vmem:[%s3 + $0x28] sm:$0xff] %v243
    %252 = vst [vmem:[%s3 + $0x30] sm:$0xff] %v244
    %253 = vst [vmem:[%s3 + $0x38] sm:$0xff] %v245
  $region21: #{vae_forward.7} parent=0 // pred_fallthru
    _
  // Predicated region
  $region22: #{vae_forward.7} parent=0 // pred_check
    _
  $region23: #{vae_forward.7} parent=0 // pred_check_branch
    %255 = sbr.rel (0) target = $region25
  $region24: #{vae_forward.7} parent=0 // pred_region
    _
  $region25: #{vae_forward.7} parent=0 // pred_fallthru
    _
  // Predicated region
  $region26: #{vae_forward.7} parent=0 // pred_check
    _
  $region27: #{vae_forward.7} parent=0 // pred_check_branch
    %257 = sbr.rel (0) target = $region29
  $region28: #{vae_forward.7} parent=0 // pred_region
    _
  $region29: #{vae_forward.7} parent=0 // pred_fallthru
    _

// kernel: vae_forward.8
$region0: #{vae_forward.8}
  #allocation0 [shape = 'u32[]', space=smem, size = 0x4, offset = 0x4, fixed_abs, tag = 'smem constant byte address 0x4 - core index']
  #allocation1 [shape = 'u32[144,128]{1,0:T(1,128)}', space=vmem, size = 0x12000, scoped, tag = 'internal scratch']
  #allocation2 [shape = 'f32[16,256]{1,0:T(8,128)}', space=vmem, size = 0x4000, scoped, tag = 'scratch operand']
  %s0 = inlined_call_operand.vmem [shape: bf16[16,512], index: 0, kind: input, shape index: {}]
  %s1 = inlined_call_operand.vmem [shape: bf16[512,256], index: 1, kind: input, shape index: {}]
  %s2 = inlined_call_operand.vmem [shape: f32[1,256], index: 2, kind: input, shape index: {}]
  %s3 = inlined_call_operand.vmem [shape: f32[16,128], index: 3, kind: input, shape index: {}]
  %s4 = inlined_call_operand.vmem [shape: f32[16,128], index: 4, kind: output, shape index: {0}]
  %s5 = inlined_call_operand.vmem [shape: f32[16,128], index: 5, kind: output, shape index: {1}]
  %s6 = inlined_call_operand.vmem [shape: f32[16,128], index: 6, kind: output, shape index: {2}]
  %7 = xla_tuple %s4, %s5, %s6
  %s8 = sld [smem:[#allocation0]]
  $region50: #{vae_forward.8} parent=0
    _
  %s10 = ssub.s32 1, %s8
  %s11 = scalar_select 0, %s10, %s8
  // Predicated region
  $region2: #{vae_forward.8} parent=0 // pred_check
    _
  $region3: #{vae_forward.8} parent=0 // pred_check_branch
    %13 = sbr.rel (0) target = $region5
  $region4: #{vae_forward.8} parent=0 // pred_region
    _
  $region5: #{vae_forward.8} parent=0 // pred_fallthru
    _
  // Predicated region
  $region6: #{vae_forward.8} parent=0 // pred_check
    _
  $region7: #{vae_forward.8} parent=0 // pred_check_branch
    %15 = sbr.rel (0) target = $region9
  $region8: #{vae_forward.8} parent=0 // pred_region
    _
  $region9: #{vae_forward.8} parent=0 // pred_fallthru
    _
  // Predicated region
  $region10: #{vae_forward.8} parent=0 // pred_check
    _
  $region11: #{vae_forward.8} parent=0 // pred_check_branch
    %17 = sbr.rel (0) target = $region13
  $region12: #{vae_forward.8} parent=0 // pred_region
    _
  $region13: #{vae_forward.8} parent=0 // pred_fallthru
    _
  // Predicated region
  $region14: #{vae_forward.8} parent=0 // pred_check
    _
  $region15: #{vae_forward.8} parent=0 // pred_check_branch
    %19 = sbr.rel (0) target = $region17
  $region16: #{vae_forward.8} parent=0 // pred_region
    _
  $region17: #{vae_forward.8} parent=0 // pred_fallthru
    _
  %p20 = scmp.eq.s32.totalorder 0, 0
  // Predicated region
  $region18: #{vae_forward.8} parent=0 // pred_check
    %p21 = pneg %p20
  $region19: #{vae_forward.8} parent=0 // pred_check_branch
    %23 = sbr.rel (%p21) target = $region21
  $region20: #{vae_forward.8} parent=0 // pred_region
    %24 = vst [vmem:[#allocation2] sm:$0xff] 0.0
    %25 = vst [vmem:[#allocation2 + $0x8] sm:$0xff] 0.0
    %26 = vst [vmem:[#allocation2 + $0x10] sm:$0xff] 0.0
    %27 = vst [vmem:[#allocation2 + $0x18] sm:$0xff] 0.0
  $region21: #{vae_forward.8} parent=0 // pred_fallthru
    _
  %v28 = vld [vmem:[#allocation2] sm:$0xff]
  %v29 = vld [vmem:[#allocation2 + $0x8] sm:$0xff]
  %v30 = vld [vmem:[#allocation2 + $0x10] sm:$0xff]
  %v31 = vld [vmem:[#allocation2 + $0x18] sm:$0xff]
  %v32 = vld [vmem:[%s0] sm:$0xff]
  %v33 = vld [vmem:[%s0 + $0x8] sm:$0xff]
  %v34 = vld [vmem:[%s0 + $0x10] sm:$0xff]
  %v35 = vld [vmem:[%s0 + $0x18] sm:$0xff]
  %v36 = vld [vmem:[%s1] sm:$0xff]
  %v37 = vld [vmem:[%s1 + $0x8] sm:$0xff]
  %v38 = vld [vmem:[%s1 + $0x10] sm:$0xff]
  %v39 = vld [vmem:[%s1 + $0x18] sm:$0xff]
  %v40 = vld [vmem:[%s1 + $0x20] sm:$0xff]
  %v41 = vld [vmem:[%s1 + $0x28] sm:$0xff]
  %v42 = vld [vmem:[%s1 + $0x30] sm:$0xff]
  %v43 = vld [vmem:[%s1 + $0x38] sm:$0xff]
  %v44 = vld [vmem:[%s1 + $0x40] sm:$0xff]
  %v45 = vld [vmem:[%s1 + $0x48] sm:$0xff]
  %v46 = vld [vmem:[%s1 + $0x50] sm:$0xff]
  %v47 = vld [vmem:[%s1 + $0x58] sm:$0xff]
  %v48 = vld [vmem:[%s1 + $0x60] sm:$0xff]
  %v49 = vld [vmem:[%s1 + $0x68] sm:$0xff]
  %v50 = vld [vmem:[%s1 + $0x70] sm:$0xff]
  %v51 = vld [vmem:[%s1 + $0x78] sm:$0xff]
  %v52 = vld [vmem:[%s1 + $0x80] sm:$0xff]
  %v53 = vld [vmem:[%s1 + $0x88] sm:$0xff]
  %v54 = vld [vmem:[%s1 + $0x90] sm:$0xff]
  %v55 = vld [vmem:[%s1 + $0x98] sm:$0xff]
  %v56 = vld [vmem:[%s1 + $0xa0] sm:$0xff]
  %v57 = vld [vmem:[%s1 + $0xa8] sm:$0xff]
  %v58 = vld [vmem:[%s1 + $0xb0] sm:$0xff]
  %v59 = vld [vmem:[%s1 + $0xb8] sm:$0xff]
  %v60 = vld [vmem:[%s1 + $0xc0] sm:$0xff]
  %v61 = vld [vmem:[%s1 + $0xc8] sm:$0xff]
  %v62 = vld [vmem:[%s1 + $0xd0] sm:$0xff]
  %v63 = vld [vmem:[%s1 + $0xd8] sm:$0xff]
  %v64 = vld [vmem:[%s1 + $0xe0] sm:$0xff]
  %v65 = vld [vmem:[%s1 + $0xe8] sm:$0xff]
  %v66 = vld [vmem:[%s1 + $0xf0] sm:$0xff]
  %v67 = vld [vmem:[%s1 + $0xf8] sm:$0xff]
  %v68 = vld [vmem:[%s1 + $0x100] sm:$0xff]
  %v69 = vld [vmem:[%s1 + $0x108] sm:$0xff]
  %v70 = vld [vmem:[%s1 + $0x110] sm:$0xff]
  %v71 = vld [vmem:[%s1 + $0x118] sm:$0xff]
  %v72 = vld [vmem:[%s1 + $0x120] sm:$0xff]
  %v73 = vld [vmem:[%s1 + $0x128] sm:$0xff]
  %v74 = vld [vmem:[%s1 + $0x130] sm:$0xff]
  %v75 = vld [vmem:[%s1 + $0x138] sm:$0xff]
  %v76 = vld [vmem:[%s1 + $0x140] sm:$0xff]
  %v77 = vld [vmem:[%s1 + $0x148] sm:$0xff]
  %v78 = vld [vmem:[%s1 + $0x150] sm:$0xff]
  %v79 = vld [vmem:[%s1 + $0x158] sm:$0xff]
  %v80 = vld [vmem:[%s1 + $0x160] sm:$0xff]
  %v81 = vld [vmem:[%s1 + $0x168] sm:$0xff]
  %v82 = vld [vmem:[%s1 + $0x170] sm:$0xff]
  %v83 = vld [vmem:[%s1 + $0x178] sm:$0xff]
  %v84 = vld [vmem:[%s1 + $0x180] sm:$0xff]
  %v85 = vld [vmem:[%s1 + $0x188] sm:$0xff]
  %v86 = vld [vmem:[%s1 + $0x190] sm:$0xff]
  %v87 = vld [vmem:[%s1 + $0x198] sm:$0xff]
  %v88 = vld [vmem:[%s1 + $0x1a0] sm:$0xff]
  %v89 = vld [vmem:[%s1 + $0x1a8] sm:$0xff]
  %v90 = vld [vmem:[%s1 + $0x1b0] sm:$0xff]
  %v91 = vld [vmem:[%s1 + $0x1b8] sm:$0xff]
  %v92 = vld [vmem:[%s1 + $0x1c0] sm:$0xff]
  %v93 = vld [vmem:[%s1 + $0x1c8] sm:$0xff]
  %v94 = vld [vmem:[%s1 + $0x1d0] sm:$0xff]
  %v95 = vld [vmem:[%s1 + $0x1d8] sm:$0xff]
  %v96 = vld [vmem:[%s1 + $0x1e0] sm:$0xff]
  %v97 = vld [vmem:[%s1 + $0x1e8] sm:$0xff]
  %v98 = vld [vmem:[%s1 + $0x1f0] sm:$0xff]
  %v99 = vld [vmem:[%s1 + $0x1f8] sm:$0xff]
  %v104 = vunpack.c.l.b16 %v32
  %v105 = vunpack.c.h.b16 %v32
  %v106 = vunpack.c.l.b16 %v33
  %v107 = vunpack.c.h.b16 %v33
  %v108 = vunpack.c.l.b16 %v34
  %v109 = vunpack.c.h.b16 %v34
  %v110 = vunpack.c.l.b16 %v35
  %v111 = vunpack.c.h.b16 %v35
  %v112 = vpack.c.b16 %v108, %v104
  %v113 = vpack.c.b16 %v109, %v105
  %v114 = vpack.c.b16 %v110, %v106
  %v115 = vpack.c.b16 %v111, %v107
  %v184 = vunpack.c.l.b16 %v36
  %v185 = vunpack.c.h.b16 %v36
  %v186 = vunpack.c.l.b16 %v37
  %v187 = vunpack.c.h.b16 %v37
  %v188 = vunpack.c.l.b16 %v38
  %v189 = vunpack.c.h.b16 %v38
  %v190 = vunpack.c.l.b16 %v39
  %v191 = vunpack.c.h.b16 %v39
  %v192 = vunpack.c.l.b16 %v40
  %v193 = vunpack.c.h.b16 %v40
  %v194 = vunpack.c.l.b16 %v41
  %v195 = vunpack.c.h.b16 %v41
  %v196 = vunpack.c.l.b16 %v42
  %v197 = vunpack.c.h.b16 %v42
  %v198 = vunpack.c.l.b16 %v43
  %v199 = vunpack.c.h.b16 %v43
  %v200 = vunpack.c.l.b16 %v44
  %v201 = vunpack.c.h.b16 %v44
  %v202 = vunpack.c.l.b16 %v45
  %v203 = vunpack.c.h.b16 %v45
  %v204 = vunpack.c.l.b16 %v46
  %v205 = vunpack.c.h.b16 %v46
  %v206 = vunpack.c.l.b16 %v47
  %v207 = vunpack.c.h.b16 %v47
  %v208 = vunpack.c.l.b16 %v48
  %v209 = vunpack.c.h.b16 %v48
  %v210 = vunpack.c.l.b16 %v49
  %v211 = vunpack.c.h.b16 %v49
  %v212 = vunpack.c.l.b16 %v50
  %v213 = vunpack.c.h.b16 %v50
  %v214 = vunpack.c.l.b16 %v51
  %v215 = vunpack.c.h.b16 %v51
  %v216 = vunpack.c.l.b16 %v52
  %v217 = vunpack.c.h.b16 %v52
  %v218 = vunpack.c.l.b16 %v53
  %v219 = vunpack.c.h.b16 %v53
  %v220 = vunpack.c.l.b16 %v54
  %v221 = vunpack.c.h.b16 %v54
  %v222 = vunpack.c.l.b16 %v55
  %v223 = vunpack.c.h.b16 %v55
  %v224 = vunpack.c.l.b16 %v56
  %v225 = vunpack.c.h.b16 %v56
  %v226 = vunpack.c.l.b16 %v57
  %v227 = vunpack.c.h.b16 %v57
  %v228 = vunpack.c.l.b16 %v58
  %v229 = vunpack.c.h.b16 %v58
  %v230 = vunpack.c.l.b16 %v59
  %v231 = vunpack.c.h.b16 %v59
  %v232 = vunpack.c.l.b16 %v60
  %v233 = vunpack.c.h.b16 %v60
  %v234 = vunpack.c.l.b16 %v61
  %v235 = vunpack.c.h.b16 %v61
  %v236 = vunpack.c.l.b16 %v62
  %v237 = vunpack.c.h.b16 %v62
  %v238 = vunpack.c.l.b16 %v63
  %v239 = vunpack.c.h.b16 %v63
  %v240 = vunpack.c.l.b16 %v64
  %v241 = vunpack.c.h.b16 %v64
  %v242 = vunpack.c.l.b16 %v65
  %v243 = vunpack.c.h.b16 %v65
  %v244 = vunpack.c.l.b16 %v66
  %v245 = vunpack.c.h.b16 %v66
  %v246 = vunpack.c.l.b16 %v67
  %v247 = vunpack.c.h.b16 %v67
  %v248 = vunpack.c.l.b16 %v68
  %v249 = vunpack.c.h.b16 %v68
  %v250 = vunpack.c.l.b16 %v69
  %v251 = vunpack.c.h.b16 %v69
  %v252 = vunpack.c.l.b16 %v70
  %v253 = vunpack.c.h.b16 %v70
  %v254 = vunpack.c.l.b16 %v71
  %v255 = vunpack.c.h.b16 %v71
  %v256 = vunpack.c.l.b16 %v72
  %v257 = vunpack.c.h.b16 %v72
  %v258 = vunpack.c.l.b16 %v73
  %v259 = vunpack.c.h.b16 %v73
  %v260 = vunpack.c.l.b16 %v74
  %v261 = vunpack.c.h.b16 %v74
  %v262 = vunpack.c.l.b16 %v75
  %v263 = vunpack.c.h.b16 %v75
  %v264 = vunpack.c.l.b16 %v76
  %v265 = vunpack.c.h.b16 %v76
  %v266 = vunpack.c.l.b16 %v77
  %v267 = vunpack.c.h.b16 %v77
  %v268 = vunpack.c.l.b16 %v78
  %v269 = vunpack.c.h.b16 %v78
  %v270 = vunpack.c.l.b16 %v79
  %v271 = vunpack.c.h.b16 %v79
  %v272 = vunpack.c.l.b16 %v80
  %v273 = vunpack.c.h.b16 %v80
  %v274 = vunpack.c.l.b16 %v81
  %v275 = vunpack.c.h.b16 %v81
  %v276 = vunpack.c.l.b16 %v82
  %v277 = vunpack.c.h.b16 %v82
  %v278 = vunpack.c.l.b16 %v83
  %v279 = vunpack.c.h.b16 %v83
  %v280 = vunpack.c.l.b16 %v84
  %v281 = vunpack.c.h.b16 %v84
  %v282 = vunpack.c.l.b16 %v85
  %v283 = vunpack.c.h.b16 %v85
  %v284 = vunpack.c.l.b16 %v86
  %v285 = vunpack.c.h.b16 %v86
  %v286 = vunpack.c.l.b16 %v87
  %v287 = vunpack.c.h.b16 %v87
  %v288 = vunpack.c.l.b16 %v88
  %v289 = vunpack.c.h.b16 %v88
  %v290 = vunpack.c.l.b16 %v89
  %v291 = vunpack.c.h.b16 %v89
  %v292 = vunpack.c.l.b16 %v90
  %v293 = vunpack.c.h.b16 %v90
  %v294 = vunpack.c.l.b16 %v91
  %v295 = vunpack.c.h.b16 %v91
  %v296 = vunpack.c.l.b16 %v92
  %v297 = vunpack.c.h.b16 %v92
  %v298 = vunpack.c.l.b16 %v93
  %v299 = vunpack.c.h.b16 %v93
  %v300 = vunpack.c.l.b16 %v94
  %v301 = vunpack.c.h.b16 %v94
  %v302 = vunpack.c.l.b16 %v95
  %v303 = vunpack.c.h.b16 %v95
  %v304 = vunpack.c.l.b16 %v96
  %v305 = vunpack.c.h.b16 %v96
  %v306 = vunpack.c.l.b16 %v97
  %v307 = vunpack.c.h.b16 %v97
  %v308 = vunpack.c.l.b16 %v98
  %v309 = vunpack.c.h.b16 %v98
  %v310 = vunpack.c.l.b16 %v99
  %v311 = vunpack.c.h.b16 %v99
  %v312 = vpack.c.b16 %v186, %v184
  %v313 = vpack.c.b16 %v187, %v185
  %v314 = vpack.c.b16 %v190, %v188
  %v315 = vpack.c.b16 %v191, %v189
  %v316 = vpack.c.b16 %v194, %v192
  %v317 = vpack.c.b16 %v195, %v193
  %v318 = vpack.c.b16 %v198, %v196
  %v319 = vpack.c.b16 %v199, %v197
  %v320 = vpack.c.b16 %v202, %v200
  %v321 = vpack.c.b16 %v203, %v201
  %v322 = vpack.c.b16 %v206, %v204
  %v323 = vpack.c.b16 %v207, %v205
  %v324 = vpack.c.b16 %v210, %v208
  %v325 = vpack.c.b16 %v211, %v209
  %v326 = vpack.c.b16 %v214, %v212
  %v327 = vpack.c.b16 %v215, %v213
  %v328 = vpack.c.b16 %v218, %v216
  %v329 = vpack.c.b16 %v219, %v217
  %v330 = vpack.c.b16 %v222, %v220
  %v331 = vpack.c.b16 %v223, %v221
  %v332 = vpack.c.b16 %v226, %v224
  %v333 = vpack.c.b16 %v227, %v225
  %v334 = vpack.c.b16 %v230, %v228
  %v335 = vpack.c.b16 %v231, %v229
  %v336 = vpack.c.b16 %v234, %v232
  %v337 = vpack.c.b16 %v235, %v233
  %v338 = vpack.c.b16 %v238, %v236
  %v339 = vpack.c.b16 %v239, %v237
  %v340 = vpack.c.b16 %v242, %v240
  %v341 = vpack.c.b16 %v243, %v241
  %v342 = vpack.c.b16 %v246, %v244
  %v343 = vpack.c.b16 %v247, %v245
  %v344 = vpack.c.b16 %v250, %v248
  %v345 = vpack.c.b16 %v251, %v249
  %v346 = vpack.c.b16 %v254, %v252
  %v347 = vpack.c.b16 %v255, %v253
  %v348 = vpack.c.b16 %v258, %v256
  %v349 = vpack.c.b16 %v259, %v257
  %v350 = vpack.c.b16 %v262, %v260
  %v351 = vpack.c.b16 %v263, %v261
  %v352 = vpack.c.b16 %v266, %v264
  %v353 = vpack.c.b16 %v267, %v265
  %v354 = vpack.c.b16 %v270, %v268
  %v355 = vpack.c.b16 %v271, %v269
  %v356 = vpack.c.b16 %v274, %v272
  %v357 = vpack.c.b16 %v275, %v273
  %v358 = vpack.c.b16 %v278, %v276
  %v359 = vpack.c.b16 %v279, %v277
  %v360 = vpack.c.b16 %v282, %v280
  %v361 = vpack.c.b16 %v283, %v281
  %v362 = vpack.c.b16 %v286, %v284
  %v363 = vpack.c.b16 %v287, %v285
  %v364 = vpack.c.b16 %v290, %v288
  %v365 = vpack.c.b16 %v291, %v289
  %v366 = vpack.c.b16 %v294, %v292
  %v367 = vpack.c.b16 %v295, %v293
  %v368 = vpack.c.b16 %v298, %v296
  %v369 = vpack.c.b16 %v299, %v297
  %v370 = vpack.c.b16 %v302, %v300
  %v371 = vpack.c.b16 %v303, %v301
  %v372 = vpack.c.b16 %v306, %v304
  %v373 = vpack.c.b16 %v307, %v305
  %v374 = vpack.c.b16 %v310, %v308
  %v375 = vpack.c.b16 %v311, %v309
  %440 = vmatprep.subr.bf16.mxu0 %v313
  %441 = vmatpush1.bf16.msra.mxu0 %v312
  %442 = vmatprep.subr.bf16.mxu0 %v315
  %443 = vmatpush1.bf16.msra.mxu0 %v314
  %444 = vmatprep.subr.bf16.mxu0 %v317
  %445 = vmatpush1.bf16.msra.mxu0 %v316
  %446 = vmatprep.subr.bf16.mxu0 %v319
  %447 = vmatpush1.bf16.msra.mxu0 %v318
  %448 = vmatprep.subr.bf16.mxu0 %v321
  %449 = vmatpush1.bf16.msra.mxu0 %v320
  %450 = vmatprep.subr.bf16.mxu0 %v323
  %451 = vmatpush1.bf16.msra.mxu0 %v322
  %452 = vmatprep.subr.bf16.mxu0 %v325
  %453 = vmatpush1.bf16.msra.mxu0 %v324
  %454 = vmatprep.subr.bf16.mxu0 %v327
  %455 = vmatpush1.bf16.msra.mxu0 %v326
  %456 = vmatprep.subr.bf16.mxu0 %v329
  %457 = vmatpush1.bf16.msra.mxu0 %v328
  %458 = vmatprep.subr.bf16.mxu0 %v331
  %459 = vmatpush1.bf16.msra.mxu0 %v330
  %460 = vmatprep.subr.bf16.mxu0 %v333
  %461 = vmatpush1.bf16.msra.mxu0 %v332
  %462 = vmatprep.subr.bf16.mxu0 %v335
  %463 = vmatpush1.bf16.msra.mxu0 %v334
  %464 = vmatprep.subr.bf16.mxu0 %v337
  %465 = vmatpush1.bf16.msra.mxu0 %v336
  %466 = vmatprep.subr.bf16.mxu0 %v339
  %467 = vmatpush1.bf16.msra.mxu0 %v338
  %468 = vmatprep.subr.bf16.mxu0 %v341
  %469 = vmatpush1.bf16.msra.mxu0 %v340
  %470 = vmatprep.subr.bf16.mxu0 %v343
  %471 = vmatpush1.bf16.msra.mxu0 %v342
  %472 = vmatprep.mubr.bf16.mxu0 %v113
  %473 = vmatmul.mubr.bf16.gmra.mrb[0].mxu0 %v112
  %v474 = vpop.f32.mrb[0].mxu0
  %v475 = vadd.f32 0.0, %v474
  %v476 = vpop.f32.mrb[0].mxu0
  %v477 = vadd.f32 0.0, %v476
  %v478 = vpop.f32.mrb[0].mxu0
  %v479 = vadd.f32 0.0, %v478
  %v480 = vpop.f32.mrb[0].mxu0
  %v481 = vadd.f32 0.0, %v480
  %482 = vdwg.mxu0
  %483 = vmatprep.subr.bf16.mxu0 %v345
  %484 = vmatpush1.bf16.msra.mxu0 %v344
  %485 = vmatprep.subr.bf16.mxu0 %v347
  %486 = vmatpush1.bf16.msra.mxu0 %v346
  %487 = vmatprep.subr.bf16.mxu0 %v349
  %488 = vmatpush1.bf16.msra.mxu0 %v348
  %489 = vmatprep.subr.bf16.mxu0 %v351
  %490 = vmatpush1.bf16.msra.mxu0 %v350
  %491 = vmatprep.subr.bf16.mxu0 %v353
  %492 = vmatpush1.bf16.msra.mxu0 %v352
  %493 = vmatprep.subr.bf16.mxu0 %v355
  %494 = vmatpush1.bf16.msra.mxu0 %v354
  %495 = vmatprep.subr.bf16.mxu0 %v357
  %496 = vmatpush1.bf16.msra.mxu0 %v356
  %497 = vmatprep.subr.bf16.mxu0 %v359
  %498 = vmatpush1.bf16.msra.mxu0 %v358
  %499 = vmatprep.subr.bf16.mxu0 %v361
  %500 = vmatpush1.bf16.msra.mxu0 %v360
  %501 = vmatprep.subr.bf16.mxu0 %v363
  %502 = vmatpush1.bf16.msra.mxu0 %v362
  %503 = vmatprep.subr.bf16.mxu0 %v365
  %504 = vmatpush1.bf16.msra.mxu0 %v364
  %505 = vmatprep.subr.bf16.mxu0 %v367
  %506 = vmatpush1.bf16.msra.mxu0 %v366
  %507 = vmatprep.subr.bf16.mxu0 %v369
  %508 = vmatpush1.bf16.msra.mxu0 %v368
  %509 = vmatprep.subr.bf16.mxu0 %v371
  %510 = vmatpush1.bf16.msra.mxu0 %v370
  %511 = vmatprep.subr.bf16.mxu0 %v373
  %512 = vmatpush1.bf16.msra.mxu0 %v372
  %513 = vmatprep.subr.bf16.mxu0 %v375
  %514 = vmatpush1.bf16.msra.mxu0 %v374
  %515 = vmatprep.mubr.bf16.mxu0 %v115
  %516 = vmatmul.mubr.bf16.gmra.mrb[0].mxu0 %v114
  %v517 = vpop.f32.mrb[0].mxu0
  %v518 = vadd.f32 %v475, %v517
  %v519 = vpop.f32.mrb[0].mxu0
  %v520 = vadd.f32 %v477, %v519
  %v521 = vpop.f32.mrb[0].mxu0
  %v522 = vadd.f32 %v479, %v521
  %v523 = vpop.f32.mrb[0].mxu0
  %v524 = vadd.f32 %v481, %v523
  %525 = vdwg.mxu0
  %v526 = vadd.f32 %v28, %v518
  %v527 = vadd.f32 %v29, %v520
  %v528 = vadd.f32 %v30, %v522
  %v529 = vadd.f32 %v31, %v524
  %530 = vst [vmem:[#allocation2] sm:$0xff] %v526
  %531 = vst [vmem:[#allocation2 + $0x8] sm:$0xff] %v527
  %532 = vst [vmem:[#allocation2 + $0x10] sm:$0xff] %v528
  %533 = vst [vmem:[#allocation2 + $0x18] sm:$0xff] %v529
  // Predicated region
  $region22: #{vae_forward.8} parent=0 // pred_check
    %p534 = pneg %p20
  $region23: #{vae_forward.8} parent=0 // pred_check_branch
    %536 = sbr.rel (%p534) target = $region25
  $region24: #{vae_forward.8} parent=0 // pred_region
    %v537 = vld [vmem:[#allocation2] sm:$0xff]
    %v538 = vld [vmem:[#allocation2 + $0x8] sm:$0xff]
    %v539 = vld [vmem:[#allocation2 + $0x10] sm:$0xff]
    %v540 = vld [vmem:[#allocation2 + $0x18] sm:$0xff]
    %v541 = vld [vmem:[%s2] sm:$0x3]
    %v543 = vlaneseq
    %v544 = vshrl.u32 %v543, 7
    %v545 = vsub.s32 0, %v544
    %v546 = vrot.slane %v541, %v545
    %v547 = vlaneseq
    %v548 = vshrl.u32 %v547, 7
    %v549 = vsub.s32 1, %v548
    %v550 = vrot.slane %v541, %v549
    %v553 = vadd.f32 %v537, %v546
    %v554 = vadd.f32 %v538, %v550
    %v555 = vadd.f32 %v539, %v546
    %v556 = vadd.f32 %v540, %v550
    %557 = vst [vmem:[%s4] sm:$0xff] %v553
    %558 = vst [vmem:[%s4 + $0x8] sm:$0xff] %v555
    %559 = vst [vmem:[%s5] sm:$0xff] %v554
    %560 = vst [vmem:[%s5 + $0x8] sm:$0xff] %v556
    %v561 = vld [vmem:[%s3] sm:$0xff]
    %v562 = vld [vmem:[%s3 + $0x8] sm:$0xff]
    %v563 = vmul.f32 %v554, 0.5
    %v564 = vmul.f32 %v556, 0.5
    %v565 = vmul.f32 %v563, 1.442695
    %v566 = vpow.pop %v565
    %v567 = vmul.f32 %v564, 1.442695
    %v568 = vpow.pop %v567
    %v569 = vmul.f32 %v561, %v566
    %v570 = vmul.f32 %v562, %v568
    %v571 = vadd.f32 %v553, %v569
    %v572 = vadd.f32 %v555, %v570
    %573 = vst [vmem:[%s6] sm:$0xff] %v571
    %574 = vst [vmem:[%s6 + $0x8] sm:$0xff] %v572
  $region25: #{vae_forward.8} parent=0 // pred_fallthru
    _
  // Predicated region
  $region26: #{vae_forward.8} parent=0 // pred_check
    _
  $region27: #{vae_forward.8} parent=0 // pred_check_branch
    %576 = sbr.rel (0) target = $region29
  $region28: #{vae_forward.8} parent=0 // pred_region
    _
  $region29: #{vae_forward.8} parent=0 // pred_fallthru
    _
  // Predicated region
  $region30: #{vae_forward.8} parent=0 // pred_check
    _
  $region31: #{vae_forward.8} parent=0 // pred_check_branch
    %578 = sbr.rel (0) target = $region33
  $region32: #{vae_forward.8} parent=0 // pred_region
    _
  $region33: #{vae_forward.8} parent=0 // pred_fallthru
    _
  // Predicated region
  $region34: #{vae_forward.8} parent=0 // pred_check
    _
  $region35: #{vae_forward.8} parent=0 // pred_check_branch
    %580 = sbr.rel (0) target = $region37
  $region36: #{vae_forward.8} parent=0 // pred_region
    _
  $region37: #{vae_forward.8} parent=0 // pred_fallthru
    _
  // Predicated region
  $region38: #{vae_forward.8} parent=0 // pred_check
    _
  $region39: #{vae_forward.8} parent=0 // pred_check_branch
    %582 = sbr.rel (0) target = $region41
  $region40: #{vae_forward.8} parent=0 // pred_region
    _
  $region41: #{vae_forward.8} parent=0 // pred_fallthru
    _
  // Predicated region
  $region42: #{vae_forward.8} parent=0 // pred_check
    _
  $region43: #{vae_forward.8} parent=0 // pred_check_branch
    %584 = sbr.rel (0) target = $region45
  $region44: #{vae_forward.8} parent=0 // pred_region
    _
  $region45: #{vae_forward.8} parent=0 // pred_fallthru
    _
  // Predicated region
  $region46: #{vae_forward.8} parent=0 // pred_check
    _
  $region47: #{vae_forward.8} parent=0 // pred_check_branch
    %586 = sbr.rel (0) target = $region49
  $region48: #{vae_forward.8} parent=0 // pred_region
    _
  $region49: #{vae_forward.8} parent=0 // pred_fallthru
    _

// kernel: tile.8
$region0: #{tile.8}
  #allocation0 [shape = 's32[1]{0}', space=sflag, size = 0x4, scoped, tag = 'scoped memory for tile.8']
  %s0 = inlined_call_operand.vmem [shape: f32[16], index: 0, kind: input, shape index: {}]
  %s1 = inlined_call_operand.vmem [shape: f32[25,16], index: 1, kind: output, shape index: {}]
  // Predicated region
  $region2: #{tile.8} parent=0 // pred_check
    _
  $region3: #{tile.8} parent=0 // pred_check_branch
    %3 = sbr.rel (0) target = $region5
  $region4: #{tile.8} parent=0 // pred_region
    _
  $region5: #{tile.8} parent=0 // pred_fallthru
    _
  %v4 = vld [vmem:[%s0] ss:$0 sm:$0xff]
  %5 = vst [vmem:[%s1] sm:$0xff] %v4
  %s6 = scalar_lea.vmem %s1, 8
  %7 = vst [vmem:[%s6] sm:$0xff] %v4
  %s8 = scalar_lea.vmem %s1, 16
  %9 = vst [vmem:[%s8] sm:$0xff] %v4
  %s10 = scalar_lea.vmem %s1, 24
  %11 = vst [vmem:[%s10] sm:$0xff] %v4

// kernel: vae_forward.9
$region0: #{vae_forward.9}
  #allocation0 [shape = 'u32[]', space=smem, size = 0x4, offset = 0x4, fixed_abs, tag = 'smem constant byte address 0x4 - core index']
  #allocation1 [shape = 'u32[144,128]{1,0:T(1,128)}', space=vmem, size = 0x12000, scoped, tag = 'internal scratch']
  #allocation2 [shape = 'f32[16,256]{1,0:T(8,128)}', space=vmem, size = 0x4000, scoped, tag = 'scratch operand']
  %s0 = inlined_call_operand.vmem [shape: bf16[16,128], index: 0, kind: input, shape index: {}]
  %s1 = inlined_call_operand.vmem [shape: bf16[128,512], index: 1, kind: input, shape index: {}]
  %s2 = inlined_call_operand.vmem [shape: f32[1,512], index: 2, kind: input, shape index: {}]
  %s3 = inlined_call_operand.vmem [shape: f32[16,512], index: 3, kind: output, shape index: {}]
  %s4 = sld [smem:[#allocation0]]
  $region110: #{vae_forward.9} parent=0
    _
  %s6 = ssub.s32 1, %s4
  %s7 = scalar_select 0, %s6, %s4
  $region1: #{vae_forward.9} parent=0
    #allocation3 [shape = 'u8[131072]{0}', space=vmem, size = 0x20000, scoped, tag = 'input window, operand 1']
    #allocation4 [shape = 'u8[32768]{0}', space=vmem, size = 0x8000, scoped, tag = 'output window, operand 0']
    loop: start=0, step=1, limit=4
    $region2: #{vae_forward.9} parent=1 // loop_pre_header
      _
    $region3: #{vae_forward.9} parent=1 // loop_header
      %s9 = sphi 0, %s13
      %p10 = scmp.ge.s32.totalorder %s9, 4
      %s16 = sphi 0, %s35
      %s17 = sphi 0, %s31
      %s18 = sphi 0, %s27
      %s19 = sphi 0, %s16
      %s20 = sphi 0, %s17
      %s21 = sphi 0, %s18
      %s22 = sphi 0, %s19
      %s23 = sphi 0, %s20
      %s24 = sphi 0, %s21
      %s40 = sphi 0, %s42
      %s43 = sphi 0, %s40
      %s44 = sphi 0, %s43
      %s60 = sphi 0, %s44
      %s68 = sphi 0, %s70
      %s71 = sphi 0, %s68
      %s72 = sphi 0, %s71
      %s88 = sphi 0, %s72
      %s94 = sphi 0, %s96
      %s97 = sphi 0, %s94
      %s98 = sphi 0, %s97
      %s114 = sphi 0, %s98
      %s122 = sphi 0, %s124
      %s125 = sphi 0, %s122
      %s126 = sphi 0, %s125
      %s142 = sphi 0, %s126
    $region4: #{vae_forward.9} parent=1 // loop_header_branch
      %12 = sbr.rel (%p10) target = $region8
    $region5: #{vae_forward.9} parent=1 // loop_body
      %s14 = ssub.s32 %s9, 1
      %s15 = ssub.s32 %s9, 2
      %s25 = sadd.s32 1, %s18
      %p26 = scmp.ge.s32.totalorder %s25, 1
      %s27 = scalar_select %p26, 0, %s25
      %s28 = sadd.s32 1, %s17
      %s29 = scalar_select %p26, %s28, %s17
      %p30 = scmp.ge.s32.totalorder %s29, 2
      %s31 = scalar_select %p30, 0, %s29
      %s32 = sadd.s32 1, %s16
      %s33 = scalar_select %p30, %s32, %s16
      %p34 = scmp.ge.s32.totalorder %s33, 1
      %s35 = scalar_select %p34, 0, %s33
      %s36 = ssub.s32 %s16, %s35
      %s37 = ssub.s32 %s18, %s27
      %s38 = sor.u32 %s36, %s37
      %p39 = scmp.eq.s32.totalorder %s38, 0
      %s41 = sadd.s32 %s40, 1
      %s42 = scalar_select %p39, %s40, %s41
      %p45 = pneg %p39
      %p46 = scmp.eq.s32.totalorder %s9, 1
      %p47 = por %p45, %p46
      %p48 = scmp.ne.s32.totalorder %s40, %s43
      %p49 = scmp.eq.s32.totalorder %s9, 0
      %p50 = por %p48, %p49
      %p51 = scmp.ne.s32.totalorder %s40, %s43
      %p52 = scmp.eq.s32.totalorder %s14, 1
      %p53 = por %p51, %p52
      %p54 = scmp.ne.s32.totalorder %s43, %s44
      %p55 = scmp.eq.s32.totalorder %s14, 0
      %p56 = por %p54, %p55
      %p57 = scmp.ne.s32.totalorder %s43, %s44
      %p58 = scmp.eq.s32.totalorder %s15, 1
      %p59 = por %p57, %p58
      %p61 = scmp.ne.s32.totalorder %s44, %s60
      %p62 = scmp.eq.s32.totalorder %s15, 0
      %p63 = por %p61, %p62
      %s64 = ssub.s32 %s18, %s27
      %s65 = ssub.s32 %s17, %s31
      %s66 = sor.u32 %s64, %s65
      %p67 = scmp.eq.s32.totalorder %s66, 0
      %s69 = sadd.s32 %s68, 1
      %s70 = scalar_select %p67, %s68, %s69
      %p73 = pneg %p67
      %p74 = scmp.eq.s32.totalorder %s9, 1
      %p75 = por %p73, %p74
      %p76 = scmp.ne.s32.totalorder %s68, %s71
      %p77 = scmp.eq.s32.totalorder %s9, 0
      %p78 = por %p76, %p77
      %p79 = scmp.ne.s32.totalorder %s68, %s71
      %p80 = scmp.eq.s32.totalorder %s14, 1
      %p81 = por %p79, %p80
      %p82 = scmp.ne.s32.totalorder %s71, %s72
      %p83 = scmp.eq.s32.totalorder %s14, 0
      %p84 = por %p82, %p83
      %p85 = scmp.ne.s32.totalorder %s71, %s72
      %p86 = scmp.eq.s32.totalorder %s15, 1
      %p87 = por %p85, %p86
      %p89 = scmp.ne.s32.totalorder %s72, %s88
      %p90 = scmp.eq.s32.totalorder %s15, 0
      %p91 = por %p89, %p90
      %s92 = ssub.s32 %s17, %s31
      %p93 = scmp.eq.s32.totalorder %s92, 0
      %s95 = sadd.s32 %s94, 1
      %s96 = scalar_select %p93, %s94, %s95
      %p99 = pneg %p93
      %p100 = scmp.eq.s32.totalorder %s9, 1
      %p101 = por %p99, %p100
      %p102 = scmp.ne.s32.totalorder %s94, %s97
      %p103 = scmp.eq.s32.totalorder %s9, 0
      %p104 = por %p102, %p103
      %p105 = scmp.ne.s32.totalorder %s94, %s97
      %p106 = scmp.eq.s32.totalorder %s14, 1
      %p107 = por %p105, %p106
      %p108 = scmp.ne.s32.totalorder %s97, %s98
      %p109 = scmp.eq.s32.totalorder %s14, 0
      %p110 = por %p108, %p109
      %p111 = scmp.ne.s32.totalorder %s97, %s98
      %p112 = scmp.eq.s32.totalorder %s15, 1
      %p113 = por %p111, %p112
      %p115 = scmp.ne.s32.totalorder %s98, %s114
      %p116 = scmp.eq.s32.totalorder %s15, 0
      %p117 = por %p115, %p116
      %s118 = ssub.s32 %s16, %s35
      %s119 = ssub.s32 %s17, %s31
      %s120 = sor.u32 %s118, %s119
      %p121 = scmp.eq.s32.totalorder %s120, 0
      %s123 = sadd.s32 %s122, 1
      %s124 = scalar_select %p121, %s122, %s123
      %p127 = pneg %p121
      %p128 = scmp.eq.s32.totalorder %s9, 1
      %p129 = por %p127, %p128
      %p130 = scmp.ne.s32.totalorder %s122, %s125
      %p131 = scmp.eq.s32.totalorder %s9, 0
      %p132 = por %p130, %p131
      %p133 = scmp.ne.s32.totalorder %s122, %s125
      %p134 = scmp.eq.s32.totalorder %s14, 1
      %p135 = por %p133, %p134
      %p136 = scmp.ne.s32.totalorder %s125, %s126
      %p137 = scmp.eq.s32.totalorder %s14, 0
      %p138 = por %p136, %p137
      %p139 = scmp.ne.s32.totalorder %s125, %s126
      %p140 = scmp.eq.s32.totalorder %s15, 1
      %p141 = por %p139, %p140
      %p143 = scmp.ne.s32.totalorder %s126, %s142
      %p144 = scmp.eq.s32.totalorder %s15, 0
      %p145 = por %p143, %p144
      %p146 = scmp.le.s32.totalorder 1, %s9
      %p147 = scmp.lt.s32.totalorder %s9, 3
      %p148 = pnand %p146, %p147
      %p149 = pneg %p148
      // Predicated region
      $region9: #{vae_forward.9} parent=5 // pred_check
        _
      $region10: #{vae_forward.9} parent=5 // pred_check_branch
        %151 = sbr.rel (%p148) target = $region12
      $region11: #{vae_forward.9} parent=5 // pred_region
        %s152 = ssub.s32 %s9, 1
        // Predicated region
        $region13: #{vae_forward.9} parent=11 // pred_check
          %p153 = pneg %p56
        $region14: #{vae_forward.9} parent=11 // pred_check_branch
          %155 = sbr.rel (%p153) target = $region16
        $region15: #{vae_forward.9} parent=11 // pred_region
          %s156 = smul.u32 2, %s19
          %p157 = scmp.lt.s32.totalorder %s156, 1
          %s158 = scalar_select %p157, %s156, 1
          %p159 = scmp.lt.s32.totalorder %s21, 0
          %s160 = scalar_select %p159, %s21, 0
          %s161 = sadd.s32 %s160, %s158
          %s162 = smul.addr %s161, 4
          %s163 = scalar_lea.vmem %s0, %s162
          %s164 = smul.u32 2, %s19
        $region16: #{vae_forward.9} parent=11 // pred_fallthru
          _
      $region12: #{vae_forward.9} parent=5 // pred_fallthru
        _
      %p165 = scmp.lt.s32.totalorder %s9, 2
      // Predicated region
      $region17: #{vae_forward.9} parent=5 // pred_check
        %p166 = pneg %p165
      $region18: #{vae_forward.9} parent=5 // pred_check_branch
        %168 = sbr.rel (%p166) target = $region20
      $region19: #{vae_forward.9} parent=5 // pred_region
        // Predicated region
        $region21: #{vae_forward.9} parent=19 // pred_check
          %p169 = pneg %p78
        $region22: #{vae_forward.9} parent=19 // pred_check_branch
          %171 = sbr.rel (%p169) target = $region24
        $region23: #{vae_forward.9} parent=19 // pred_region
          %s172 = sand.u32 %s68, 1
          %s173 = sand.u32 %s68, 1
          %s174 = smul.addr %s173, 128
          %s175 = scalar_lea.vmem [#allocation3], %s174
          %s176 = smul.u32 16, %s18
          %s177 = smul.u32 2, %s17
          %s178 = smul.addr %s176, 4
          %s179 = sadd.s32 %s177, %s178
          %s180 = smul.addr %s179, 4
          %s181 = scalar_lea.vmem %s1, %s180
          // Predicated region
          $region25: #{vae_forward.9} parent=23 // pred_check
            _
          $region26: #{vae_forward.9} parent=23 // pred_check_branch
            %183 = sbr.rel (0) target = $region28
          $region27: #{vae_forward.9} parent=23 // pred_region
            // Predicated region
            $region29: #{vae_forward.9} parent=27 // pred_check
              _
            $region30: #{vae_forward.9} parent=27 // pred_check_branch
              %185 = sbr.rel (0) target = $region32
            $region31: #{vae_forward.9} parent=27 // pred_region
              // Predicated region
              $region44: #{vae_forward.9} parent=31 // pred_check
                _
              $region45: #{vae_forward.9} parent=31 // pred_check_branch
                %230 = sbr.rel (0) target = $region47
              $region46: #{vae_forward.9} parent=31 // pred_region
                loop: start=0, step=1, limit=1
                $region48: #{vae_forward.9} parent=46 // loop_pre_header
                  _
                $region49: #{vae_forward.9} parent=46 // loop_header
                  %s232 = sphi 0, %s236
                  %p233 = scmp.ge.s32.totalorder %s232, 1
                  %s237 = sphi %s181, %s181
                  %s238 = sphi %s175, %s175
                $region50: #{vae_forward.9} parent=46 // loop_header_branch
                  %235 = sbr.rel (%p233) target = $region54
                $region51: #{vae_forward.9} parent=46 // loop_body
                  %v239 = vld [vmem:[%s237] sm:$0xff]
                  %240 = vst [vmem:[%s238] sm:$0xff] %v239
                  %v241 = vld [vmem:[%s237 + $0x10] sm:$0xff]
                  %242 = vst [vmem:[%s238 + $0x8] sm:$0xff] %v241
                  %v243 = vld [vmem:[%s237 + $0x20] sm:$0xff]
                  %244 = vst [vmem:[%s238 + $0x10] sm:$0xff] %v243
                  %v245 = vld [vmem:[%s237 + $0x30] sm:$0xff]
                  %246 = vst [vmem:[%s238 + $0x18] sm:$0xff] %v245
                  %v247 = vld [vmem:[%s237 + $0x40] sm:$0xff]
                  %248 = vst [vmem:[%s238 + $0x20] sm:$0xff] %v247
                  %v249 = vld [vmem:[%s237 + $0x50] sm:$0xff]
                  %250 = vst [vmem:[%s238 + $0x28] sm:$0xff] %v249
                  %v251 = vld [vmem:[%s237 + $0x60] sm:$0xff]
                  %252 = vst [vmem:[%s238 + $0x30] sm:$0xff] %v251
                  %v253 = vld [vmem:[%s237 + $0x70] sm:$0xff]
                  %254 = vst [vmem:[%s238 + $0x38] sm:$0xff] %v253
                  %v255 = vld [vmem:[%s237 + $0x80] sm:$0xff]
                  %256 = vst [vmem:[%s238 + $0x40] sm:$0xff] %v255
                  %v257 = vld [vmem:[%s237 + $0x90] sm:$0xff]
                  %258 = vst [vmem:[%s238 + $0x48] sm:$0xff] %v257
                  %v259 = vld [vmem:[%s237 + $0xa0] sm:$0xff]
                  %260 = vst [vmem:[%s238 + $0x50] sm:$0xff] %v259
                  %v261 = vld [vmem:[%s237 + $0xb0] sm:$0xff]
                  %262 = vst [vmem:[%s238 + $0x58] sm:$0xff] %v261
                  %v263 = vld [vmem:[%s237 + $0xc0] sm:$0xff]
                  %264 = vst [vmem:[%s238 + $0x60] sm:$0xff] %v263
                  %v265 = vld [vmem:[%s237 + $0xd0] sm:$0xff]
                  %266 = vst [vmem:[%s238 + $0x68] sm:$0xff] %v265
                  %v267 = vld [vmem:[%s237 + $0xe0] sm:$0xff]
                  %268 = vst [vmem:[%s238 + $0x70] sm:$0xff] %v267
                  %v269 = vld [vmem:[%s237 + $0xf0] sm:$0xff]
                  %270 = vst [vmem:[%s238 + $0x78] sm:$0xff] %v269
                $region52: #{vae_forward.9} parent=46 // loop_footer
                  %s236 = sadd.s32 1, %s232
                $region53: #{vae_forward.9} parent=46 // loop_footer_branch
                  %231 = sbr.rel target = $region49
                $region54: #{vae_forward.9} parent=46 // loop_exit
                  _
              $region47: #{vae_forward.9} parent=31 // pred_fallthru
                _
              // Predicated region
              $region55: #{vae_forward.9} parent=31 // pred_check
                _
              $region56: #{vae_forward.9} parent=31 // pred_check_branch
                %272 = sbr.rel target = $region58
              $region57: #{vae_forward.9} parent=31 // pred_region
                _
              $region58: #{vae_forward.9} parent=31 // pred_fallthru
                _
            $region32: #{vae_forward.9} parent=27 // pred_fallthru
              _
            // Predicated region
            $region33: #{vae_forward.9} parent=27 // pred_check
              _
            $region34: #{vae_forward.9} parent=27 // pred_check_branch
              %187 = sbr.rel target = $region36
            $region35: #{vae_forward.9} parent=27 // pred_region
              loop: start=0, step=1, limit=1
              $region37: #{vae_forward.9} parent=35 // loop_pre_header
                _
              $region38: #{vae_forward.9} parent=35 // loop_header
                %s190 = sphi 0, %s194
                %p191 = scmp.ge.s32.totalorder %s190, 1
                %s195 = sphi %s181, %s181
                %s196 = sphi %s175, %s175
              $region39: #{vae_forward.9} parent=35 // loop_header_branch
                %193 = sbr.rel (%p191) target = $region43
              $region40: #{vae_forward.9} parent=35 // loop_body
                %v197 = vld [vmem:[%s195] sm:$0xff]
                %198 = vst [vmem:[%s196] sm:$0xff] %v197
                %v199 = vld [vmem:[%s195 + $0x10] sm:$0xff]
                %200 = vst [vmem:[%s196 + $0x8] sm:$0xff] %v199
                %v201 = vld [vmem:[%s195 + $0x20] sm:$0xff]
                %202 = vst [vmem:[%s196 + $0x10] sm:$0xff] %v201
                %v203 = vld [vmem:[%s195 + $0x30] sm:$0xff]
                %204 = vst [vmem:[%s196 + $0x18] sm:$0xff] %v203
                %v205 = vld [vmem:[%s195 + $0x40] sm:$0xff]
                %206 = vst [vmem:[%s196 + $0x20] sm:$0xff] %v205
                %v207 = vld [vmem:[%s195 + $0x50] sm:$0xff]
                %208 = vst [vmem:[%s196 + $0x28] sm:$0xff] %v207
                %v209 = vld [vmem:[%s195 + $0x60] sm:$0xff]
                %210 = vst [vmem:[%s196 + $0x30] sm:$0xff] %v209
                %v211 = vld [vmem:[%s195 + $0x70] sm:$0xff]
                %212 = vst [vmem:[%s196 + $0x38] sm:$0xff] %v211
                %v213 = vld [vmem:[%s195 + $0x80] sm:$0xff]
                %214 = vst [vmem:[%s196 + $0x40] sm:$0xff] %v213
                %v215 = vld [vmem:[%s195 + $0x90] sm:$0xff]
                %216 = vst [vmem:[%s196 + $0x48] sm:$0xff] %v215
                %v217 = vld [vmem:[%s195 + $0xa0] sm:$0xff]
                %218 = vst [vmem:[%s196 + $0x50] sm:$0xff] %v217
                %v219 = vld [vmem:[%s195 + $0xb0] sm:$0xff]
                %220 = vst [vmem:[%s196 + $0x58] sm:$0xff] %v219
                %v221 = vld [vmem:[%s195 + $0xc0] sm:$0xff]
                %222 = vst [vmem:[%s196 + $0x60] sm:$0xff] %v221
                %v223 = vld [vmem:[%s195 + $0xd0] sm:$0xff]
                %224 = vst [vmem:[%s196 + $0x68] sm:$0xff] %v223
                %v225 = vld [vmem:[%s195 + $0xe0] sm:$0xff]
                %226 = vst [vmem:[%s196 + $0x70] sm:$0xff] %v225
                %v227 = vld [vmem:[%s195 + $0xf0] sm:$0xff]
                %228 = vst [vmem:[%s196 + $0x78] sm:$0xff] %v227
              $region41: #{vae_forward.9} parent=35 // loop_footer
                %s194 = sadd.s32 1, %s190
              $region42: #{vae_forward.9} parent=35 // loop_footer_branch
                %189 = sbr.rel target = $region38
              $region43: #{vae_forward.9} parent=35 // loop_exit
                _
            $region36: #{vae_forward.9} parent=27 // pred_fallthru
              _
          $region28: #{vae_forward.9} parent=23 // pred_fallthru
            _
          %273 = vnop
        $region24: #{vae_forward.9} parent=19 // pred_fallthru
          _
        // Predicated region
        $region59: #{vae_forward.9} parent=19 // pred_check
          %p274 = pneg %p104
        $region60: #{vae_forward.9} parent=19 // pred_check_branch
          %276 = sbr.rel (%p274) target = $region62
        $region61: #{vae_forward.9} parent=19 // pred_region
          %s277 = smul.u32 2, %s17
          %p278 = scmp.lt.s32.totalorder %s277, 3
          %s279 = scalar_select %p278, %s277, 3
          %s280 = scalar_lea.vmem %s2, %s279
          %s281 = smul.u32 2, %s17
        $region62: #{vae_forward.9} parent=19 // pred_fallthru
          _
      $region20: #{vae_forward.9} parent=5 // pred_fallthru
        _
      %p282 = scmp.le.s32.totalorder 1, %s9
      %p283 = scmp.lt.s32.totalorder %s9, 3
      %p284 = pnand %p282, %p283
      %p285 = pneg %p284
      // Predicated region
      $region63: #{vae_forward.9} parent=5 // pred_check
        _
      $region64: #{vae_forward.9} parent=5 // pred_check_branch
        %287 = sbr.rel (%p284) target = $region66
      $region65: #{vae_forward.9} parent=5 // pred_region
        %s288 = ssub.s32 %s9, 1
        %s289 = sand.u32 %s71, 1
        %s290 = sand.u32 %s71, 1
        %s291 = smul.addr %s290, 128
        %s292 = scalar_lea.vmem [#allocation3], %s291
        // Predicated region
        $region67: #{vae_forward.9} parent=65 // pred_check
          %p293 = pneg %p84
        $region68: #{vae_forward.9} parent=65 // pred_check_branch
          %295 = sbr.rel (%p293) target = $region70
        $region69: #{vae_forward.9} parent=65 // pred_region
          _
        $region70: #{vae_forward.9} parent=65 // pred_fallthru
          _
        %s296 = smul.u32 2, %s19
        %p297 = scmp.lt.s32.totalorder %s296, 1
        %s298 = scalar_select %p297, %s296, 1
        %p299 = scmp.lt.s32.totalorder %s21, 0
        %s300 = scalar_select %p299, %s21, 0
        %s301 = sadd.s32 %s300, %s298
        %s302 = smul.addr %s301, 4
        %s303 = scalar_lea.vmem %s0, %s302
        %p304 = pneg %p56
        %p305 = pneg %p53
        %s306 = sand.u32 %s71, 1
        %s307 = sand.u32 %s71, 1
        %s308 = smul.addr %s307, 128
        %s309 = scalar_lea.vmem [#allocation3], %s308
        %p310 = pneg %p84
        %p311 = pneg %p81
        %s312 = smul.u32 2, %s20
        %p313 = scmp.lt.s32.totalorder %s312, 3
        %s314 = scalar_select %p313, %s312, 3
        %s315 = scalar_lea.vmem %s2, %s314
        %p316 = pneg %p110
        %p317 = pneg %p107
        %p318 = pneg %p138
        %p319 = pneg %p135
        %s320 = sand.u32 %s125, 1
        %s321 = sand.u32 %s125, 1
        %s322 = smul.addr %s321, 32
        %s323 = scalar_lea.vmem [#allocation4], %s322
        %s324 = smul.u32 2, %s19
        %p325 = scmp.lt.s32.totalorder %s324, 1
        %s326 = scalar_select %p325, %s324, 1
        %p327 = scmp.lt.s32.totalorder %s21, 0
        %s328 = scalar_select %p327, %s21, 0
        %s329 = sadd.s32 %s328, %s326
        %s330 = smul.addr %s329, 4
        %s331 = scalar_lea.vmem %s0, %s330
        %s332 = smul.u32 2, %s19
        %s333 = smul.u32 16, %s21
        %s334 = smul.u32 2, %s20
        %s335 = smul.u32 2, %s20
        %p336 = scmp.lt.s32.totalorder %s335, 3
        %s337 = scalar_select %p336, %s335, 3
        %s338 = scalar_lea.vmem %s2, %s337
        %s339 = smul.u32 2, %s20
        %s340 = smul.u32 2, %s19
        %s341 = smul.u32 2, %s20
        %p343 = scmp.eq.s32.totalorder %s21, 0
        // Predicated region
        $region71: #{vae_forward.9} parent=65 // pred_check
          %p344 = pneg %p343
        $region72: #{vae_forward.9} parent=65 // pred_check_branch
          %346 = sbr.rel (%p344) target = $region74
        $region73: #{vae_forward.9} parent=65 // pred_region
          %347 = vst [vmem:[#allocation2] sm:$0xff] 0.0
          %348 = vst [vmem:[#allocation2 + $0x8] sm:$0xff] 0.0
          %349 = vst [vmem:[#allocation2 + $0x10] sm:$0xff] 0.0
          %350 = vst [vmem:[#allocation2 + $0x18] sm:$0xff] 0.0
        $region74: #{vae_forward.9} parent=65 // pred_fallthru
          _
        %v351 = vld [vmem:[#allocation2] sm:$0xff]
        %v352 = vld [vmem:[#allocation2 + $0x8] sm:$0xff]
        %v353 = vld [vmem:[#allocation2 + $0x10] sm:$0xff]
        %v354 = vld [vmem:[#allocation2 + $0x18] sm:$0xff]
        %v355 = vld [vmem:[%s331] sm:$0xf]
        %v356 = vld [vmem:[%s331 + $0x4] sm:$0xf]
        %v357 = vld [vmem:[%s292] sm:$0xff]
        %v358 = vld [vmem:[%s292 + $0x8] sm:$0xff]
        %v359 = vld [vmem:[%s292 + $0x10] sm:$0xff]
        %v360 = vld [vmem:[%s292 + $0x18] sm:$0xff]
        %v361 = vld [vmem:[%s292 + $0x20] sm:$0xff]
        %v362 = vld [vmem:[%s292 + $0x28] sm:$0xff]
        %v363 = vld [vmem:[%s292 + $0x30] sm:$0xff]
        %v364 = vld [vmem:[%s292 + $0x38] sm:$0xff]
        %v365 = vld [vmem:[%s292 + $0x40] sm:$0xff]
        %v366 = vld [vmem:[%s292 + $0x48] sm:$0xff]
        %v367 = vld [vmem:[%s292 + $0x50] sm:$0xff]
        %v368 = vld [vmem:[%s292 + $0x58] sm:$0xff]
        %v369 = vld [vmem:[%s292 + $0x60] sm:$0xff]
        %v370 = vld [vmem:[%s292 + $0x68] sm:$0xff]
        %v371 = vld [vmem:[%s292 + $0x70] sm:$0xff]
        %v372 = vld [vmem:[%s292 + $0x78] sm:$0xff]
        %v375 = vunpack.c.l.b16 %v355
        %v376 = vunpack.c.l.b16 %v356
        %v377 = vpack.c.b16 %v376, %v375
        %v395 = vunpack.c.l.b16 %v357
        %v396 = vunpack.c.h.b16 %v357
        %v397 = vunpack.c.l.b16 %v358
        %v398 = vunpack.c.h.b16 %v358
        %v399 = vunpack.c.l.b16 %v359
        %v400 = vunpack.c.h.b16 %v359
        %v401 = vunpack.c.l.b16 %v360
        %v402 = vunpack.c.h.b16 %v360
        %v403 = vunpack.c.l.b16 %v361
        %v404 = vunpack.c.h.b16 %v361
        %v405 = vunpack.c.l.b16 %v362
        %v406 = vunpack.c.h.b16 %v362
        %v407 = vunpack.c.l.b16 %v363
        %v408 = vunpack.c.h.b16 %v363
        %v409 = vunpack.c.l.b16 %v364
        %v410 = vunpack.c.h.b16 %v364
        %v411 = vunpack.c.l.b16 %v365
        %v412 = vunpack.c.h.b16 %v365
        %v413 = vunpack.c.l.b16 %v366
        %v414 = vunpack.c.h.b16 %v366
        %v415 = vunpack.c.l.b16 %v367
        %v416 = vunpack.c.h.b16 %v367
        %v417 = vunpack.c.l.b16 %v368
        %v418 = vunpack.c.h.b16 %v368
        %v419 = vunpack.c.l.b16 %v369
        %v420 = vunpack.c.h.b16 %v369
        %v421 = vunpack.c.l.b16 %v370
        %v422 = vunpack.c.h.b16 %v370
        %v423 = vunpack.c.l.b16 %v371
        %v424 = vunpack.c.h.b16 %v371
        %v425 = vunpack.c.l.b16 %v372
        %v426 = vunpack.c.h.b16 %v372
        %v427 = vpack.c.b16 %v397, %v395
        %v428 = vpack.c.b16 %v398, %v396
        %v429 = vpack.c.b16 %v401, %v399
        %v430 = vpack.c.b16 %v402, %v400
        %v431 = vpack.c.b16 %v405, %v403
        %v432 = vpack.c.b16 %v406, %v404
        %v433 = vpack.c.b16 %v409, %v407
        %v434 = vpack.c.b16 %v410, %v408
        %v435 = vpack.c.b16 %v413, %v411
        %v436 = vpack.c.b16 %v414, %v412
        %v437 = vpack.c.b16 %v417, %v415
        %v438 = vpack.c.b16 %v418, %v416
        %v439 = vpack.c.b16 %v421, %v419
        %v440 = vpack.c.b16 %v422, %v420
        %v441 = vpack.c.b16 %v425, %v423
        %v442 = vpack.c.b16 %v426, %v424
        %459 = vmatprep.subr.bf16.mxu0 %v428
        %460 = vmatpush1.bf16.msra.mxu0 %v427
        %461 = vmatprep.subr.bf16.mxu0 %v430
        %462 = vmatpush1.bf16.msra.mxu0 %v429
        %463 = vmatprep.subr.bf16.mxu0 %v432
        %464 = vmatpush1.bf16.msra.mxu0 %v431
        %465 = vmatprep.subr.bf16.mxu0 %v434
        %466 = vmatpush1.bf16.msra.mxu0 %v433
        %467 = vmatprep.subr.bf16.mxu0 %v436
        %468 = vmatpush1.bf16.msra.mxu0 %v435
        %469 = vmatprep.subr.bf16.mxu0 %v438
        %470 = vmatpush1.bf16.msra.mxu0 %v437
        %471 = vmatprep.subr.bf16.mxu0 %v440
        %472 = vmatpush1.bf16.msra.mxu0 %v439
        %473 = vmatprep.subr.bf16.mxu0 %v442
        %474 = vmatpush1.bf16.msra.mxu0 %v441
        %475 = vmatprep.subr.bf16.mxu0 0
        %476 = vmatpush1.bf16.msra.mxu0 0
        %477 = vmatprep.subr.bf16.mxu0 0
        %478 = vmatpush1.bf16.msra.mxu0 0
        %479 = vmatprep.subr.bf16.mxu0 0
        %480 = vmatpush1.bf16.msra.mxu0 0
        %481 = vmatprep.subr.bf16.mxu0 0
        %482 = vmatpush1.bf16.msra.mxu0 0
        %483 = vmatprep.subr.bf16.mxu0 0
        %484 = vmatpush1.bf16.msra.mxu0 0
        %485 = vmatprep.subr.bf16.mxu0 0
        %486 = vmatpush1.bf16.msra.mxu0 0
        %487 = vmatprep.subr.bf16.mxu0 0
        %488 = vmatpush1.bf16.msra.mxu0 0
        %489 = vmatprep.subr.bf16.mxu0 0
        %490 = vmatpush1.bf16.msra.mxu0 0
        %491 = vmatprep.mubr.bf16.mxu0 0
        %492 = vmatmul.mubr.bf16.gmra.mrb[0].mxu0 %v377
        %v493 = vpop.f32.mrb[0].mxu0
        %v494 = vadd.f32 0.0, %v493
        %v495 = vpop.f32.mrb[0].mxu0
        %v496 = vadd.f32 0.0, %v495
        %v497 = vpop.f32.mrb[0].mxu0
        %v498 = vadd.f32 0.0, %v497
        %v499 = vpop.f32.mrb[0].mxu0
        %v500 = vadd.f32 0.0, %v499
        %501 = vdwg.mxu0
        %v502 = vadd.f32 %v351, %v494
        %v503 = vadd.f32 %v352, %v496
        %v504 = vadd.f32 %v353, %v498
        %v505 = vadd.f32 %v354, %v500
        %506 = vst [vmem:[#allocation2] sm:$0xff] %v502
        %507 = vst [vmem:[#allocation2 + $0x8] sm:$0xff] %v503
        %508 = vst [vmem:[#allocation2 + $0x10] sm:$0xff] %v504
        %509 = vst [vmem:[#allocation2 + $0x18] sm:$0xff] %v505
        // Predicated region
        $region75: #{vae_forward.9} parent=65 // pred_check
          %p510 = pneg %p343
        $region76: #{vae_forward.9} parent=65 // pred_check_branch
          %512 = sbr.rel (%p510) target = $region78
        $region77: #{vae_forward.9} parent=65 // pred_region
          %v513 = vld [vmem:[#allocation2] sm:$0xff]
          %v514 = vld [vmem:[#allocation2 + $0x8] sm:$0xff]
          %v515 = vld [vmem:[#allocation2 + $0x10] sm:$0xff]
          %v516 = vld [vmem:[#allocation2 + $0x18] sm:$0xff]
          %v517 = vld [vmem:[%s338] sm:$0x3]
          %v519 = vlaneseq
          %v520 = vshrl.u32 %v519, 7
          %v521 = vsub.s32 0, %v520
          %v522 = vrot.slane %v517, %v521
          %v523 = vlaneseq
          %v524 = vshrl.u32 %v523, 7
          %v525 = vsub.s32 1, %v524
          %v526 = vrot.slane %v517, %v525
          %v529 = vadd.f32 %v513, %v522
          %v530 = vadd.f32 %v514, %v526
          %v531 = vadd.f32 %v515, %v522
          %v532 = vadd.f32 %v516, %v526
          %v533 = vmax.f32 %v529, 0.0
          %v534 = vmax.f32 %v530, 0.0
          %v535 = vmax.f32 %v531, 0.0
          %v536 = vmax.f32 %v532, 0.0
          %537 = vst [vmem:[%s323] sm:$0xff] %v533
          %538 = vst [vmem:[%s323 + $0x8] sm:$0xff] %v534
          %539 = vst [vmem:[%s323 + $0x10] sm:$0xff] %v535
          %540 = vst [vmem:[%s323 + $0x18] sm:$0xff] %v536
        $region78: #{vae_forward.9} parent=65 // pred_fallthru
          _
        %s541 = sand.u32 %s125, 1
        %s542 = sand.u32 %s125, 1
        %s543 = smul.addr %s542, 32
        %s544 = scalar_lea.vmem [#allocation4], %s543
        // Predicated region
        $region79: #{vae_forward.9} parent=65 // pred_check
          %p545 = pneg %p135
        $region80: #{vae_forward.9} parent=65 // pred_check_branch
          %547 = sbr.rel (%p545) target = $region82
        $region81: #{vae_forward.9} parent=65 // pred_region
          %s548 = smul.u32 2, %s19
          %s549 = smul.u32 2, %s20
          %s550 = smul.addr %s548, 4
          %s551 = sadd.s32 %s549, %s550
          %s552 = smul.addr %s551, 8
          %s553 = scalar_lea.vmem %s3, %s552
          // Predicated region
          $region83: #{vae_forward.9} parent=81 // pred_check
            _
          $region84: #{vae_forward.9} parent=81 // pred_check_branch
            %555 = sbr.rel (0) target = $region86
          $region85: #{vae_forward.9} parent=81 // pred_region
            // Predicated region
            $region87: #{vae_forward.9} parent=85 // pred_check
              _
            $region88: #{vae_forward.9} parent=85 // pred_check_branch
              %557 = sbr.rel (0) target = $region90
            $region89: #{vae_forward.9} parent=85 // pred_region
              loop: start=0, step=1, limit=1
              $region91: #{vae_forward.9} parent=89 // loop_pre_header
                _
              $region92: #{vae_forward.9} parent=89 // loop_header
                %s559 = sphi 0, %s563
                %p560 = scmp.ge.s32.totalorder %s559, 1
                %s564 = sphi %s544, %s544
                %s565 = sphi %s553, %s553
              $region93: #{vae_forward.9} parent=89 // loop_header_branch
                %562 = sbr.rel (%p560) target = $region97
              $region94: #{vae_forward.9} parent=89 // loop_body
                %v566 = vld [vmem:[%s564] sm:$0xff]
                %567 = vst [vmem:[%s565] sm:$0xff] %v566
                %v568 = vld [vmem:[%s564 + $0x8] sm:$0xff]
                %569 = vst [vmem:[%s565 + $0x8] sm:$0xff] %v568
                %v570 = vld [vmem:[%s564 + $0x10] sm:$0xff]
                %571 = vst [vmem:[%s565 + $0x20] sm:$0xff] %v570
                %v572 = vld [vmem:[%s564 + $0x18] sm:$0xff]
                %573 = vst [vmem:[%s565 + $0x28] sm:$0xff] %v572
              $region95: #{vae_forward.9} parent=89 // loop_footer
                %s563 = sadd.s32 1, %s559
              $region96: #{vae_forward.9} parent=89 // loop_footer_branch
                %558 = sbr.rel target = $region92
              $region97: #{vae_forward.9} parent=89 // loop_exit
                _
            $region90: #{vae_forward.9} parent=85 // pred_fallthru
              _
            // Predicated region
            $region98: #{vae_forward.9} parent=85 // pred_check
              _
            $region99: #{vae_forward.9} parent=85 // pred_check_branch
              %575 = sbr.rel target = $region101
            $region100: #{vae_forward.9} parent=85 // pred_region
              _
            $region101: #{vae_forward.9} parent=85 // pred_fallthru
              _
          $region86: #{vae_forward.9} parent=81 // pred_fallthru
            _
          %576 = vnop
        $region82: #{vae_forward.9} parent=65 // pred_fallthru
          _
      $region66: #{vae_forward.9} parent=5 // pred_fallthru
        _
      %p577 = scmp.le.s32.totalorder 2, %s9
      // Predicated region
      $region102: #{vae_forward.9} parent=5 // pred_check
        %p578 = pneg %p577
      $region103: #{vae_forward.9} parent=5 // pred_check_branch
        %580 = sbr.rel (%p578) target = $region105
      $region104: #{vae_forward.9} parent=5 // pred_region
        %s581 = ssub.s32 %s9, 2
        // Predicated region
        $region106: #{vae_forward.9} parent=104 // pred_check
          %p582 = pneg %p141
        $region107: #{vae_forward.9} parent=104 // pred_check_branch
          %584 = sbr.rel (%p582) target = $region109
        $region108: #{vae_forward.9} parent=104 // pred_region
          %s585 = sand.u32 %s126, 1
          %s586 = sand.u32 %s126, 1
          %s587 = smul.addr %s586, 32
          %s588 = scalar_lea.vmem [#allocation4], %s587
        $region109: #{vae_forward.9} parent=104 // pred_fallthru
          _
      $region105: #{vae_forward.9} parent=5 // pred_fallthru
        _
    $region6: #{vae_forward.9} parent=1 // loop_footer
      %s13 = sadd.s32 1, %s9
    $region7: #{vae_forward.9} parent=1 // loop_footer_branch
      %8 = sbr.rel target = $region3
    $region8: #{vae_forward.9} parent=1 // loop_exit
      _

// kernel: vae_forward.10
$region0: #{vae_forward.10}
  #allocation0 [shape = 'u32[]', space=smem, size = 0x4, offset = 0x4, fixed_abs, tag = 'smem constant byte address 0x4 - core index']
  #allocation1 [shape = 'u32[144,128]{1,0:T(1,128)}', space=vmem, size = 0x12000, scoped, tag = 'internal scratch']
  #allocation2 [shape = 'f32[112,128]{1,0:T(8,128)}', space=vmem, size = 0xe000, scoped, tag = 'scratch operand']
  %s0 = inlined_call_operand.vmem [shape: bf16[112,256], index: 0, kind: input, shape index: {}]
  %s1 = inlined_call_operand.vmem [shape: bf16[256,128], index: 1, kind: input, shape index: {}]
  %s2 = inlined_call_operand.vmem [shape: f32[1,128], index: 2, kind: input, shape index: {}]
  %s3 = inlined_call_operand.vmem [shape: f32[112,128], index: 3, kind: output, shape index: {}]
  %s4 = sld [smem:[#allocation0]]
  $region30: #{vae_forward.10} parent=0
    _
  %s6 = ssub.s32 1, %s4
  %s7 = scalar_select 0, %s6, %s4
  // Predicated region
  $region2: #{vae_forward.10} parent=0 // pred_check
    _
  $region3: #{vae_forward.10} parent=0 // pred_check_branch
    %9 = sbr.rel (0) target = $region5
  $region4: #{vae_forward.10} parent=0 // pred_region
    _
  $region5: #{vae_forward.10} parent=0 // pred_fallthru
    _
  // Predicated region
  $region6: #{vae_forward.10} parent=0 // pred_check
    _
  $region7: #{vae_forward.10} parent=0 // pred_check_branch
    %11 = sbr.rel (0) target = $region9
  $region8: #{vae_forward.10} parent=0 // pred_region
    _
  $region9: #{vae_forward.10} parent=0 // pred_fallthru
    _
  // Predicated region
  $region10: #{vae_forward.10} parent=0 // pred_check
    _
  $region11: #{vae_forward.10} parent=0 // pred_check_branch
    %13 = sbr.rel (0) target = $region13
  $region12: #{vae_forward.10} parent=0 // pred_region
    _
  $region13: #{vae_forward.10} parent=0 // pred_fallthru
    _
  %p15 = scmp.eq.s32.totalorder 0, 0
  // Predicated region
  $region14: #{vae_forward.10} parent=0 // pred_check
    %p16 = pneg %p15
  $region15: #{vae_forward.10} parent=0 // pred_check_branch
    %18 = sbr.rel (%p16) target = $region17
  $region16: #{vae_forward.10} parent=0 // pred_region
    %19 = vst [vmem:[#allocation2] sm:$0xff] 0.0
    %20 = vst [vmem:[#allocation2 + $0x8] sm:$0xff] 0.0
    %21 = vst [vmem:[#allocation2 + $0x10] sm:$0xff] 0.0
    %22 = vst [vmem:[#allocation2 + $0x18] sm:$0xff] 0.0
    %23 = vst [vmem:[#allocation2 + $0x20] sm:$0xff] 0.0
    %24 = vst [vmem:[#allocation2 + $0x28] sm:$0xff] 0.0
    %25 = vst [vmem:[#allocation2 + $0x30] sm:$0xff] 0.0
    %26 = vst [vmem:[#allocation2 + $0x38] sm:$0xff] 0.0
    %27 = vst [vmem:[#allocation2 + $0x40] sm:$0xff] 0.0
    %28 = vst [vmem:[#allocation2 + $0x48] sm:$0xff] 0.0
    %29 = vst [vmem:[#allocation2 + $0x50] sm:$0xff] 0.0
    %30 = vst [vmem:[#allocation2 + $0x58] sm:$0xff] 0.0
    %31 = vst [vmem:[#allocation2 + $0x60] sm:$0xff] 0.0
    %32 = vst [vmem:[#allocation2 + $0x68] sm:$0xff] 0.0
  $region17: #{vae_forward.10} parent=0 // pred_fallthru
    _
  %v33 = vld [vmem:[#allocation2] sm:$0xff]
  %v34 = vld [vmem:[#allocation2 + $0x8] sm:$0xff]
  %v35 = vld [vmem:[#allocation2 + $0x10] sm:$0xff]
  %v36 = vld [vmem:[#allocation2 + $0x18] sm:$0xff]
  %v37 = vld [vmem:[#allocation2 + $0x20] sm:$0xff]
  %v38 = vld [vmem:[#allocation2 + $0x28] sm:$0xff]
  %v39 = vld [vmem:[#allocation2 + $0x30] sm:$0xff]
  %v40 = vld [vmem:[#allocation2 + $0x38] sm:$0xff]
  %v41 = vld [vmem:[#allocation2 + $0x40] sm:$0xff]
  %v42 = vld [vmem:[#allocation2 + $0x48] sm:$0xff]
  %v43 = vld [vmem:[#allocation2 + $0x50] sm:$0xff]
  %v44 = vld [vmem:[#allocation2 + $0x58] sm:$0xff]
  %v45 = vld [vmem:[#allocation2 + $0x60] sm:$0xff]
  %v46 = vld [vmem:[#allocation2 + $0x68] sm:$0xff]
  %v47 = vld [vmem:[%s0] sm:$0xff]
  %v48 = vld [vmem:[%s0 + $0x8] sm:$0xff]
  %v49 = vld [vmem:[%s0 + $0x10] sm:$0xff]
  %v50 = vld [vmem:[%s0 + $0x18] sm:$0xff]
  %v51 = vld [vmem:[%s0 + $0x20] sm:$0xff]
  %v52 = vld [vmem:[%s0 + $0x28] sm:$0xff]
  %v53 = vld [vmem:[%s0 + $0x30] sm:$0xff]
  %v54 = vld [vmem:[%s0 + $0x38] sm:$0xff]
  %v55 = vld [vmem:[%s0 + $0x40] sm:$0xff]
  %v56 = vld [vmem:[%s0 + $0x48] sm:$0xff]
  %v57 = vld [vmem:[%s0 + $0x50] sm:$0xff]
  %v58 = vld [vmem:[%s0 + $0x58] sm:$0xff]
  %v59 = vld [vmem:[%s0 + $0x60] sm:$0xff]
  %v60 = vld [vmem:[%s0 + $0x68] sm:$0xff]
  %v61 = vld [vmem:[%s1] sm:$0xf]
  %v62 = vld [vmem:[%s1 + $0x4] sm:$0xf]
  %v63 = vld [vmem:[%s1 + $0x8] sm:$0xf]
  %v64 = vld [vmem:[%s1 + $0xc] sm:$0xf]
  %v65 = vld [vmem:[%s1 + $0x10] sm:$0xf]
  %v66 = vld [vmem:[%s1 + $0x14] sm:$0xf]
  %v67 = vld [vmem:[%s1 + $0x18] sm:$0xf]
  %v68 = vld [vmem:[%s1 + $0x1c] sm:$0xf]
  %v69 = vld [vmem:[%s1 + $0x20] sm:$0xf]
  %v70 = vld [vmem:[%s1 + $0x24] sm:$0xf]
  %v71 = vld [vmem:[%s1 + $0x28] sm:$0xf]
  %v72 = vld [vmem:[%s1 + $0x2c] sm:$0xf]
  %v73 = vld [vmem:[%s1 + $0x30] sm:$0xf]
  %v74 = vld [vmem:[%s1 + $0x34] sm:$0xf]
  %v75 = vld [vmem:[%s1 + $0x38] sm:$0xf]
  %v76 = vld [vmem:[%s1 + $0x3c] sm:$0xf]
  %v77 = vld [vmem:[%s1 + $0x40] sm:$0xf]
  %v78 = vld [vmem:[%s1 + $0x44] sm:$0xf]
  %v79 = vld [vmem:[%s1 + $0x48] sm:$0xf]
  %v80 = vld [vmem:[%s1 + $0x4c] sm:$0xf]
  %v81 = vld [vmem:[%s1 + $0x50] sm:$0xf]
  %v82 = vld [vmem:[%s1 + $0x54] sm:$0xf]
  %v83 = vld [vmem:[%s1 + $0x58] sm:$0xf]
  %v84 = vld [vmem:[%s1 + $0x5c] sm:$0xf]
  %v85 = vld [vmem:[%s1 + $0x60] sm:$0xf]
  %v86 = vld [vmem:[%s1 + $0x64] sm:$0xf]
  %v87 = vld [vmem:[%s1 + $0x68] sm:$0xf]
  %v88 = vld [vmem:[%s1 + $0x6c] sm:$0xf]
  %v89 = vld [vmem:[%s1 + $0x70] sm:$0xf]
  %v90 = vld [vmem:[%s1 + $0x74] sm:$0xf]
  %v91 = vld [vmem:[%s1 + $0x78] sm:$0xf]
  %v92 = vld [vmem:[%s1 + $0x7c] sm:$0xf]
  %v107 = vunpack.c.l.b16 %v47
  %v108 = vunpack.c.h.b16 %v47
  %v109 = vunpack.c.l.b16 %v48
  %v110 = vunpack.c.h.b16 %v48
  %v111 = vunpack.c.l.b16 %v49
  %v112 = vunpack.c.h.b16 %v49
  %v113 = vunpack.c.l.b16 %v50
  %v114 = vunpack.c.h.b16 %v50
  %v115 = vunpack.c.l.b16 %v51
  %v116 = vunpack.c.h.b16 %v51
  %v117 = vunpack.c.l.b16 %v52
  %v118 = vunpack.c.h.b16 %v52
  %v119 = vunpack.c.l.b16 %v53
  %v120 = vunpack.c.h.b16 %v53
  %v121 = vunpack.c.l.b16 %v54
  %v122 = vunpack.c.h.b16 %v54
  %v123 = vunpack.c.l.b16 %v55
  %v124 = vunpack.c.h.b16 %v55
  %v125 = vunpack.c.l.b16 %v56
  %v126 = vunpack.c.h.b16 %v56
  %v127 = vunpack.c.l.b16 %v57
  %v128 = vunpack.c.h.b16 %v57
  %v129 = vunpack.c.l.b16 %v58
  %v130 = vunpack.c.h.b16 %v58
  %v131 = vunpack.c.l.b16 %v59
  %v132 = vunpack.c.h.b16 %v59
  %v133 = vunpack.c.l.b16 %v60
  %v134 = vunpack.c.h.b16 %v60
  %v135 = vpack.c.b16 %v109, %v107
  %v136 = vpack.c.b16 %v110, %v108
  %v137 = vpack.c.b16 %v113, %v111
  %v138 = vpack.c.b16 %v114, %v112
  %v139 = vpack.c.b16 %v117, %v115
  %v140 = vpack.c.b16 %v118, %v116
  %v141 = vpack.c.b16 %v121, %v119
  %v142 = vpack.c.b16 %v122, %v120
  %v143 = vpack.c.b16 %v125, %v123
  %v144 = vpack.c.b16 %v126, %v124
  %v145 = vpack.c.b16 %v129, %v127
  %v146 = vpack.c.b16 %v130, %v128
  %v147 = vpack.c.b16 %v133, %v131
  %v148 = vpack.c.b16 %v134, %v132
  %v195 = vunpack.c.l.b16 %v61
  %v196 = vunpack.c.l.b16 %v62
  %v197 = vunpack.c.l.b16 %v63
  %v198 = vunpack.c.l.b16 %v64
  %v199 = vunpack.c.l.b16 %v65
  %v200 = vunpack.c.l.b16 %v66
  %v201 = vunpack.c.l.b16 %v67
  %v202 = vunpack.c.l.b16 %v68
  %v203 = vunpack.c.l.b16 %v69
  %v204 = vunpack.c.l.b16 %v70
  %v205 = vunpack.c.l.b16 %v71
  %v206 = vunpack.c.l.b16 %v72
  %v207 = vunpack.c.l.b16 %v73
  %v208 = vunpack.c.l.b16 %v74
  %v209 = vunpack.c.l.b16 %v75
  %v210 = vunpack.c.l.b16 %v76
  %v211 = vunpack.c.l.b16 %v77
  %v212 = vunpack.c.l.b16 %v78
  %v213 = vunpack.c.l.b16 %v79
  %v214 = vunpack.c.l.b16 %v80
  %v215 = vunpack.c.l.b16 %v81
  %v216 = vunpack.c.l.b16 %v82
  %v217 = vunpack.c.l.b16 %v83
  %v218 = vunpack.c.l.b16 %v84
  %v219 = vunpack.c.l.b16 %v85
  %v220 = vunpack.c.l.b16 %v86
  %v221 = vunpack.c.l.b16 %v87
  %v222 = vunpack.c.l.b16 %v88
  %v223 = vunpack.c.l.b16 %v89
  %v224 = vunpack.c.l.b16 %v90
  %v225 = vunpack.c.l.b16 %v91
  %v226 = vunpack.c.l.b16 %v92
  %v227 = vpack.c.b16 %v196, %v195
  %v228 = vpack.c.b16 %v198, %v197
  %v229 = vpack.c.b16 %v200, %v199
  %v230 = vpack.c.b16 %v202, %v201
  %v231 = vpack.c.b16 %v204, %v203
  %v232 = vpack.c.b16 %v206, %v205
  %v233 = vpack.c.b16 %v208, %v207
  %v234 = vpack.c.b16 %v210, %v209
  %v235 = vpack.c.b16 %v212, %v211
  %v236 = vpack.c.b16 %v214, %v213
  %v237 = vpack.c.b16 %v216, %v215
  %v238 = vpack.c.b16 %v218, %v217
  %v239 = vpack.c.b16 %v220, %v219
  %v240 = vpack.c.b16 %v222, %v221
  %v241 = vpack.c.b16 %v224, %v223
  %v242 = vpack.c.b16 %v226, %v225
  %259 = vmatprep.subr.bf16.mxu0 0
  %260 = vmatpush1.bf16.msra.mxu0 %v227
  %261 = vmatprep.subr.bf16.mxu0 0
  %262 = vmatpush1.bf16.msra.mxu0 %v228
  %263 = vmatprep.subr.bf16.mxu0 0
  %264 = vmatpush1.bf16.msra.mxu0 %v229
  %265 = vmatprep.subr.bf16.mxu0 0
  %266 = vmatpush1.bf16.msra.mxu0 %v230
  %267 = vmatprep.subr.bf16.mxu0 0
  %268 = vmatpush1.bf16.msra.mxu0 %v231
  %269 = vmatprep.subr.bf16.mxu0 0
  %270 = vmatpush1.bf16.msra.mxu0 %v232
  %271 = vmatprep.subr.bf16.mxu0 0
  %272 = vmatpush1.bf16.msra.mxu0 %v233
  %273 = vmatprep.subr.bf16.mxu0 0
  %274 = vmatpush1.bf16.msra.mxu0 %v234
  %275 = vmatprep.subr.bf16.mxu0 0
  %276 = vmatpush1.bf16.msra.mxu0 %v235
  %277 = vmatprep.subr.bf16.mxu0 0
  %278 = vmatpush1.bf16.msra.mxu0 %v236
  %279 = vmatprep.subr.bf16.mxu0 0
  %280 = vmatpush1.bf16.msra.mxu0 %v237
  %281 = vmatprep.subr.bf16.mxu0 0
  %282 = vmatpush1.bf16.msra.mxu0 %v238
  %283 = vmatprep.subr.bf16.mxu0 0
  %284 = vmatpush1.bf16.msra.mxu0 %v239
  %285 = vmatprep.subr.bf16.mxu0 0
  %286 = vmatpush1.bf16.msra.mxu0 %v240
  %287 = vmatprep.subr.bf16.mxu0 0
  %288 = vmatpush1.bf16.msra.mxu0 %v241
  %289 = vmatprep.subr.bf16.mxu0 0
  %290 = vmatpush1.bf16.msra.mxu0 %v242
  %291 = vmatprep.mubr.bf16.mxu0 %v136
  %292 = vmatmul.mubr.bf16.gmra.mrb[0].mxu0 %v135
  %v293 = vpop.f32.mrb[0].mxu0
  %v294 = vadd.f32 0.0, %v293
  %v295 = vpop.f32.mrb[0].mxu0
  %v296 = vpop.f32.mrb[0].mxu0
  %v297 = vadd.f32 0.0, %v296
  %v298 = vpop.f32.mrb[0].mxu0
  %299 = vmatprep.mubr.bf16.mxu0 %v138
  %300 = vmatmul.mubr.bf16.gmra.mrb[0].mxu0 %v137
  %v301 = vpop.f32.mrb[0].mxu0
  %v302 = vadd.f32 0.0, %v301
  %v303 = vpop.f32.mrb[0].mxu0
  %v304 = vpop.f32.mrb[0].mxu0
  %v305 = vadd.f32 0.0, %v304
  %v306 = vpop.f32.mrb[0].mxu0
  %307 = vmatprep.mubr.bf16.mxu0 %v140
  %308 = vmatmul.mubr.bf16.gmra.mrb[0].mxu0 %v139
  %v309 = vpop.f32.mrb[0].mxu0
  %v310 = vadd.f32 0.0, %v309
  %v311 = vpop.f32.mrb[0].mxu0
  %v312 = vpop.f32.mrb[0].mxu0
  %v313 = vadd.f32 0.0, %v312
  %v314 = vpop.f32.mrb[0].mxu0
  %315 = vmatprep.mubr.bf16.mxu0 %v142
  %316 = vmatmul.mubr.bf16.gmra.mrb[0].mxu0 %v141
  %v317 = vpop.f32.mrb[0].mxu0
  %v318 = vadd.f32 0.0, %v317
  %v319 = vpop.f32.mrb[0].mxu0
  %v320 = vpop.f32.mrb[0].mxu0
  %v321 = vadd.f32 0.0, %v320
  %v322 = vpop.f32.mrb[0].mxu0
  %323 = vmatprep.mubr.bf16.mxu0 %v144
  %324 = vmatmul.mubr.bf16.gmra.mrb[0].mxu0 %v143
  %v325 = vpop.f32.mrb[0].mxu0
  %v326 = vadd.f32 0.0, %v325
  %v327 = vpop.f32.mrb[0].mxu0
  %v328 = vpop.f32.mrb[0].mxu0
  %v329 = vadd.f32 0.0, %v328
  %v330 = vpop.f32.mrb[0].mxu0
  %331 = vmatprep.mubr.bf16.mxu0 %v146
  %332 = vmatmul.mubr.bf16.gmra.mrb[0].mxu0 %v145
  %v333 = vpop.f32.mrb[0].mxu0
  %v334 = vadd.f32 0.0, %v333
  %v335 = vpop.f32.mrb[0].mxu0
  %v336 = vpop.f32.mrb[0].mxu0
  %v337 = vadd.f32 0.0, %v336
  %v338 = vpop.f32.mrb[0].mxu0
  %339 = vmatprep.mubr.bf16.mxu0 %v148
  %340 = vmatmul.mubr.bf16.gmra.mrb[0].mxu0 %v147
  %v341 = vpop.f32.mrb[0].mxu0
  %v342 = vadd.f32 0.0, %v341
  %v343 = vpop.f32.mrb[0].mxu0
  %v344 = vpop.f32.mrb[0].mxu0
  %v345 = vadd.f32 0.0, %v344
  %v346 = vpop.f32.mrb[0].mxu0
  %347 = vdwg.mxu0
  %v348 = vadd.f32 %v33, %v294
  %v349 = vadd.f32 %v34, %v297
  %v350 = vadd.f32 %v35, %v302
  %v351 = vadd.f32 %v36, %v305
  %v352 = vadd.f32 %v37, %v310
  %v353 = vadd.f32 %v38, %v313
  %v354 = vadd.f32 %v39, %v318
  %v355 = vadd.f32 %v40, %v321
  %v356 = vadd.f32 %v41, %v326
  %v357 = vadd.f32 %v42, %v329
  %v358 = vadd.f32 %v43, %v334
  %v359 = vadd.f32 %v44, %v337
  %v360 = vadd.f32 %v45, %v342
  %v361 = vadd.f32 %v46, %v345
  %362 = vst [vmem:[#allocation2] sm:$0xff] %v348
  %363 = vst [vmem:[#allocation2 + $0x8] sm:$0xff] %v349
  %364 = vst [vmem:[#allocation2 + $0x10] sm:$0xff] %v350
  %365 = vst [vmem:[#allocation2 + $0x18] sm:$0xff] %v351
  %366 = vst [vmem:[#allocation2 + $0x20] sm:$0xff] %v352
  %367 = vst [vmem:[#allocation2 + $0x28] sm:$0xff] %v353
  %368 = vst [vmem:[#allocation2 + $0x30] sm:$0xff] %v354
  %369 = vst [vmem:[#allocation2 + $0x38] sm:$0xff] %v355
  %370 = vst [vmem:[#allocation2 + $0x40] sm:$0xff] %v356
  %371 = vst [vmem:[#allocation2 + $0x48] sm:$0xff] %v357
  %372 = vst [vmem:[#allocation2 + $0x50] sm:$0xff] %v358
  %373 = vst [vmem:[#allocation2 + $0x58] sm:$0xff] %v359
  %374 = vst [vmem:[#allocation2 + $0x60] sm:$0xff] %v360
  %375 = vst [vmem:[#allocation2 + $0x68] sm:$0xff] %v361
  // Predicated region
  $region18: #{vae_forward.10} parent=0 // pred_check
    %p376 = pneg %p15
  $region19: #{vae_forward.10} parent=0 // pred_check_branch
    %378 = sbr.rel (%p376) target = $region21
  $region20: #{vae_forward.10} parent=0 // pred_region
    %v379 = vld [vmem:[#allocation2] sm:$0xff]
    %v380 = vld [vmem:[#allocation2 + $0x8] sm:$0xff]
    %v381 = vld [vmem:[#allocation2 + $0x10] sm:$0xff]
    %v382 = vld [vmem:[#allocation2 + $0x18] sm:$0xff]
    %v383 = vld [vmem:[#allocation2 + $0x20] sm:$0xff]
    %v384 = vld [vmem:[#allocation2 + $0x28] sm:$0xff]
    %v385 = vld [vmem:[#allocation2 + $0x30] sm:$0xff]
    %v386 = vld [vmem:[#allocation2 + $0x38] sm:$0xff]
    %v387 = vld [vmem:[#allocation2 + $0x40] sm:$0xff]
    %v388 = vld [vmem:[#allocation2 + $0x48] sm:$0xff]
    %v389 = vld [vmem:[#allocation2 + $0x50] sm:$0xff]
    %v390 = vld [vmem:[#allocation2 + $0x58] sm:$0xff]
    %v391 = vld [vmem:[#allocation2 + $0x60] sm:$0xff]
    %v392 = vld [vmem:[#allocation2 + $0x68] sm:$0xff]
    %v393 = vld [vmem:[%s2] sm:$0x1]
    %v395 = vlaneseq
    %v396 = vshrl.u32 %v395, 7
    %v397 = vsub.s32 0, %v396
    %v398 = vrot.slane %v393, %v397
    %v400 = vadd.f32 %v379, %v398
    %v401 = vadd.f32 %v380, %v398
    %v402 = vadd.f32 %v381, %v398
    %v403 = vadd.f32 %v382, %v398
    %v404 = vadd.f32 %v383, %v398
    %v405 = vadd.f32 %v384, %v398
    %v406 = vadd.f32 %v385, %v398
    %v407 = vadd.f32 %v386, %v398
    %v408 = vadd.f32 %v387, %v398
    %v409 = vadd.f32 %v388, %v398
    %v410 = vadd.f32 %v389, %v398
    %v411 = vadd.f32 %v390, %v398
    %v412 = vadd.f32 %v391, %v398
    %v413 = vadd.f32 %v392, %v398
    %v414 = vmax.f32 %v400, 0.0
    %v415 = vmax.f32 %v401, 0.0
    %v416 = vmax.f32 %v402, 0.0
    %v417 = vmax.f32 %v403, 0.0
    %v418 = vmax.f32 %v404, 0.0
    %v419 = vmax.f32 %v405, 0.0
    %v420 = vmax.f32 %v406, 0.0
    %v421 = vmax.f32 %v407, 0.0
    %v422 = vmax.f32 %v408, 0.0
    %v423 = vmax.f32 %v409, 0.0
    %v424 = vmax.f32 %v410, 0.0
    %v425 = vmax.f32 %v411, 0.0
    %v426 = vmax.f32 %v412, 0.0
    %v427 = vmax.f32 %v413, 0.0
    %428 = vst [vmem:[%s3] sm:$0xff] %v414
    %429 = vst [vmem:[%s3 + $0x8] sm:$0xff] %v415
    %430 = vst [vmem:[%s3 + $0x10] sm:$0xff] %v416
    %431 = vst [vmem:[%s3 + $0x18] sm:$0xff] %v417
    %432 = vst [vmem:[%s3 + $0x20] sm:$0xff] %v418
    %433 = vst [vmem:[%s3 + $0x28] sm:$0xff] %v419
    %434 = vst [vmem:[%s3 + $0x30] sm:$0xff] %v420
    %435 = vst [vmem:[%s3 + $0x38] sm:$0xff] %v421
    %436 = vst [vmem:[%s3 + $0x40] sm:$0xff] %v422
    %437 = vst [vmem:[%s3 + $0x48] sm:$0xff] %v423
    %438 = vst [vmem:[%s3 + $0x50] sm:$0xff] %v424
    %439 = vst [vmem:[%s3 + $0x58] sm:$0xff] %v425
    %440 = vst [vmem:[%s3 + $0x60] sm:$0xff] %v426
    %441 = vst [vmem:[%s3 + $0x68] sm:$0xff] %v427
  $region21: #{vae_forward.10} parent=0 // pred_fallthru
    _
  // Predicated region
  $region22: #{vae_forward.10} parent=0 // pred_check
    _
  $region23: #{vae_forward.10} parent=0 // pred_check_branch
    %443 = sbr.rel (0) target = $region25
  $region24: #{vae_forward.10} parent=0 // pred_region
    _
  $region25: #{vae_forward.10} parent=0 // pred_fallthru
    _
  // Predicated region
  $region26: #{vae_forward.10} parent=0 // pred_check
    _
  $region27: #{vae_forward.10} parent=0 // pred_check_branch
    %445 = sbr.rel (0) target = $region29
  $region28: #{vae_forward.10} parent=0 // pred_region
    _
  $region29: #{vae_forward.10} parent=0 // pred_fallthru
    _

// kernel: vae_forward.11
$region0: #{vae_forward.11}
  #allocation0 [shape = 'u32[]', space=smem, size = 0x4, offset = 0x4, fixed_abs, tag = 'smem constant byte address 0x4 - core index']
  #allocation1 [shape = 'u32[144,128]{1,0:T(1,128)}', space=vmem, size = 0x12000, scoped, tag = 'internal scratch']
  #allocation2 [shape = 'f32[256,128]{1,0:T(8,128)}', space=vmem, size = 0x20000, scoped, tag = 'scratch operand']
  %s0 = inlined_call_operand.vmem [shape: bf16[512,128], index: 0, kind: input, shape index: {}]
  %s1 = inlined_call_operand.vmem [shape: bf16[128,128], index: 1, kind: input, shape index: {}]
  %s2 = inlined_call_operand.vmem [shape: f32[1,128], index: 2, kind: input, shape index: {}]
  %s3 = inlined_call_operand.vmem [shape: f32[512,128], index: 3, kind: output, shape index: {}]
  %s4 = sld [smem:[#allocation0]]
  $region53: #{vae_forward.11} parent=0
    _
  %s6 = ssub.s32 1, %s4
  %s7 = scalar_select 0, %s6, %s4
  loop: start=0, step=1, limit=4
  $region2: #{vae_forward.11} parent=0 // loop_pre_header
    _
  $region3: #{vae_forward.11} parent=0 // loop_header
    %s9 = sphi 0, %s13
    %p10 = scmp.ge.s32.totalorder %s9, 4
    %s16 = sphi 0, %s35
    %s17 = sphi 0, %s31
    %s18 = sphi 0, %s27
    %s19 = sphi 0, %s16
    %s20 = sphi 0, %s17
    %s21 = sphi 0, %s18
    %s22 = sphi 0, %s19
    %s23 = sphi 0, %s20
    %s24 = sphi 0, %s21
    %s40 = sphi 0, %s42
    %s43 = sphi 0, %s40
    %s44 = sphi 0, %s43
    %s60 = sphi 0, %s44
    %s68 = sphi 0, %s70
    %s71 = sphi 0, %s68
    %s72 = sphi 0, %s71
    %s88 = sphi 0, %s72
    %s94 = sphi 0, %s96
    %s97 = sphi 0, %s94
    %s98 = sphi 0, %s97
    %s114 = sphi 0, %s98
    %s122 = sphi 0, %s124
    %s125 = sphi 0, %s122
    %s126 = sphi 0, %s125
    %s142 = sphi 0, %s126
  $region4: #{vae_forward.11} parent=0 // loop_header_branch
    %12 = sbr.rel (%p10) target = $region8
  $region5: #{vae_forward.11} parent=0 // loop_body
    %s14 = ssub.s32 %s9, 1
    %s15 = ssub.s32 %s9, 2
    %s25 = sadd.s32 1, %s18
    %p26 = scmp.ge.s32.totalorder %s25, 1
    %s27 = scalar_select %p26, 0, %s25
    %s28 = sadd.s32 1, %s17
    %s29 = scalar_select %p26, %s28, %s17
    %p30 = scmp.ge.s32.totalorder %s29, 1
    %s31 = scalar_select %p30, 0, %s29
    %s32 = sadd.s32 1, %s16
    %s33 = scalar_select %p30, %s32, %s16
    %p34 = scmp.ge.s32.totalorder %s33, 2
    %s35 = scalar_select %p34, 0, %s33
    %s36 = ssub.s32 %s16, %s35
    %s37 = ssub.s32 %s18, %s27
    %s38 = sor.u32 %s36, %s37
    %p39 = scmp.eq.s32.totalorder %s38, 0
    %s41 = sadd.s32 %s40, 1
    %s42 = scalar_select %p39, %s40, %s41
    %p45 = pneg %p39
    %p46 = scmp.eq.s32.totalorder %s9, 1
    %p47 = por %p45, %p46
    %p48 = scmp.ne.s32.totalorder %s40, %s43
    %p49 = scmp.eq.s32.totalorder %s9, 0
    %p50 = por %p48, %p49
    %p51 = scmp.ne.s32.totalorder %s40, %s43
    %p52 = scmp.eq.s32.totalorder %s14, 1
    %p53 = por %p51, %p52
    %p54 = scmp.ne.s32.totalorder %s43, %s44
    %p55 = scmp.eq.s32.totalorder %s14, 0
    %p56 = por %p54, %p55
    %p57 = scmp.ne.s32.totalorder %s43, %s44
    %p58 = scmp.eq.s32.totalorder %s15, 1
    %p59 = por %p57, %p58
    %p61 = scmp.ne.s32.totalorder %s44, %s60
    %p62 = scmp.eq.s32.totalorder %s15, 0
    %p63 = por %p61, %p62
    %s64 = ssub.s32 %s18, %s27
    %s65 = ssub.s32 %s17, %s31
    %s66 = sor.u32 %s64, %s65
    %p67 = scmp.eq.s32.totalorder %s66, 0
    %s69 = sadd.s32 %s68, 1
    %s70 = scalar_select %p67, %s68, %s69
    %p73 = pneg %p67
    %p74 = scmp.eq.s32.totalorder %s9, 1
    %p75 = por %p73, %p74
    %p76 = scmp.ne.s32.totalorder %s68, %s71
    %p77 = scmp.eq.s32.totalorder %s9, 0
    %p78 = por %p76, %p77
    %p79 = scmp.ne.s32.totalorder %s68, %s71
    %p80 = scmp.eq.s32.totalorder %s14, 1
    %p81 = por %p79, %p80
    %p82 = scmp.ne.s32.totalorder %s71, %s72
    %p83 = scmp.eq.s32.totalorder %s14, 0
    %p84 = por %p82, %p83
    %p85 = scmp.ne.s32.totalorder %s71, %s72
    %p86 = scmp.eq.s32.totalorder %s15, 1
    %p87 = por %p85, %p86
    %p89 = scmp.ne.s32.totalorder %s72, %s88
    %p90 = scmp.eq.s32.totalorder %s15, 0
    %p91 = por %p89, %p90
    %s92 = ssub.s32 %s17, %s31
    %p93 = scmp.eq.s32.totalorder %s92, 0
    %s95 = sadd.s32 %s94, 1
    %s96 = scalar_select %p93, %s94, %s95
    %p99 = pneg %p93
    %p100 = scmp.eq.s32.totalorder %s9, 1
    %p101 = por %p99, %p100
    %p102 = scmp.ne.s32.totalorder %s94, %s97
    %p103 = scmp.eq.s32.totalorder %s9, 0
    %p104 = por %p102, %p103
    %p105 = scmp.ne.s32.totalorder %s94, %s97
    %p106 = scmp.eq.s32.totalorder %s14, 1
    %p107 = por %p105, %p106
    %p108 = scmp.ne.s32.totalorder %s97, %s98
    %p109 = scmp.eq.s32.totalorder %s14, 0
    %p110 = por %p108, %p109
    %p111 = scmp.ne.s32.totalorder %s97, %s98
    %p112 = scmp.eq.s32.totalorder %s15, 1
    %p113 = por %p111, %p112
    %p115 = scmp.ne.s32.totalorder %s98, %s114
    %p116 = scmp.eq.s32.totalorder %s15, 0
    %p117 = por %p115, %p116
    %s118 = ssub.s32 %s16, %s35
    %s119 = ssub.s32 %s17, %s31
    %s120 = sor.u32 %s118, %s119
    %p121 = scmp.eq.s32.totalorder %s120, 0
    %s123 = sadd.s32 %s122, 1
    %s124 = scalar_select %p121, %s122, %s123
    %p127 = pneg %p121
    %p128 = scmp.eq.s32.totalorder %s9, 1
    %p129 = por %p127, %p128
    %p130 = scmp.ne.s32.totalorder %s122, %s125
    %p131 = scmp.eq.s32.totalorder %s9, 0
    %p132 = por %p130, %p131
    %p133 = scmp.ne.s32.totalorder %s122, %s125
    %p134 = scmp.eq.s32.totalorder %s14, 1
    %p135 = por %p133, %p134
    %p136 = scmp.ne.s32.totalorder %s125, %s126
    %p137 = scmp.eq.s32.totalorder %s14, 0
    %p138 = por %p136, %p137
    %p139 = scmp.ne.s32.totalorder %s125, %s126
    %p140 = scmp.eq.s32.totalorder %s15, 1
    %p141 = por %p139, %p140
    %p143 = scmp.ne.s32.totalorder %s126, %s142
    %p144 = scmp.eq.s32.totalorder %s15, 0
    %p145 = por %p143, %p144
    %p146 = scmp.le.s32.totalorder 1, %s9
    %p147 = scmp.lt.s32.totalorder %s9, 3
    %p148 = pnand %p146, %p147
    %p149 = pneg %p148
    // Predicated region
    $region9: #{vae_forward.11} parent=5 // pred_check
      _
    $region10: #{vae_forward.11} parent=5 // pred_check_branch
      %151 = sbr.rel (%p148) target = $region12
    $region11: #{vae_forward.11} parent=5 // pred_region
      %s152 = ssub.s32 %s9, 1
      // Predicated region
      $region13: #{vae_forward.11} parent=11 // pred_check
        %p153 = pneg %p84
      $region14: #{vae_forward.11} parent=11 // pred_check_branch
        %155 = sbr.rel (%p153) target = $region16
      $region15: #{vae_forward.11} parent=11 // pred_region
        %s156 = smul.u32 16, %s21
        %p157 = scmp.lt.s32.totalorder %s156, 15
        %s158 = scalar_select %p157, %s156, 15
        %p159 = scmp.lt.s32.totalorder %s20, 0
        %s160 = scalar_select %p159, %s20, 0
        %s161 = sadd.s32 %s160, %s158
        %s162 = smul.addr %s161, 4
        %s163 = scalar_lea.vmem %s1, %s162
        %s164 = smul.u32 16, %s21
      $region16: #{vae_forward.11} parent=11 // pred_fallthru
        _
      // Predicated region
      $region17: #{vae_forward.11} parent=11 // pred_check
        %p165 = pneg %p110
      $region18: #{vae_forward.11} parent=11 // pred_check_branch
        %167 = sbr.rel (%p165) target = $region20
      $region19: #{vae_forward.11} parent=11 // pred_region
        %p168 = scmp.lt.s32.totalorder %s20, 0
        %s169 = scalar_select %p168, %s20, 0
        %s170 = scalar_lea.vmem %s2, %s169
      $region20: #{vae_forward.11} parent=11 // pred_fallthru
        _
    $region12: #{vae_forward.11} parent=5 // pred_fallthru
      _
    %p171 = scmp.lt.s32.totalorder %s9, 2
    // Predicated region
    $region21: #{vae_forward.11} parent=5 // pred_check
      %p172 = pneg %p171
    $region22: #{vae_forward.11} parent=5 // pred_check_branch
      %174 = sbr.rel (%p172) target = $region24
    $region23: #{vae_forward.11} parent=5 // pred_region
      // Predicated region
      $region25: #{vae_forward.11} parent=23 // pred_check
        %p175 = pneg %p50
      $region26: #{vae_forward.11} parent=23 // pred_check_branch
        %177 = sbr.rel (%p175) target = $region28
      $region27: #{vae_forward.11} parent=23 // pred_region
        %s178 = smul.u32 32, %s16
        %p179 = scmp.lt.s32.totalorder %s178, 63
        %s180 = scalar_select %p179, %s178, 63
        %p181 = scmp.lt.s32.totalorder %s18, 0
        %s182 = scalar_select %p181, %s18, 0
        %s183 = sadd.s32 %s182, %s180
        %s184 = smul.addr %s183, 4
        %s185 = scalar_lea.vmem %s0, %s184
        %s186 = smul.u32 32, %s16
      $region28: #{vae_forward.11} parent=23 // pred_fallthru
        _
    $region24: #{vae_forward.11} parent=5 // pred_fallthru
      _
    %p187 = scmp.le.s32.totalorder 1, %s9
    %p188 = scmp.lt.s32.totalorder %s9, 3
    %p189 = pnand %p187, %p188
    %p190 = pneg %p189
    // Predicated region
    $region29: #{vae_forward.11} parent=5 // pred_check
      _
    $region30: #{vae_forward.11} parent=5 // pred_check_branch
      %192 = sbr.rel (%p189) target = $region32
    $region31: #{vae_forward.11} parent=5 // pred_region
      %s193 = ssub.s32 %s9, 1
      %s194 = smul.u32 32, %s19
      %p195 = scmp.lt.s32.totalorder %s194, 63
      %s196 = scalar_select %p195, %s194, 63
      %p197 = scmp.lt.s32.totalorder %s21, 0
      %s198 = scalar_select %p197, %s21, 0
      %s199 = sadd.s32 %s198, %s196
      %s200 = smul.addr %s199, 4
      %s201 = scalar_lea.vmem %s0, %s200
      %p202 = pneg %p56
      %p203 = pneg %p53
      %s204 = smul.u32 16, %s21
      %p205 = scmp.lt.s32.totalorder %s204, 15
      %s206 = scalar_select %p205, %s204, 15
      %p207 = scmp.lt.s32.totalorder %s20, 0
      %s208 = scalar_select %p207, %s20, 0
      %s209 = sadd.s32 %s208, %s206
      %s210 = smul.addr %s209, 4
      %s211 = scalar_lea.vmem %s1, %s210
      %p212 = pneg %p84
      %p213 = pneg %p81
      %p214 = scmp.lt.s32.totalorder %s20, 0
      %s215 = scalar_select %p214, %s20, 0
      %s216 = scalar_lea.vmem %s2, %s215
      %p217 = pneg %p110
      %p218 = pneg %p107
      %p219 = pneg %p138
      %p220 = pneg %p135
      %s221 = smul.u32 32, %s19
      %p222 = scmp.lt.s32.totalorder %s221, 63
      %s223 = scalar_select %p222, %s221, 63
      %p224 = scmp.lt.s32.totalorder %s20, 0
      %s225 = scalar_select %p224, %s20, 0
      %s226 = sadd.s32 %s225, %s223
      %s227 = smul.addr %s226, 8
      %s228 = scalar_lea.vmem %s3, %s227
      %s229 = smul.u32 32, %s19
      %p230 = scmp.lt.s32.totalorder %s229, 63
      %s231 = scalar_select %p230, %s229, 63
      %p232 = scmp.lt.s32.totalorder %s21, 0
      %s233 = scalar_select %p232, %s21, 0
      %s234 = sadd.s32 %s233, %s231
      %s235 = smul.addr %s234, 4
      %s236 = scalar_lea.vmem %s0, %s235
      %s237 = smul.u32 32, %s19
      %s238 = smul.u32 16, %s21
      %p239 = scmp.lt.s32.totalorder %s238, 15
      %s240 = scalar_select %p239, %s238, 15
      %p241 = scmp.lt.s32.totalorder %s20, 0
      %s242 = scalar_select %p241, %s20, 0
      %s243 = sadd.s32 %s242, %s240
      %s244 = smul.addr %s243, 4
      %s245 = scalar_lea.vmem %s1, %s244
      %s246 = smul.u32 16, %s21
      %p247 = scmp.lt.s32.totalorder %s20, 0
      %s248 = scalar_select %p247, %s20, 0
      %s249 = scalar_lea.vmem %s2, %s248
      %s250 = smul.u32 32, %s19
      %p251 = scmp.lt.s32.totalorder %s250, 63
      %s252 = scalar_select %p251, %s250, 63
      %p253 = scmp.lt.s32.totalorder %s20, 0
      %s254 = scalar_select %p253, %s20, 0
      %s255 = sadd.s32 %s254, %s252
      %s256 = smul.addr %s255, 8
      %s257 = scalar_lea.vmem %s3, %s256
      %s258 = smul.u32 32, %s19
      %p260 = scmp.eq.s32.totalorder %s21, 0
      // Predicated region
      $region33: #{vae_forward.11} parent=31 // pred_check
        %p261 = pneg %p260
      $region34: #{vae_forward.11} parent=31 // pred_check_branch
        %263 = sbr.rel (%p261) target = $region36
      $region35: #{vae_forward.11} parent=31 // pred_region
        %264 = vst [vmem:[#allocation2] sm:$0xff] 0.0
        %265 = vst [vmem:[#allocation2 + $0x8] sm:$0xff] 0.0
        %266 = vst [vmem:[#allocation2 + $0x10] sm:$0xff] 0.0
        %267 = vst [vmem:[#allocation2 + $0x18] sm:$0xff] 0.0
        %268 = vst [vmem:[#allocation2 + $0x20] sm:$0xff] 0.0
        %269 = vst [vmem:[#allocation2 + $0x28] sm:$0xff] 0.0
        %270 = vst [vmem:[#allocation2 + $0x30] sm:$0xff] 0.0
        %271 = vst [vmem:[#allocation2 + $0x38] sm:$0xff] 0.0
        %272 = vst [vmem:[#allocation2 + $0x40] sm:$0xff] 0.0
        %273 = vst [vmem:[#allocation2 + $0x48] sm:$0xff] 0.0
        %274 = vst [vmem:[#allocation2 + $0x50] sm:$0xff] 0.0
        %275 = vst [vmem:[#allocation2 + $0x58] sm:$0xff] 0.0
        %276 = vst [vmem:[#allocation2 + $0x60] sm:$0xff] 0.0
        %277 = vst [vmem:[#allocation2 + $0x68] sm:$0xff] 0.0
        %278 = vst [vmem:[#allocation2 + $0x70] sm:$0xff] 0.0
        %279 = vst [vmem:[#allocation2 + $0x78] sm:$0xff] 0.0
        %280 = vst [vmem:[#allocation2 + $0x80] sm:$0xff] 0.0
        %281 = vst [vmem:[#allocation2 + $0x88] sm:$0xff] 0.0
        %282 = vst [vmem:[#allocation2 + $0x90] sm:$0xff] 0.0
        %283 = vst [vmem:[#allocation2 + $0x98] sm:$0xff] 0.0
        %284 = vst [vmem:[#allocation2 + $0xa0] sm:$0xff] 0.0
        %285 = vst [vmem:[#allocation2 + $0xa8] sm:$0xff] 0.0
        %286 = vst [vmem:[#allocation2 + $0xb0] sm:$0xff] 0.0
        %287 = vst [vmem:[#allocation2 + $0xb8] sm:$0xff] 0.0
        %288 = vst [vmem:[#allocation2 + $0xc0] sm:$0xff] 0.0
        %289 = vst [vmem:[#allocation2 + $0xc8] sm:$0xff] 0.0
        %290 = vst [vmem:[#allocation2 + $0xd0] sm:$0xff] 0.0
        %291 = vst [vmem:[#allocation2 + $0xd8] sm:$0xff] 0.0
        %292 = vst [vmem:[#allocation2 + $0xe0] sm:$0xff] 0.0
        %293 = vst [vmem:[#allocation2 + $0xe8] sm:$0xff] 0.0
        %294 = vst [vmem:[#allocation2 + $0xf0] sm:$0xff] 0.0
        %295 = vst [vmem:[#allocation2 + $0xf8] sm:$0xff] 0.0
      $region36: #{vae_forward.11} parent=31 // pred_fallthru
        _
      %v296 = vld [vmem:[#allocation2] sm:$0xff]
      %v297 = vld [vmem:[#allocation2 + $0x8] sm:$0xff]
      %v298 = vld [vmem:[#allocation2 + $0x10] sm:$0xff]
      %v299 = vld [vmem:[#allocation2 + $0x18] sm:$0xff]
      %v300 = vld [vmem:[#allocation2 + $0x20] sm:$0xff]
      %v301 = vld [vmem:[#allocation2 + $0x28] sm:$0xff]
      %v302 = vld [vmem:[#allocation2 + $0x30] sm:$0xff]
      %v303 = vld [vmem:[#allocation2 + $0x38] sm:$0xff]
      %v304 = vld [vmem:[#allocation2 + $0x40] sm:$0xff]
      %v305 = vld [vmem:[#allocation2 + $0x48] sm:$0xff]
      %v306 = vld [vmem:[#allocation2 + $0x50] sm:$0xff]
      %v307 = vld [vmem:[#allocation2 + $0x58] sm:$0xff]
      %v308 = vld [vmem:[#allocation2 + $0x60] sm:$0xff]
      %v309 = vld [vmem:[#allocation2 + $0x68] sm:$0xff]
      %v310 = vld [vmem:[#allocation2 + $0x70] sm:$0xff]
      %v311 = vld [vmem:[#allocation2 + $0x78] sm:$0xff]
      %v312 = vld [vmem:[#allocation2 + $0x80] sm:$0xff]
      %v313 = vld [vmem:[#allocation2 + $0x88] sm:$0xff]
      %v314 = vld [vmem:[#allocation2 + $0x90] sm:$0xff]
      %v315 = vld [vmem:[#allocation2 + $0x98] sm:$0xff]
      %v316 = vld [vmem:[#allocation2 + $0xa0] sm:$0xff]
      %v317 = vld [vmem:[#allocation2 + $0xa8] sm:$0xff]
      %v318 = vld [vmem:[#allocation2 + $0xb0] sm:$0xff]
      %v319 = vld [vmem:[#allocation2 + $0xb8] sm:$0xff]
      %v320 = vld [vmem:[#allocation2 + $0xc0] sm:$0xff]
      %v321 = vld [vmem:[#allocation2 + $0xc8] sm:$0xff]
      %v322 = vld [vmem:[#allocation2 + $0xd0] sm:$0xff]
      %v323 = vld [vmem:[#allocation2 + $0xd8] sm:$0xff]
      %v324 = vld [vmem:[#allocation2 + $0xe0] sm:$0xff]
      %v325 = vld [vmem:[#allocation2 + $0xe8] sm:$0xff]
      %v326 = vld [vmem:[#allocation2 + $0xf0] sm:$0xff]
      %v327 = vld [vmem:[#allocation2 + $0xf8] sm:$0xff]
      %v328 = vld [vmem:[%s236] sm:$0xf]
      %v329 = vld [vmem:[%s236 + $0x4] sm:$0xf]
      %v330 = vld [vmem:[%s236 + $0x8] sm:$0xf]
      %v331 = vld [vmem:[%s236 + $0xc] sm:$0xf]
      %v332 = vld [vmem:[%s236 + $0x10] sm:$0xf]
      %v333 = vld [vmem:[%s236 + $0x14] sm:$0xf]
      %v334 = vld [vmem:[%s236 + $0x18] sm:$0xf]
      %v335 = vld [vmem:[%s236 + $0x1c] sm:$0xf]
      %v336 = vld [vmem:[%s236 + $0x20] sm:$0xf]
      %v337 = vld [vmem:[%s236 + $0x24] sm:$0xf]
      %v338 = vld [vmem:[%s236 + $0x28] sm:$0xf]
      %v339 = vld [vmem:[%s236 + $0x2c] sm:$0xf]
      %v340 = vld [vmem:[%s236 + $0x30] sm:$0xf]
      %v341 = vld [vmem:[%s236 + $0x34] sm:$0xf]
      %v342 = vld [vmem:[%s236 + $0x38] sm:$0xf]
      %v343 = vld [vmem:[%s236 + $0x3c] sm:$0xf]
      %v344 = vld [vmem:[%s236 + $0x40] sm:$0xf]
      %v345 = vld [vmem:[%s236 + $0x44] sm:$0xf]
      %v346 = vld [vmem:[%s236 + $0x48] sm:$0xf]
      %v347 = vld [vmem:[%s236 + $0x4c] sm:$0xf]
      %v348 = vld [vmem:[%s236 + $0x50] sm:$0xf]
      %v349 = vld [vmem:[%s236 + $0x54] sm:$0xf]
      %v350 = vld [vmem:[%s236 + $0x58] sm:$0xf]
      %v351 = vld [vmem:[%s236 + $0x5c] sm:$0xf]
      %v352 = vld [vmem:[%s236 + $0x60] sm:$0xf]
      %v353 = vld [vmem:[%s236 + $0x64] sm:$0xf]
      %v354 = vld [vmem:[%s236 + $0x68] sm:$0xf]
      %v355 = vld [vmem:[%s236 + $0x6c] sm:$0xf]
      %v356 = vld [vmem:[%s236 + $0x70] sm:$0xf]
      %v357 = vld [vmem:[%s236 + $0x74] sm:$0xf]
      %v358 = vld [vmem:[%s236 + $0x78] sm:$0xf]
      %v359 = vld [vmem:[%s236 + $0x7c] sm:$0xf]
      %v360 = vld [vmem:[%s245] sm:$0xf]
      %v361 = vld [vmem:[%s245 + $0x4] sm:$0xf]
      %v362 = vld [vmem:[%s245 + $0x8] sm:$0xf]
      %v363 = vld [vmem:[%s245 + $0xc] sm:$0xf]
      %v364 = vld [vmem:[%s245 + $0x10] sm:$0xf]
      %v365 = vld [vmem:[%s245 + $0x14] sm:$0xf]
      %v366 = vld [vmem:[%s245 + $0x18] sm:$0xf]
      %v367 = vld [vmem:[%s245 + $0x1c] sm:$0xf]
      %v368 = vld [vmem:[%s245 + $0x20] sm:$0xf]
      %v369 = vld [vmem:[%s245 + $0x24] sm:$0xf]
      %v370 = vld [vmem:[%s245 + $0x28] sm:$0xf]
      %v371 = vld [vmem:[%s245 + $0x2c] sm:$0xf]
      %v372 = vld [vmem:[%s245 + $0x30] sm:$0xf]
      %v373 = vld [vmem:[%s245 + $0x34] sm:$0xf]
      %v374 = vld [vmem:[%s245 + $0x38] sm:$0xf]
      %v375 = vld [vmem:[%s245 + $0x3c] sm:$0xf]
      %v408 = vunpack.c.l.b16 %v328
      %v409 = vunpack.c.l.b16 %v329
      %v410 = vunpack.c.l.b16 %v330
      %v411 = vunpack.c.l.b16 %v331
      %v412 = vunpack.c.l.b16 %v332
      %v413 = vunpack.c.l.b16 %v333
      %v414 = vunpack.c.l.b16 %v334
      %v415 = vunpack.c.l.b16 %v335
      %v416 = vunpack.c.l.b16 %v336
      %v417 = vunpack.c.l.b16 %v337
      %v418 = vunpack.c.l.b16 %v338
      %v419 = vunpack.c.l.b16 %v339
      %v420 = vunpack.c.l.b16 %v340
      %v421 = vunpack.c.l.b16 %v341
      %v422 = vunpack.c.l.b16 %v342
      %v423 = vunpack.c.l.b16 %v343
      %v424 = vunpack.c.l.b16 %v344
      %v425 = vunpack.c.l.b16 %v345
      %v426 = vunpack.c.l.b16 %v346
      %v427 = vunpack.c.l.b16 %v347
      %v428 = vunpack.c.l.b16 %v348
      %v429 = vunpack.c.l.b16 %v349
      %v430 = vunpack.c.l.b16 %v350
      %v431 = vunpack.c.l.b16 %v351
      %v432 = vunpack.c.l.b16 %v352
      %v433 = vunpack.c.l.b16 %v353
      %v434 = vunpack.c.l.b16 %v354
      %v435 = vunpack.c.l.b16 %v355
      %v436 = vunpack.c.l.b16 %v356
      %v437 = vunpack.c.l.b16 %v357
      %v438 = vunpack.c.l.b16 %v358
      %v439 = vunpack.c.l.b16 %v359
      %v440 = vpack.c.b16 %v409, %v408
      %v441 = vpack.c.b16 %v411, %v410
      %v442 = vpack.c.b16 %v413, %v412
      %v443 = vpack.c.b16 %v415, %v414
      %v444 = vpack.c.b16 %v417, %v416
      %v445 = vpack.c.b16 %v419, %v418
      %v446 = vpack.c.b16 %v421, %v420
      %v447 = vpack.c.b16 %v423, %v422
      %v448 = vpack.c.b16 %v425, %v424
      %v449 = vpack.c.b16 %v427, %v426
      %v450 = vpack.c.b16 %v429, %v428
      %v451 = vpack.c.b16 %v431, %v430
      %v452 = vpack.c.b16 %v433, %v432
      %v453 = vpack.c.b16 %v435, %v434
      %v454 = vpack.c.b16 %v437, %v436
      %v455 = vpack.c.b16 %v439, %v438
      %v488 = vunpack.c.l.b16 %v360
      %v489 = vunpack.c.l.b16 %v361
      %v490 = vunpack.c.l.b16 %v362
      %v491 = vunpack.c.l.b16 %v363
      %v492 = vunpack.c.l.b16 %v364
      %v493 = vunpack.c.l.b16 %v365
      %v494 = vunpack.c.l.b16 %v366
      %v495 = vunpack.c.l.b16 %v367
      %v496 = vunpack.c.l.b16 %v368
      %v497 = vunpack.c.l.b16 %v369
      %v498 = vunpack.c.l.b16 %v370
      %v499 = vunpack.c.l.b16 %v371
      %v500 = vunpack.c.l.b16 %v372
      %v501 = vunpack.c.l.b16 %v373
      %v502 = vunpack.c.l.b16 %v374
      %v503 = vunpack.c.l.b16 %v375
      %v504 = vpack.c.b16 %v489, %v488
      %v505 = vpack.c.b16 %v491, %v490
      %v506 = vpack.c.b16 %v493, %v492
      %v507 = vpack.c.b16 %v495, %v494
      %v508 = vpack.c.b16 %v497, %v496
      %v509 = vpack.c.b16 %v499, %v498
      %v510 = vpack.c.b16 %v501, %v500
      %v511 = vpack.c.b16 %v503, %v502
      %520 = vmatprep.subr.bf16.mxu0 0
      %521 = vmatpush1.bf16.msra.mxu0 %v504
      %522 = vmatprep.subr.bf16.mxu0 0
      %523 = vmatpush1.bf16.msra.mxu0 %v505
      %524 = vmatprep.subr.bf16.mxu0 0
      %525 = vmatpush1.bf16.msra.mxu0 %v506
      %526 = vmatprep.subr.bf16.mxu0 0
      %527 = vmatpush1.bf16.msra.mxu0 %v507
      %528 = vmatprep.subr.bf16.mxu0 0
      %529 = vmatpush1.bf16.msra.mxu0 %v508
      %530 = vmatprep.subr.bf16.mxu0 0
      %531 = vmatpush1.bf16.msra.mxu0 %v509
      %532 = vmatprep.subr.bf16.mxu0 0
      %533 = vmatpush1.bf16.msra.mxu0 %v510
      %534 = vmatprep.subr.bf16.mxu0 0
      %535 = vmatpush1.bf16.msra.mxu0 %v511
      %536 = vmatprep.subr.bf16.mxu0 0
      %537 = vmatpush1.bf16.msra.mxu0 0
      %538 = vmatprep.subr.bf16.mxu0 0
      %539 = vmatpush1.bf16.msra.mxu0 0
      %540 = vmatprep.subr.bf16.mxu0 0
      %541 = vmatpush1.bf16.msra.mxu0 0
      %542 = vmatprep.subr.bf16.mxu0 0
      %543 = vmatpush1.bf16.msra.mxu0 0
      %544 = vmatprep.subr.bf16.mxu0 0
      %545 = vmatpush1.bf16.msra.mxu0 0
      %546 = vmatprep.subr.bf16.mxu0 0
      %547 = vmatpush1.bf16.msra.mxu0 0
      %548 = vmatprep.subr.bf16.mxu0 0
      %549 = vmatpush1.bf16.msra.mxu0 0
      %550 = vmatprep.subr.bf16.mxu0 0
      %551 = vmatpush1.bf16.msra.mxu0 0
      %552 = vmatprep.mubr.bf16.mxu0 0
      %553 = vmatmul.mubr.bf16.gmra.mrb[0].mxu0 %v440
      %v554 = vpop.f32.mrb[0].mxu0
      %v555 = vadd.f32 0.0, %v554
      %v556 = vpop.f32.mrb[0].mxu0
      %v557 = vpop.f32.mrb[0].mxu0
      %v558 = vadd.f32 0.0, %v557
      %v559 = vpop.f32.mrb[0].mxu0
      %560 = vmatprep.mubr.bf16.mxu0 0
      %561 = vmatmul.mubr.bf16.gmra.mrb[0].mxu0 %v441
      %v562 = vpop.f32.mrb[0].mxu0
      %v563 = vadd.f32 0.0, %v562
      %v564 = vpop.f32.mrb[0].mxu0
      %v565 = vpop.f32.mrb[0].mxu0
      %v566 = vadd.f32 0.0, %v565
      %v567 = vpop.f32.mrb[0].mxu0
      %568 = vmatprep.mubr.bf16.mxu0 0
      %569 = vmatmul.mubr.bf16.gmra.mrb[0].mxu0 %v442
      %v570 = vpop.f32.mrb[0].mxu0
      %v571 = vadd.f32 0.0, %v570
      %v572 = vpop.f32.mrb[0].mxu0
      %v573 = vpop.f32.mrb[0].mxu0
      %v574 = vadd.f32 0.0, %v573
      %v575 = vpop.f32.mrb[0].mxu0
      %576 = vmatprep.mubr.bf16.mxu0 0
      %577 = vmatmul.mubr.bf16.gmra.mrb[0].mxu0 %v443
      %v578 = vpop.f32.mrb[0].mxu0
      %v579 = vadd.f32 0.0, %v578
      %v580 = vpop.f32.mrb[0].mxu0
      %v581 = vpop.f32.mrb[0].mxu0
      %v582 = vadd.f32 0.0, %v581
      %v583 = vpop.f32.mrb[0].mxu0
      %584 = vmatprep.mubr.bf16.mxu0 0
      %585 = vmatmul.mubr.bf16.gmra.mrb[0].mxu0 %v444
      %v586 = vpop.f32.mrb[0].mxu0
      %v587 = vadd.f32 0.0, %v586
      %v588 = vpop.f32.mrb[0].mxu0
      %v589 = vpop.f32.mrb[0].mxu0
      %v590 = vadd.f32 0.0, %v589
      %v591 = vpop.f32.mrb[0].mxu0
      %592 = vmatprep.mubr.bf16.mxu0 0
      %593 = vmatmul.mubr.bf16.gmra.mrb[0].mxu0 %v445
      %v594 = vpop.f32.mrb[0].mxu0
      %v595 = vadd.f32 0.0, %v594
      %v596 = vpop.f32.mrb[0].mxu0
      %v597 = vpop.f32.mrb[0].mxu0
      %v598 = vadd.f32 0.0, %v597
      %v599 = vpop.f32.mrb[0].mxu0
      %600 = vmatprep.mubr.bf16.mxu0 0
      %601 = vmatmul.mubr.bf16.gmra.mrb[0].mxu0 %v446
      %v602 = vpop.f32.mrb[0].mxu0
      %v603 = vadd.f32 0.0, %v602
      %v604 = vpop.f32.mrb[0].mxu0
      %v605 = vpop.f32.mrb[0].mxu0
      %v606 = vadd.f32 0.0, %v605
      %v607 = vpop.f32.mrb[0].mxu0
      %608 = vmatprep.mubr.bf16.mxu0 0
      %609 = vmatmul.mubr.bf16.gmra.mrb[0].mxu0 %v447
      %v610 = vpop.f32.mrb[0].mxu0
      %v611 = vadd.f32 0.0, %v610
      %v612 = vpop.f32.mrb[0].mxu0
      %v613 = vpop.f32.mrb[0].mxu0
      %v614 = vadd.f32 0.0, %v613
      %v615 = vpop.f32.mrb[0].mxu0
      %616 = vmatprep.mubr.bf16.mxu0 0
      %617 = vmatmul.mubr.bf16.gmra.mrb[0].mxu0 %v448
      %v618 = vpop.f32.mrb[0].mxu0
      %v619 = vadd.f32 0.0, %v618
      %v620 = vpop.f32.mrb[0].mxu0
      %v621 = vpop.f32.mrb[0].mxu0
      %v622 = vadd.f32 0.0, %v621
      %v623 = vpop.f32.mrb[0].mxu0
      %624 = vmatprep.mubr.bf16.mxu0 0
      %625 = vmatmul.mubr.bf16.gmra.mrb[0].mxu0 %v449
      %v626 = vpop.f32.mrb[0].mxu0
      %v627 = vadd.f32 0.0, %v626
      %v628 = vpop.f32.mrb[0].mxu0
      %v629 = vpop.f32.mrb[0].mxu0
      %v630 = vadd.f32 0.0, %v629
      %v631 = vpop.f32.mrb[0].mxu0
      %632 = vmatprep.mubr.bf16.mxu0 0
      %633 = vmatmul.mubr.bf16.gmra.mrb[0].mxu0 %v450
      %v634 = vpop.f32.mrb[0].mxu0
      %v635 = vadd.f32 0.0, %v634
      %v636 = vpop.f32.mrb[0].mxu0
      %v637 = vpop.f32.mrb[0].mxu0
      %v638 = vadd.f32 0.0, %v637
      %v639 = vpop.f32.mrb[0].mxu0
      %640 = vmatprep.mubr.bf16.mxu0 0
      %641 = vmatmul.mubr.bf16.gmra.mrb[0].mxu0 %v451
      %v642 = vpop.f32.mrb[0].mxu0
      %v643 = vadd.f32 0.0, %v642
      %v644 = vpop.f32.mrb[0].mxu0
      %v645 = vpop.f32.mrb[0].mxu0
      %v646 = vadd.f32 0.0, %v645
      %v647 = vpop.f32.mrb[0].mxu0
      %648 = vmatprep.mubr.bf16.mxu0 0
      %649 = vmatmul.mubr.bf16.gmra.mrb[0].mxu0 %v452
      %v650 = vpop.f32.mrb[0].mxu0
      %v651 = vadd.f32 0.0, %v650
      %v652 = vpop.f32.mrb[0].mxu0
      %v653 = vpop.f32.mrb[0].mxu0
      %v654 = vadd.f32 0.0, %v653
      %v655 = vpop.f32.mrb[0].mxu0
      %656 = vmatprep.mubr.bf16.mxu0 0
      %657 = vmatmul.mubr.bf16.gmra.mrb[0].mxu0 %v453
      %v658 = vpop.f32.mrb[0].mxu0
      %v659 = vadd.f32 0.0, %v658
      %v660 = vpop.f32.mrb[0].mxu0
      %v661 = vpop.f32.mrb[0].mxu0
      %v662 = vadd.f32 0.0, %v661
      %v663 = vpop.f32.mrb[0].mxu0
      %664 = vmatprep.mubr.bf16.mxu0 0
      %665 = vmatmul.mubr.bf16.gmra.mrb[0].mxu0 %v454
      %v666 = vpop.f32.mrb[0].mxu0
      %v667 = vadd.f32 0.0, %v666
      %v668 = vpop.f32.mrb[0].mxu0
      %v669 = vpop.f32.mrb[0].mxu0
      %v670 = vadd.f32 0.0, %v669
      %v671 = vpop.f32.mrb[0].mxu0
      %672 = vmatprep.mubr.bf16.mxu0 0
      %673 = vmatmul.mubr.bf16.gmra.mrb[0].mxu0 %v455
      %v674 = vpop.f32.mrb[0].mxu0
      %v675 = vadd.f32 0.0, %v674
      %v676 = vpop.f32.mrb[0].mxu0
      %v677 = vpop.f32.mrb[0].mxu0
      %v678 = vadd.f32 0.0, %v677
      %v679 = vpop.f32.mrb[0].mxu0
      %680 = vdwg.mxu0
      %v681 = vadd.f32 %v296, %v555
      %v682 = vadd.f32 %v297, %v558
      %v683 = vadd.f32 %v298, %v563
      %v684 = vadd.f32 %v299, %v566
      %v685 = vadd.f32 %v300, %v571
      %v686 = vadd.f32 %v301, %v574
      %v687 = vadd.f32 %v302, %v579
      %v688 = vadd.f32 %v303, %v582
      %v689 = vadd.f32 %v304, %v587
      %v690 = vadd.f32 %v305, %v590
      %v691 = vadd.f32 %v306, %v595
      %v692 = vadd.f32 %v307, %v598
      %v693 = vadd.f32 %v308, %v603
      %v694 = vadd.f32 %v309, %v606
      %v695 = vadd.f32 %v310, %v611
      %v696 = vadd.f32 %v311, %v614
      %v697 = vadd.f32 %v312, %v619
      %v698 = vadd.f32 %v313, %v622
      %v699 = vadd.f32 %v314, %v627
      %v700 = vadd.f32 %v315, %v630
      %v701 = vadd.f32 %v316, %v635
      %v702 = vadd.f32 %v317, %v638
      %v703 = vadd.f32 %v318, %v643
      %v704 = vadd.f32 %v319, %v646
      %v705 = vadd.f32 %v320, %v651
      %v706 = vadd.f32 %v321, %v654
      %v707 = vadd.f32 %v322, %v659
      %v708 = vadd.f32 %v323, %v662
      %v709 = vadd.f32 %v324, %v667
      %v710 = vadd.f32 %v325, %v670
      %v711 = vadd.f32 %v326, %v675
      %v712 = vadd.f32 %v327, %v678
      %713 = vst [vmem:[#allocation2] sm:$0xff] %v681
      %714 = vst [vmem:[#allocation2 + $0x8] sm:$0xff] %v682
      %715 = vst [vmem:[#allocation2 + $0x10] sm:$0xff] %v683
      %716 = vst [vmem:[#allocation2 + $0x18] sm:$0xff] %v684
      %717 = vst [vmem:[#allocation2 + $0x20] sm:$0xff] %v685
      %718 = vst [vmem:[#allocation2 + $0x28] sm:$0xff] %v686
      %719 = vst [vmem:[#allocation2 + $0x30] sm:$0xff] %v687
      %720 = vst [vmem:[#allocation2 + $0x38] sm:$0xff] %v688
      %721 = vst [vmem:[#allocation2 + $0x40] sm:$0xff] %v689
      %722 = vst [vmem:[#allocation2 + $0x48] sm:$0xff] %v690
      %723 = vst [vmem:[#allocation2 + $0x50] sm:$0xff] %v691
      %724 = vst [vmem:[#allocation2 + $0x58] sm:$0xff] %v692
      %725 = vst [vmem:[#allocation2 + $0x60] sm:$0xff] %v693
      %726 = vst [vmem:[#allocation2 + $0x68] sm:$0xff] %v694
      %727 = vst [vmem:[#allocation2 + $0x70] sm:$0xff] %v695
      %728 = vst [vmem:[#allocation2 + $0x78] sm:$0xff] %v696
      %729 = vst [vmem:[#allocation2 + $0x80] sm:$0xff] %v697
      %730 = vst [vmem:[#allocation2 + $0x88] sm:$0xff] %v698
      %731 = vst [vmem:[#allocation2 + $0x90] sm:$0xff] %v699
      %732 = vst [vmem:[#allocation2 + $0x98] sm:$0xff] %v700
      %733 = vst [vmem:[#allocation2 + $0xa0] sm:$0xff] %v701
      %734 = vst [vmem:[#allocation2 + $0xa8] sm:$0xff] %v702
      %735 = vst [vmem:[#allocation2 + $0xb0] sm:$0xff] %v703
      %736 = vst [vmem:[#allocation2 + $0xb8] sm:$0xff] %v704
      %737 = vst [vmem:[#allocation2 + $0xc0] sm:$0xff] %v705
      %738 = vst [vmem:[#allocation2 + $0xc8] sm:$0xff] %v706
      %739 = vst [vmem:[#allocation2 + $0xd0] sm:$0xff] %v707
      %740 = vst [vmem:[#allocation2 + $0xd8] sm:$0xff] %v708
      %741 = vst [vmem:[#allocation2 + $0xe0] sm:$0xff] %v709
      %742 = vst [vmem:[#allocation2 + $0xe8] sm:$0xff] %v710
      %743 = vst [vmem:[#allocation2 + $0xf0] sm:$0xff] %v711
      %744 = vst [vmem:[#allocation2 + $0xf8] sm:$0xff] %v712
      // Predicated region
      $region37: #{vae_forward.11} parent=31 // pred_check
        %p745 = pneg %p260
      $region38: #{vae_forward.11} parent=31 // pred_check_branch
        %747 = sbr.rel (%p745) target = $region40
      $region39: #{vae_forward.11} parent=31 // pred_region
        %v748 = vld [vmem:[#allocation2] sm:$0xff]
        %v749 = vld [vmem:[#allocation2 + $0x8] sm:$0xff]
        %v750 = vld [vmem:[#allocation2 + $0x10] sm:$0xff]
        %v751 = vld [vmem:[#allocation2 + $0x18] sm:$0xff]
        %v752 = vld [vmem:[#allocation2 + $0x20] sm:$0xff]
        %v753 = vld [vmem:[#allocation2 + $0x28] sm:$0xff]
        %v754 = vld [vmem:[#allocation2 + $0x30] sm:$0xff]
        %v755 = vld [vmem:[#allocation2 + $0x38] sm:$0xff]
        %v756 = vld [vmem:[#allocation2 + $0x40] sm:$0xff]
        %v757 = vld [vmem:[#allocation2 + $0x48] sm:$0xff]
        %v758 = vld [vmem:[#allocation2 + $0x50] sm:$0xff]
        %v759 = vld [vmem:[#allocation2 + $0x58] sm:$0xff]
        %v760 = vld [vmem:[#allocation2 + $0x60] sm:$0xff]
        %v761 = vld [vmem:[#allocation2 + $0x68] sm:$0xff]
        %v762 = vld [vmem:[#allocation2 + $0x70] sm:$0xff]
        %v763 = vld [vmem:[#allocation2 + $0x78] sm:$0xff]
        %v764 = vld [vmem:[#allocation2 + $0x80] sm:$0xff]
        %v765 = vld [vmem:[#allocation2 + $0x88] sm:$0xff]
        %v766 = vld [vmem:[#allocation2 + $0x90] sm:$0xff]
        %v767 = vld [vmem:[#allocation2 + $0x98] sm:$0xff]
        %v768 = vld [vmem:[#allocation2 + $0xa0] sm:$0xff]
        %v769 = vld [vmem:[#allocation2 + $0xa8] sm:$0xff]
        %v770 = vld [vmem:[#allocation2 + $0xb0] sm:$0xff]
        %v771 = vld [vmem:[#allocation2 + $0xb8] sm:$0xff]
        %v772 = vld [vmem:[#allocation2 + $0xc0] sm:$0xff]
        %v773 = vld [vmem:[#allocation2 + $0xc8] sm:$0xff]
        %v774 = vld [vmem:[#allocation2 + $0xd0] sm:$0xff]
        %v775 = vld [vmem:[#allocation2 + $0xd8] sm:$0xff]
        %v776 = vld [vmem:[#allocation2 + $0xe0] sm:$0xff]
        %v777 = vld [vmem:[#allocation2 + $0xe8] sm:$0xff]
        %v778 = vld [vmem:[#allocation2 + $0xf0] sm:$0xff]
        %v779 = vld [vmem:[#allocation2 + $0xf8] sm:$0xff]
        %v780 = vld [vmem:[%s249] sm:$0x1]
        %v782 = vlaneseq
        %v783 = vshrl.u32 %v782, 7
        %v784 = vsub.s32 0, %v783
        %v785 = vrot.slane %v780, %v784
        %v787 = vadd.f32 %v748, %v785
        %v788 = vadd.f32 %v749, %v785
        %v789 = vadd.f32 %v750, %v785
        %v790 = vadd.f32 %v751, %v785
        %v791 = vadd.f32 %v752, %v785
        %v792 = vadd.f32 %v753, %v785
        %v793 = vadd.f32 %v754, %v785
        %v794 = vadd.f32 %v755, %v785
        %v795 = vadd.f32 %v756, %v785
        %v796 = vadd.f32 %v757, %v785
        %v797 = vadd.f32 %v758, %v785
        %v798 = vadd.f32 %v759, %v785
        %v799 = vadd.f32 %v760, %v785
        %v800 = vadd.f32 %v761, %v785
        %v801 = vadd.f32 %v762, %v785
        %v802 = vadd.f32 %v763, %v785
        %v803 = vadd.f32 %v764, %v785
        %v804 = vadd.f32 %v765, %v785
        %v805 = vadd.f32 %v766, %v785
        %v806 = vadd.f32 %v767, %v785
        %v807 = vadd.f32 %v768, %v785
        %v808 = vadd.f32 %v769, %v785
        %v809 = vadd.f32 %v770, %v785
        %v810 = vadd.f32 %v771, %v785
        %v811 = vadd.f32 %v772, %v785
        %v812 = vadd.f32 %v773, %v785
        %v813 = vadd.f32 %v774, %v785
        %v814 = vadd.f32 %v775, %v785
        %v815 = vadd.f32 %v776, %v785
        %v816 = vadd.f32 %v777, %v785
        %v817 = vadd.f32 %v778, %v785
        %v818 = vadd.f32 %v779, %v785
        %v819 = vxor.u32 %v787, 2147483648
        %v820 = vxor.u32 %v788, 2147483648
        %v821 = vxor.u32 %v789, 2147483648
        %v822 = vxor.u32 %v790, 2147483648
        %v823 = vxor.u32 %v791, 2147483648
        %v824 = vxor.u32 %v792, 2147483648
        %v825 = vxor.u32 %v793, 2147483648
        %v826 = vxor.u32 %v794, 2147483648
        %v827 = vxor.u32 %v795, 2147483648
        %v828 = vxor.u32 %v796, 2147483648
        %v829 = vxor.u32 %v797, 2147483648
        %v830 = vxor.u32 %v798, 2147483648
        %v831 = vxor.u32 %v799, 2147483648
        %v832 = vxor.u32 %v800, 2147483648
        %v833 = vxor.u32 %v801, 2147483648
        %v834 = vxor.u32 %v802, 2147483648
        %v835 = vxor.u32 %v803, 2147483648
        %v836 = vxor.u32 %v804, 2147483648
        %v837 = vxor.u32 %v805, 2147483648
        %v838 = vxor.u32 %v806, 2147483648
        %v839 = vxor.u32 %v807, 2147483648
        %v840 = vxor.u32 %v808, 2147483648
        %v841 = vxor.u32 %v809, 2147483648
        %v842 = vxor.u32 %v810, 2147483648
        %v843 = vxor.u32 %v811, 2147483648
        %v844 = vxor.u32 %v812, 2147483648
        %v845 = vxor.u32 %v813, 2147483648
        %v846 = vxor.u32 %v814, 2147483648
        %v847 = vxor.u32 %v815, 2147483648
        %v848 = vxor.u32 %v816, 2147483648
        %v849 = vxor.u32 %v817, 2147483648
        %v850 = vxor.u32 %v818, 2147483648
        %v851 = vmul.f32 %v819, 1.442695
        %v852 = vpow.pop %v851
        %v853 = vmul.f32 %v820, 1.442695
        %v854 = vpow.pop %v853
        %v855 = vmul.f32 %v821, 1.442695
        %v856 = vpow.pop %v855
        %v857 = vmul.f32 %v822, 1.442695
        %v858 = vpow.pop %v857
        %v859 = vmul.f32 %v823, 1.442695
        %v860 = vpow.pop %v859
        %v861 = vmul.f32 %v824, 1.442695
        %v862 = vpow.pop %v861
        %v863 = vmul.f32 %v825, 1.442695
        %v864 = vpow.pop %v863
        %v865 = vmul.f32 %v826, 1.442695
        %v866 = vpow.pop %v865
        %v867 = vmul.f32 %v827, 1.442695
        %v868 = vpow.pop %v867
        %v869 = vmul.f32 %v828, 1.442695
        %v870 = vpow.pop %v869
        %v871 = vmul.f32 %v829, 1.442695
        %v872 = vpow.pop %v871
        %v873 = vmul.f32 %v830, 1.442695
        %v874 = vpow.pop %v873
        %v875 = vmul.f32 %v831, 1.442695
        %v876 = vpow.pop %v875
        %v877 = vmul.f32 %v832, 1.442695
        %v878 = vpow.pop %v877
        %v879 = vmul.f32 %v833, 1.442695
        %v880 = vpow.pop %v879
        %v881 = vmul.f32 %v834, 1.442695
        %v882 = vpow.pop %v881
        %v883 = vmul.f32 %v835, 1.442695
        %v884 = vpow.pop %v883
        %v885 = vmul.f32 %v836, 1.442695
        %v886 = vpow.pop %v885
        %v887 = vmul.f32 %v837, 1.442695
        %v888 = vpow.pop %v887
        %v889 = vmul.f32 %v838, 1.442695
        %v890 = vpow.pop %v889
        %v891 = vmul.f32 %v839, 1.442695
        %v892 = vpow.pop %v891
        %v893 = vmul.f32 %v840, 1.442695
        %v894 = vpow.pop %v893
        %v895 = vmul.f32 %v841, 1.442695
        %v896 = vpow.pop %v895
        %v897 = vmul.f32 %v842, 1.442695
        %v898 = vpow.pop %v897
        %v899 = vmul.f32 %v843, 1.442695
        %v900 = vpow.pop %v899
        %v901 = vmul.f32 %v844, 1.442695
        %v902 = vpow.pop %v901
        %v903 = vmul.f32 %v845, 1.442695
        %v904 = vpow.pop %v903
        %v905 = vmul.f32 %v846, 1.442695
        %v906 = vpow.pop %v905
        %v907 = vmul.f32 %v847, 1.442695
        %v908 = vpow.pop %v907
        %v909 = vmul.f32 %v848, 1.442695
        %v910 = vpow.pop %v909
        %v911 = vmul.f32 %v849, 1.442695
        %v912 = vpow.pop %v911
        %v913 = vmul.f32 %v850, 1.442695
        %v914 = vpow.pop %v913
        %v915 = vadd.f32 %v852, 1.0
        %v916 = vadd.f32 %v854, 1.0
        %v917 = vadd.f32 %v856, 1.0
        %v918 = vadd.f32 %v858, 1.0
        %v919 = vadd.f32 %v860, 1.0
        %v920 = vadd.f32 %v862, 1.0
        %v921 = vadd.f32 %v864, 1.0
        %v922 = vadd.f32 %v866, 1.0
        %v923 = vadd.f32 %v868, 1.0
        %v924 = vadd.f32 %v870, 1.0
        %v925 = vadd.f32 %v872, 1.0
        %v926 = vadd.f32 %v874, 1.0
        %v927 = vadd.f32 %v876, 1.0
        %v928 = vadd.f32 %v878, 1.0
        %v929 = vadd.f32 %v880, 1.0
        %v930 = vadd.f32 %v882, 1.0
        %v931 = vadd.f32 %v884, 1.0
        %v932 = vadd.f32 %v886, 1.0
        %v933 = vadd.f32 %v888, 1.0
        %v934 = vadd.f32 %v890, 1.0
        %v935 = vadd.f32 %v892, 1.0
        %v936 = vadd.f32 %v894, 1.0
        %v937 = vadd.f32 %v896, 1.0
        %v938 = vadd.f32 %v898, 1.0
        %v939 = vadd.f32 %v900, 1.0
        %v940 = vadd.f32 %v902, 1.0
        %v941 = vadd.f32 %v904, 1.0
        %v942 = vadd.f32 %v906, 1.0
        %v943 = vadd.f32 %v908, 1.0
        %v944 = vadd.f32 %v910, 1.0
        %v945 = vadd.f32 %v912, 1.0
        %v946 = vadd.f32 %v914, 1.0
        %v947 = vrcp.pop %v915
        %v948 = vmul.f32 1.0, %v947
        %v949 = vrcp.pop %v916
        %v950 = vmul.f32 1.0, %v949
        %v951 = vrcp.pop %v917
        %v952 = vmul.f32 1.0, %v951
        %v953 = vrcp.pop %v918
        %v954 = vmul.f32 1.0, %v953
        %v955 = vrcp.pop %v919
        %v956 = vmul.f32 1.0, %v955
        %v957 = vrcp.pop %v920
        %v958 = vmul.f32 1.0, %v957
        %v959 = vrcp.pop %v921
        %v960 = vmul.f32 1.0, %v959
        %v961 = vrcp.pop %v922
        %v962 = vmul.f32 1.0, %v961
        %v963 = vrcp.pop %v923
        %v964 = vmul.f32 1.0, %v963
        %v965 = vrcp.pop %v924
        %v966 = vmul.f32 1.0, %v965
        %v967 = vrcp.pop %v925
        %v968 = vmul.f32 1.0, %v967
        %v969 = vrcp.pop %v926
        %v970 = vmul.f32 1.0, %v969
        %v971 = vrcp.pop %v927
        %v972 = vmul.f32 1.0, %v971
        %v973 = vrcp.pop %v928
        %v974 = vmul.f32 1.0, %v973
        %v975 = vrcp.pop %v929
        %v976 = vmul.f32 1.0, %v975
        %v977 = vrcp.pop %v930
        %v978 = vmul.f32 1.0, %v977
        %v979 = vrcp.pop %v931
        %v980 = vmul.f32 1.0, %v979
        %v981 = vrcp.pop %v932
        %v982 = vmul.f32 1.0, %v981
        %v983 = vrcp.pop %v933
        %v984 = vmul.f32 1.0, %v983
        %v985 = vrcp.pop %v934
        %v986 = vmul.f32 1.0, %v985
        %v987 = vrcp.pop %v935
        %v988 = vmul.f32 1.0, %v987
        %v989 = vrcp.pop %v936
        %v990 = vmul.f32 1.0, %v989
        %v991 = vrcp.pop %v937
        %v992 = vmul.f32 1.0, %v991
        %v993 = vrcp.pop %v938
        %v994 = vmul.f32 1.0, %v993
        %v995 = vrcp.pop %v939
        %v996 = vmul.f32 1.0, %v995
        %v997 = vrcp.pop %v940
        %v998 = vmul.f32 1.0, %v997
        %v999 = vrcp.pop %v941
        %v1000 = vmul.f32 1.0, %v999
        %v1001 = vrcp.pop %v942
        %v1002 = vmul.f32 1.0, %v1001
        %v1003 = vrcp.pop %v943
        %v1004 = vmul.f32 1.0, %v1003
        %v1005 = vrcp.pop %v944
        %v1006 = vmul.f32 1.0, %v1005
        %v1007 = vrcp.pop %v945
        %v1008 = vmul.f32 1.0, %v1007
        %v1009 = vrcp.pop %v946
        %v1010 = vmul.f32 1.0, %v1009
        %1011 = vst [vmem:[%s257] sm:$0xff] %v948
        %1012 = vst [vmem:[%s257 + $0x8] sm:$0xff] %v950
        %1013 = vst [vmem:[%s257 + $0x10] sm:$0xff] %v952
        %1014 = vst [vmem:[%s257 + $0x18] sm:$0xff] %v954
        %1015 = vst [vmem:[%s257 + $0x20] sm:$0xff] %v956
        %1016 = vst [vmem:[%s257 + $0x28] sm:$0xff] %v958
        %1017 = vst [vmem:[%s257 + $0x30] sm:$0xff] %v960
        %1018 = vst [vmem:[%s257 + $0x38] sm:$0xff] %v962
        %1019 = vst [vmem:[%s257 + $0x40] sm:$0xff] %v964
        %1020 = vst [vmem:[%s257 + $0x48] sm:$0xff] %v966
        %1021 = vst [vmem:[%s257 + $0x50] sm:$0xff] %v968
        %1022 = vst [vmem:[%s257 + $0x58] sm:$0xff] %v970
        %1023 = vst [vmem:[%s257 + $0x60] sm:$0xff] %v972
        %1024 = vst [vmem:[%s257 + $0x68] sm:$0xff] %v974
        %1025 = vst [vmem:[%s257 + $0x70] sm:$0xff] %v976
        %1026 = vst [vmem:[%s257 + $0x78] sm:$0xff] %v978
        %1027 = vst [vmem:[%s257 + $0x80] sm:$0xff] %v980
        %1028 = vst [vmem:[%s257 + $0x88] sm:$0xff] %v982
        %1029 = vst [vmem:[%s257 + $0x90] sm:$0xff] %v984
        %1030 = vst [vmem:[%s257 + $0x98] sm:$0xff] %v986
        %1031 = vst [vmem:[%s257 + $0xa0] sm:$0xff] %v988
        %1032 = vst [vmem:[%s257 + $0xa8] sm:$0xff] %v990
        %1033 = vst [vmem:[%s257 + $0xb0] sm:$0xff] %v992
        %1034 = vst [vmem:[%s257 + $0xb8] sm:$0xff] %v994
        %1035 = vst [vmem:[%s257 + $0xc0] sm:$0xff] %v996
        %1036 = vst [vmem:[%s257 + $0xc8] sm:$0xff] %v998
        %1037 = vst [vmem:[%s257 + $0xd0] sm:$0xff] %v1000
        %1038 = vst [vmem:[%s257 + $0xd8] sm:$0xff] %v1002
        %1039 = vst [vmem:[%s257 + $0xe0] sm:$0xff] %v1004
        %1040 = vst [vmem:[%s257 + $0xe8] sm:$0xff] %v1006
        %1041 = vst [vmem:[%s257 + $0xf0] sm:$0xff] %v1008
        %1042 = vst [vmem:[%s257 + $0xf8] sm:$0xff] %v1010
      $region40: #{vae_forward.11} parent=31 // pred_fallthru
        _
      %s1043 = smul.u32 32, %s19
      %p1044 = scmp.lt.s32.totalorder %s1043, 63
      %s1045 = scalar_select %p1044, %s1043, 63
      %p1046 = scmp.lt.s32.totalorder %s20, 0
      %s1047 = scalar_select %p1046, %s20, 0
      %s1048 = sadd.s32 %s1047, %s1045
      %s1049 = smul.addr %s1048, 8
      %s1050 = scalar_lea.vmem %s3, %s1049
      // Predicated region
      $region41: #{vae_forward.11} parent=31 // pred_check
        %p1051 = pneg %p135
      $region42: #{vae_forward.11} parent=31 // pred_check_branch
        %1053 = sbr.rel (%p1051) target = $region44
      $region43: #{vae_forward.11} parent=31 // pred_region
        %s1054 = smul.u32 32, %s19
      $region44: #{vae_forward.11} parent=31 // pred_fallthru
        _
    $region32: #{vae_forward.11} parent=5 // pred_fallthru
      _
    %p1055 = scmp.le.s32.totalorder 2, %s9
    // Predicated region
    $region45: #{vae_forward.11} parent=5 // pred_check
      %p1056 = pneg %p1055
    $region46: #{vae_forward.11} parent=5 // pred_check_branch
      %1058 = sbr.rel (%p1056) target = $region48
    $region47: #{vae_forward.11} parent=5 // pred_region
      %s1059 = ssub.s32 %s9, 2
      // Predicated region
      $region49: #{vae_forward.11} parent=47 // pred_check
        %p1060 = pneg %p141
      $region50: #{vae_forward.11} parent=47 // pred_check_branch
        %1062 = sbr.rel (%p1060) target = $region52
      $region51: #{vae_forward.11} parent=47 // pred_region
        %s1063 = smul.u32 32, %s22
        %p1064 = scmp.lt.s32.totalorder %s1063, 63
        %s1065 = scalar_select %p1064, %s1063, 63
        %p1066 = scmp.lt.s32.totalorder %s23, 0
        %s1067 = scalar_select %p1066, %s23, 0
        %s1068 = sadd.s32 %s1067, %s1065
        %s1069 = smul.addr %s1068, 8
        %s1070 = scalar_lea.vmem %s3, %s1069
      $region52: #{vae_forward.11} parent=47 // pred_fallthru
        _
    $region48: #{vae_forward.11} parent=5 // pred_fallthru
      _
  $region6: #{vae_forward.11} parent=0 // loop_footer
    %s13 = sadd.s32 1, %s9
  $region7: #{vae_forward.11} parent=0 // loop_footer_branch
    %8 = sbr.rel target = $region3
  $region8: #{vae_forward.11} parent=0 // loop_exit
    _

</llo_original>
